<compile_context>
chip_gen: v5e
topology: v5e:2x2
jax: 0.10.0
libtpu: 0.0.40
codegen_flags: <defaults>
</compile_context>

<pallas_src>
import functools

import jax
import jax.numpy as jnp
from jax import lax
from jax.experimental import pallas as pl
from jax.experimental.pallas import tpu as pltpu


# ---------------------------------------------------------------------------
# Fused Pallas kernel
# ---------------------------------------------------------------------------
def _im2col_3x3(pad_ref, cols_ref, H, W, C):
    """Gather the 9 shifted 3x3 taps of a padded (H+2, W+2, C) VMEM buffer into
    one (H*W, 9*C) matrix held in VMEM, and return it as a value."""
    t = 0
    for ky in range(3):
        for kx in range(3):
            tap = pad_ref[ky:ky + H, kx:kx + W, :]              # (H, W, C)
            cols_ref[:, t * C:(t + 1) * C] = tap.reshape(H * W, C)
            t += 1
    return cols_ref[:, :9 * C]                                  # (H*W, 9*C)


def _atrous_block_kernel(x_ref, tc_ref, w1_ref, b1_ref, w2_ref, b2_ref,
                         wt_ref, bt_ref, o_ref, pad1_ref, pad2_ref, cols_ref,
                         *, H, W, Cin, Cout):
    """One batch element: concat + pad + conv1/ReLU + conv2/ReLU + upconv,
    everything resident in VMEM/vregs between stages."""
    cdt = pad1_ref.dtype     # dtype fed to the MXU (f32 default, bf16 option)

    # --- channel concat([x, to_cat]) + zero halo (padding=1), all in VMEM ---
    pad1_ref[...] = jnp.zeros_like(pad1_ref)
    pad1_ref[1:H + 1, 1:W + 1, :Cin] = x_ref[0]
    pad1_ref[1:H + 1, 1:W + 1, Cin:] = tc_ref[0]

    # --- Conv1 (3x3, pad 1): single im2col matmul + bias + ReLU -------------
    p1 = _im2col_3x3(pad1_ref, cols_ref, H, W, 2 * Cin)         # (H*W, 18*Cin)
    h1 = jnp.dot(p1, w1_ref[...], preferred_element_type=jnp.float32)
    h1 = jnp.maximum(h1 + b1_ref[...], 0.0)                     # f32 (H*W, Cin)

    # --- Conv2 (3x3, pad 1) --------------------------------------------------
    pad2_ref[...] = jnp.zeros_like(pad2_ref)
    pad2_ref[1:H + 1, 1:W + 1, :] = h1.reshape(H, W, Cin).astype(cdt)
    p2 = _im2col_3x3(pad2_ref, cols_ref, H, W, Cin)             # (H*W, 9*Cin)
    h2 = jnp.dot(p2, w2_ref[...], preferred_element_type=jnp.float32)
    h2 = jnp.maximum(h2 + b2_ref[...], 0.0)                     # f32 (H*W, Cin)

    # --- ConvTranspose2d(k=2, s=2) == per-pixel matmul to 2*2*Cout ----------
    up = jnp.dot(h2.astype(cdt), wt_ref[...],
                 preferred_element_type=jnp.float32) + bt_ref[...]
    # One contiguous (H*W, 4*Cout) slab per batch item; depth-to-space + NCHW
    # is a single reshape+transpose in the wrapper.
    o_ref[0] = up.astype(o_ref.dtype)


# ---------------------------------------------------------------------------
# Wrapper (NCHW in / NCHW out, like the PyTorch module)
# ---------------------------------------------------------------------------
def _center_crop_nhwc(img, th, tw):
    # Matches flerken center_crop: i = int(round((h - th) / 2.)) etc.
    h, w = img.shape[1], img.shape[2]
    i = int(round((h - th) / 2.0))
    j = int(round((w - tw) / 2.0))
    return img[:, i:i + th, j:j + tw, :]


def atrous_block_forward(x_nchw, to_cat_nchw, params,
                         compute_dtype=jnp.float32):
    """AtrousBlock.forward (useBN=False path). I/O in NCHW like PyTorch.

    compute_dtype: dtype fed to the MXU matmuls (accumulation always f32).
    Use jnp.bfloat16 on v6e / v7x for the native high-rate MXU path.
    """
    x = jnp.transpose(x_nchw, (0, 2, 3, 1)).astype(compute_dtype)     # NHWC
    tc = jnp.transpose(to_cat_nchw, (0, 2, 3, 1)).astype(compute_dtype)
    N, H, W, Cin = x.shape
    tc = _center_crop_nhwc(tc, H, W)
    Cout = params["wt"].shape[1]

    # Weight slabs (layout plumbing done once, outside the kernel):
    #   Conv HWIO (3,3,Ci,Co) -> (9*Ci, Co); row order (ky, kx, ci) matches the
    #   im2col column order.  ConvTranspose2d (Cin,Cout,2,2) -> (Cin, 4*Cout)
    #   with column order (di, dj, co).
    w1 = params["w1"].reshape(9 * 2 * Cin, Cin).astype(compute_dtype)
    w2 = params["w2"].reshape(9 * Cin, Cin).astype(compute_dtype)
    wt = jnp.transpose(params["wt"], (0, 2, 3, 1)).reshape(Cin, 4 * Cout)
    wt = wt.astype(compute_dtype)
    b1 = params["b1"].reshape(1, Cin).astype(jnp.float32)
    b2 = params["b2"].reshape(1, Cin).astype(jnp.float32)
    bt = jnp.tile(params["bt"], 4).reshape(1, 4 * Cout).astype(jnp.float32)

    kernel = functools.partial(_atrous_block_kernel,
                               H=H, W=W, Cin=Cin, Cout=Cout)
    out = pl.pallas_call(
        kernel,
        out_shape=jax.ShapeDtypeStruct((N, H * W, 4 * Cout), jnp.float32),
        grid=(N,),
        in_specs=[
            pl.BlockSpec((1, H, W, Cin), lambda n: (n, 0, 0, 0)),       # x
            pl.BlockSpec((1, H, W, Cin), lambda n: (n, 0, 0, 0)),       # to_cat
            pl.BlockSpec((9 * 2 * Cin, Cin), lambda n: (0, 0)),         # w1 slab
            pl.BlockSpec((1, Cin), lambda n: (0, 0)),                   # b1
            pl.BlockSpec((9 * Cin, Cin), lambda n: (0, 0)),             # w2 slab
            pl.BlockSpec((1, Cin), lambda n: (0, 0)),                   # b2
            pl.BlockSpec((Cin, 4 * Cout), lambda n: (0, 0)),            # wt slab
            pl.BlockSpec((1, 4 * Cout), lambda n: (0, 0)),              # bt
        ],
        out_specs=pl.BlockSpec((1, H * W, 4 * Cout), lambda n: (n, 0, 0)),
        scratch_shapes=[
            pltpu.VMEM((H + 2, W + 2, 2 * Cin), compute_dtype),   # padded concat
            pltpu.VMEM((H + 2, W + 2, Cin), compute_dtype),       # padded h1
            pltpu.VMEM((H * W, 9 * 2 * Cin), compute_dtype),      # im2col slab
        ],
        compiler_params=pltpu.CompilerParams(
            dimension_semantics=("parallel",)),  # N>=2 keeps both v7x TCs busy
    )(x, tc, w1, b1, w2, b2, wt, bt)

    # depth-to-space (2x2) + conversion to NCHW in a single transpose.
    out = out.reshape(N, H, W, 2, 2, Cout)
    out = jnp.transpose(out, (0, 5, 1, 3, 2, 4)).reshape(N, Cout, 2 * H, 2 * W)
    return out


# ---------------------------------------------------------------------------
# Pure-JAX reference (independent formulation) for correctness check
# ---------------------------------------------------------------------------
def ref_forward(x_nchw, to_cat_nchw, params):
    x = jnp.transpose(x_nchw, (0, 2, 3, 1)).astype(jnp.float32)
    tc = jnp.transpose(to_cat_nchw, (0, 2, 3, 1)).astype(jnp.float32)
    N, H, W, Cin = x.shape
    tc = _center_crop_nhwc(tc, H, W)
    xcat = jnp.concatenate([x, tc], axis=-1)
    dn = ("NHWC", "HWIO", "NHWC")
    h1 = jax.nn.relu(lax.conv_general_dilated(
        xcat, params["w1"], (1, 1), "SAME", dimension_numbers=dn) + params["b1"])
    h2 = jax.nn.relu(lax.conv_general_dilated(
        h1, params["w2"], (1, 1), "SAME", dimension_numbers=dn) + params["b2"])
    Cout = params["wt"].shape[1]
    up = jnp.zeros((N, 2 * H, 2 * W, Cout), jnp.float32)
    for di in range(2):
        for dj in range(2):
            contrib = jnp.einsum("nhwi,io->nhwo", h2, params["wt"][:, :, di, dj])
            up = up.at[:, di::2, dj::2, :].set(contrib)
    up = up + params["bt"]
    return jnp.transpose(up, (0, 3, 1, 2))


# ---------------------------------------------------------------------------
if __name__ == "__main__":
    key = jax.random.PRNGKey(0)
    N, dim_in, dim_out, H, W = 2, 8, 4, 16, 16
    ks = jax.random.split(key, 8)

    x = jax.random.normal(ks[0], (N, dim_in, H, W), jnp.float32)
    # skip connection slightly larger so center_crop actually crops
    to_cat = jax.random.normal(ks[1], (N, dim_in, H + 2, W + 2), jnp.float32)

    # Parameter shapes from AtrousBlock.__init__:
    #   Conv1: (dim_in, 2*dim_in, 3, 3) OIHW -> stored HWIO (3,3,2*dim_in,dim_in)
    #   Conv2: (dim_in, dim_in, 3, 3)   OIHW -> stored HWIO (3,3,dim_in,dim_in)
    #   AtrousConv (ConvTranspose2d): (dim_in, dim_out, 2, 2)
    params = {
        "w1": jax.random.normal(ks[2], (3, 3, 2 * dim_in, dim_in), jnp.float32) * 0.1,
        "b1": jax.random.normal(ks[3], (dim_in,), jnp.float32) * 0.1,
        "w2": jax.random.normal(ks[4], (3, 3, dim_in, dim_in), jnp.float32) * 0.1,
        "b2": jax.random.normal(ks[5], (dim_in,), jnp.float32) * 0.1,
        "wt": jax.random.normal(ks[6], (dim_in, dim_out, 2, 2), jnp.float32) * 0.1,
        "bt": jax.random.normal(ks[7], (dim_out,), jnp.float32) * 0.1,
    }

    out = atrous_block_forward(x, to_cat, params)
    out = jax.block_until_ready(out)
    assert out.shape == (N, dim_out, 2 * H, 2 * W), out.shape

    ref = ref_forward(x, to_cat, params)
    err = float(jnp.max(jnp.abs(out - ref)))
    if err > 1e-3:
        raise AssertionError(f"Pallas output mismatch vs reference, max|err|={err}")

    print("KERNEL_OK")
</pallas_src>

<mosaic_0001>
module attributes {stable_mosaic.version = 11 : i64} {
  func.func @_atrous_block_kernel(%arg0: i32, %arg1: memref<1x16x16x8xf32, #tpu.memory_space<vmem>>, %arg2: memref<1x16x16x8xf32, #tpu.memory_space<vmem>>, %arg3: memref<144x8xf32, #tpu.memory_space<vmem>>, %arg4: memref<1x8xf32, #tpu.memory_space<vmem>>, %arg5: memref<72x8xf32, #tpu.memory_space<vmem>>, %arg6: memref<1x8xf32, #tpu.memory_space<vmem>>, %arg7: memref<8x16xf32, #tpu.memory_space<vmem>>, %arg8: memref<1x16xf32, #tpu.memory_space<vmem>>, %arg9: memref<1x256x16xf32, #tpu.memory_space<vmem>>, %arg10: memref<18x18x16xf32, #tpu.memory_space<vmem>>, %arg11: memref<18x18x8xf32, #tpu.memory_space<vmem>>, %arg12: memref<256x144xf32, #tpu.memory_space<vmem>>) attributes {dimension_semantics = [#tpu.dimension_semantics<parallel>], iteration_bounds = array<i64: 2>, scalar_prefetch = 0 : i64, scratch_operands = 3 : i64, tpu.core_type = #tpu.core_type<tc>, window_params = [{transform_indices = @transform_0, window_bounds = array<i64: 1, 16, 16, 8>}, {transform_indices = @transform_1, window_bounds = array<i64: 1, 16, 16, 8>}, {pipeline_mode = #tpu.pipeline_mode<synchronous>, transform_indices = @transform_2, window_bounds = array<i64: 144, 8>}, {pipeline_mode = #tpu.pipeline_mode<synchronous>, transform_indices = @transform_3, window_bounds = array<i64: 1, 8>}, {pipeline_mode = #tpu.pipeline_mode<synchronous>, transform_indices = @transform_4, window_bounds = array<i64: 72, 8>}, {pipeline_mode = #tpu.pipeline_mode<synchronous>, transform_indices = @transform_5, window_bounds = array<i64: 1, 8>}, {pipeline_mode = #tpu.pipeline_mode<synchronous>, transform_indices = @transform_6, window_bounds = array<i64: 8, 16>}, {pipeline_mode = #tpu.pipeline_mode<synchronous>, transform_indices = @transform_7, window_bounds = array<i64: 1, 16>}, {transform_indices = @transform_8, window_bounds = array<i64: 1, 256, 16>}]} {
    %cst = arith.constant 0.000000e+00 : f32
    %0 = vector.broadcast %cst : f32 to vector<18x18x16xf32>
    %c0 = arith.constant 0 : index
    %c0_0 = arith.constant 0 : index
    %c0_1 = arith.constant 0 : index
    %1 = vector.load %arg10[%c0, %c0_0, %c0_1] : memref<18x18x16xf32, #tpu.memory_space<vmem>>, vector<18x18x16xf32>
    tpu.vector_store %arg10[%c0, %c0_0, %c0_1], %0 {strides = array<i32>} : memref<18x18x16xf32, #tpu.memory_space<vmem>>, vector<18x18x16xf32>,
    %c0_2 = arith.constant 0 : index
    %c0_3 = arith.constant 0 : index
    %c0_4 = arith.constant 0 : index
    %c0_5 = arith.constant 0 : index
    %2 = vector.load %arg1[%c0_2, %c0_3, %c0_4, %c0_5] : memref<1x16x16x8xf32, #tpu.memory_space<vmem>>, vector<1x16x16x8xf32>
    %3 = vector.shape_cast %2 : vector<1x16x16x8xf32> to vector<16x16x8xf32>
    %c1 = arith.constant 1 : index
    %c1_6 = arith.constant 1 : index
    %c0_7 = arith.constant 0 : index
    %4 = vector.load %arg10[%c1, %c1_6, %c0_7] : memref<18x18x16xf32, #tpu.memory_space<vmem>>, vector<16x16x8xf32>
    tpu.vector_store %arg10[%c1, %c1_6, %c0_7], %3 {strides = array<i32>} : memref<18x18x16xf32, #tpu.memory_space<vmem>>, vector<16x16x8xf32>,
    %c0_8 = arith.constant 0 : index
    %c0_9 = arith.constant 0 : index
    %c0_10 = arith.constant 0 : index
    %c0_11 = arith.constant 0 : index
    %5 = vector.load %arg2[%c0_8, %c0_9, %c0_10, %c0_11] : memref<1x16x16x8xf32, #tpu.memory_space<vmem>>, vector<1x16x16x8xf32>
    %6 = vector.shape_cast %5 : vector<1x16x16x8xf32> to vector<16x16x8xf32>
    %c1_12 = arith.constant 1 : index
    %c1_13 = arith.constant 1 : index
    %c8 = arith.constant 8 : index
    %7 = vector.load %arg10[%c1_12, %c1_13, %c8] : memref<18x18x16xf32, #tpu.memory_space<vmem>>, vector<16x16x8xf32>
    tpu.vector_store %arg10[%c1_12, %c1_13, %c8], %6 {strides = array<i32>} : memref<18x18x16xf32, #tpu.memory_space<vmem>>, vector<16x16x8xf32>,
    %c0_14 = arith.constant 0 : index
    %c0_15 = arith.constant 0 : index
    %c0_16 = arith.constant 0 : index
    %8 = vector.load %arg10[%c0_14, %c0_15, %c0_16] : memref<18x18x16xf32, #tpu.memory_space<vmem>>, vector<16x16x16xf32>
    %9 = vector.shape_cast %8 : vector<16x16x16xf32> to vector<256x16xf32>
    %c0_17 = arith.constant 0 : index
    %c0_18 = arith.constant 0 : index
    %10 = vector.load %arg12[%c0_17, %c0_18] : memref<256x144xf32, #tpu.memory_space<vmem>>, vector<256x16xf32>
    tpu.vector_store %arg12[%c0_17, %c0_18], %9 {strides = array<i32>} : memref<256x144xf32, #tpu.memory_space<vmem>>, vector<256x16xf32>,
    %c0_19 = arith.constant 0 : index
    %c1_20 = arith.constant 1 : index
    %c0_21 = arith.constant 0 : index
    %11 = vector.load %arg10[%c0_19, %c1_20, %c0_21] : memref<18x18x16xf32, #tpu.memory_space<vmem>>, vector<16x16x16xf32>
    %12 = vector.shape_cast %11 : vector<16x16x16xf32> to vector<256x16xf32>
    %c0_22 = arith.constant 0 : index
    %c16 = arith.constant 16 : index
    %13 = vector.load %arg12[%c0_22, %c16] : memref<256x144xf32, #tpu.memory_space<vmem>>, vector<256x16xf32>
    tpu.vector_store %arg12[%c0_22, %c16], %12 {strides = array<i32>} : memref<256x144xf32, #tpu.memory_space<vmem>>, vector<256x16xf32>,
    %c0_23 = arith.constant 0 : index
    %c2 = arith.constant 2 : index
    %c0_24 = arith.constant 0 : index
    %14 = vector.load %arg10[%c0_23, %c2, %c0_24] : memref<18x18x16xf32, #tpu.memory_space<vmem>>, vector<16x16x16xf32>
    %15 = vector.shape_cast %14 : vector<16x16x16xf32> to vector<256x16xf32>
    %c0_25 = arith.constant 0 : index
    %c32 = arith.constant 32 : index
    %16 = vector.load %arg12[%c0_25, %c32] : memref<256x144xf32, #tpu.memory_space<vmem>>, vector<256x16xf32>
    tpu.vector_store %arg12[%c0_25, %c32], %15 {strides = array<i32>} : memref<256x144xf32, #tpu.memory_space<vmem>>, vector<256x16xf32>,
    %c1_26 = arith.constant 1 : index
    %c0_27 = arith.constant 0 : index
    %c0_28 = arith.constant 0 : index
    %17 = vector.load %arg10[%c1_26, %c0_27, %c0_28] : memref<18x18x16xf32, #tpu.memory_space<vmem>>, vector<16x16x16xf32>
    %18 = vector.shape_cast %17 : vector<16x16x16xf32> to vector<256x16xf32>
    %c0_29 = arith.constant 0 : index
    %c48 = arith.constant 48 : index
    %19 = vector.load %arg12[%c0_29, %c48] : memref<256x144xf32, #tpu.memory_space<vmem>>, vector<256x16xf32>
    tpu.vector_store %arg12[%c0_29, %c48], %18 {strides = array<i32>} : memref<256x144xf32, #tpu.memory_space<vmem>>, vector<256x16xf32>,
    %c1_30 = arith.constant 1 : index
    %c1_31 = arith.constant 1 : index
    %c0_32 = arith.constant 0 : index
    %20 = vector.load %arg10[%c1_30, %c1_31, %c0_32] : memref<18x18x16xf32, #tpu.memory_space<vmem>>, vector<16x16x16xf32>
    %21 = vector.shape_cast %20 : vector<16x16x16xf32> to vector<256x16xf32>
    %c0_33 = arith.constant 0 : index
    %c64 = arith.constant 64 : index
    %22 = vector.load %arg12[%c0_33, %c64] : memref<256x144xf32, #tpu.memory_space<vmem>>, vector<256x16xf32>
    tpu.vector_store %arg12[%c0_33, %c64], %21 {strides = array<i32>} : memref<256x144xf32, #tpu.memory_space<vmem>>, vector<256x16xf32>,
    %c1_34 = arith.constant 1 : index
    %c2_35 = arith.constant 2 : index
    %c0_36 = arith.constant 0 : index
    %23 = vector.load %arg10[%c1_34, %c2_35, %c0_36] : memref<18x18x16xf32, #tpu.memory_space<vmem>>, vector<16x16x16xf32>
    %24 = vector.shape_cast %23 : vector<16x16x16xf32> to vector<256x16xf32>
    %c0_37 = arith.constant 0 : index
    %c80 = arith.constant 80 : index
    %25 = vector.load %arg12[%c0_37, %c80] : memref<256x144xf32, #tpu.memory_space<vmem>>, vector<256x16xf32>
    tpu.vector_store %arg12[%c0_37, %c80], %24 {strides = array<i32>} : memref<256x144xf32, #tpu.memory_space<vmem>>, vector<256x16xf32>,
    %c2_38 = arith.constant 2 : index
    %c0_39 = arith.constant 0 : index
    %c0_40 = arith.constant 0 : index
    %26 = vector.load %arg10[%c2_38, %c0_39, %c0_40] : memref<18x18x16xf32, #tpu.memory_space<vmem>>, vector<16x16x16xf32>
    %27 = vector.shape_cast %26 : vector<16x16x16xf32> to vector<256x16xf32>
    %c0_41 = arith.constant 0 : index
    %c96 = arith.constant 96 : index
    %28 = vector.load %arg12[%c0_41, %c96] : memref<256x144xf32, #tpu.memory_space<vmem>>, vector<256x16xf32>
    tpu.vector_store %arg12[%c0_41, %c96], %27 {strides = array<i32>} : memref<256x144xf32, #tpu.memory_space<vmem>>, vector<256x16xf32>,
    %c2_42 = arith.constant 2 : index
    %c1_43 = arith.constant 1 : index
    %c0_44 = arith.constant 0 : index
    %29 = vector.load %arg10[%c2_42, %c1_43, %c0_44] : memref<18x18x16xf32, #tpu.memory_space<vmem>>, vector<16x16x16xf32>
    %30 = vector.shape_cast %29 : vector<16x16x16xf32> to vector<256x16xf32>
    %c0_45 = arith.constant 0 : index
    %c112 = arith.constant 112 : index
    %31 = vector.load %arg12[%c0_45, %c112] : memref<256x144xf32, #tpu.memory_space<vmem>>, vector<256x16xf32>
    tpu.vector_store %arg12[%c0_45, %c112], %30 {strides = array<i32>} : memref<256x144xf32, #tpu.memory_space<vmem>>, vector<256x16xf32>,
    %c2_46 = arith.constant 2 : index
    %c2_47 = arith.constant 2 : index
    %c0_48 = arith.constant 0 : index
    %32 = vector.load %arg10[%c2_46, %c2_47, %c0_48] : memref<18x18x16xf32, #tpu.memory_space<vmem>>, vector<16x16x16xf32>
    %33 = vector.shape_cast %32 : vector<16x16x16xf32> to vector<256x16xf32>
    %c0_49 = arith.constant 0 : index
    %c128 = arith.constant 128 : index
    %34 = vector.load %arg12[%c0_49, %c128] : memref<256x144xf32, #tpu.memory_space<vmem>>, vector<256x16xf32>
    tpu.vector_store %arg12[%c0_49, %c128], %33 {strides = array<i32>} : memref<256x144xf32, #tpu.memory_space<vmem>>, vector<256x16xf32>,
    %c0_50 = arith.constant 0 : index
    %c0_51 = arith.constant 0 : index
    %35 = vector.load %arg12[%c0_50, %c0_51] : memref<256x144xf32, #tpu.memory_space<vmem>>, vector<256x144xf32>
    %c0_52 = arith.constant 0 : index
    %c0_53 = arith.constant 0 : index
    %36 = vector.load %arg3[%c0_52, %c0_53] : memref<144x8xf32, #tpu.memory_space<vmem>>, vector<144x8xf32>
    %cst_54 = arith.constant dense<0.000000e+00> : vector<256x8xf32>
    %37 = tpu.matmul %35, %36, %cst_54 {dimension_numbers = #tpu.dot_dimension_numbers<[1], [0], [0], [1], [0, 0, 1, 1], [], []>} : vector<256x144xf32>, vector<144x8xf32>, vector<256x8xf32> -> vector<256x8xf32>
    %c0_55 = arith.constant 0 : index
    %c0_56 = arith.constant 0 : index
    %38 = vector.load %arg4[%c0_55, %c0_56] : memref<1x8xf32, #tpu.memory_space<vmem>>, vector<1x8xf32>
    %39 = vector.broadcast %38 : vector<1x8xf32> to vector<256x8xf32>
    %40 = arith.addf %37, %39 : vector<256x8xf32>
    %cst_57 = arith.constant 0.000000e+00 : f32
    %41 = vector.broadcast %cst_57 : f32 to vector<256x8xf32>
    %42 = arith.maximumf %40, %41 : vector<256x8xf32>
    %cst_58 = arith.constant 0.000000e+00 : f32
    %43 = vector.broadcast %cst_58 : f32 to vector<18x18x8xf32>
    %c0_59 = arith.constant 0 : index
    %c0_60 = arith.constant 0 : index
    %c0_61 = arith.constant 0 : index
    %44 = vector.load %arg11[%c0_59, %c0_60, %c0_61] : memref<18x18x8xf32, #tpu.memory_space<vmem>>, vector<18x18x8xf32>
    tpu.vector_store %arg11[%c0_59, %c0_60, %c0_61], %43 {strides = array<i32>} : memref<18x18x8xf32, #tpu.memory_space<vmem>>, vector<18x18x8xf32>,
    %45 = vector.shape_cast %42 : vector<256x8xf32> to vector<16x16x8xf32>
    %c1_62 = arith.constant 1 : index
    %c1_63 = arith.constant 1 : index
    %c0_64 = arith.constant 0 : index
    %46 = vector.load %arg11[%c1_62, %c1_63, %c0_64] : memref<18x18x8xf32, #tpu.memory_space<vmem>>, vector<16x16x8xf32>
    tpu.vector_store %arg11[%c1_62, %c1_63, %c0_64], %45 {strides = array<i32>} : memref<18x18x8xf32, #tpu.memory_space<vmem>>, vector<16x16x8xf32>,
    %c0_65 = arith.constant 0 : index
    %c0_66 = arith.constant 0 : index
    %c0_67 = arith.constant 0 : index
    %47 = vector.load %arg11[%c0_65, %c0_66, %c0_67] : memref<18x18x8xf32, #tpu.memory_space<vmem>>, vector<16x16x8xf32>
    %48 = vector.shape_cast %47 : vector<16x16x8xf32> to vector<256x8xf32>
    %c0_68 = arith.constant 0 : index
    %c0_69 = arith.constant 0 : index
    %49 = vector.load %arg12[%c0_68, %c0_69] : memref<256x144xf32, #tpu.memory_space<vmem>>, vector<256x8xf32>
    tpu.vector_store %arg12[%c0_68, %c0_69], %48 {strides = array<i32>} : memref<256x144xf32, #tpu.memory_space<vmem>>, vector<256x8xf32>,
    %c0_70 = arith.constant 0 : index
    %c1_71 = arith.constant 1 : index
    %c0_72 = arith.constant 0 : index
    %50 = vector.load %arg11[%c0_70, %c1_71, %c0_72] : memref<18x18x8xf32, #tpu.memory_space<vmem>>, vector<16x16x8xf32>
    %51 = vector.shape_cast %50 : vector<16x16x8xf32> to vector<256x8xf32>
    %c0_73 = arith.constant 0 : index
    %c8_74 = arith.constant 8 : index
    %52 = vector.load %arg12[%c0_73, %c8_74] : memref<256x144xf32, #tpu.memory_space<vmem>>, vector<256x8xf32>
    tpu.vector_store %arg12[%c0_73, %c8_74], %51 {strides = array<i32>} : memref<256x144xf32, #tpu.memory_space<vmem>>, vector<256x8xf32>,
    %c0_75 = arith.constant 0 : index
    %c2_76 = arith.constant 2 : index
    %c0_77 = arith.constant 0 : index
    %53 = vector.load %arg11[%c0_75, %c2_76, %c0_77] : memref<18x18x8xf32, #tpu.memory_space<vmem>>, vector<16x16x8xf32>
    %54 = vector.shape_cast %53 : vector<16x16x8xf32> to vector<256x8xf32>
    %c0_78 = arith.constant 0 : index
    %c16_79 = arith.constant 16 : index
    %55 = vector.load %arg12[%c0_78, %c16_79] : memref<256x144xf32, #tpu.memory_space<vmem>>, vector<256x8xf32>
    tpu.vector_store %arg12[%c0_78, %c16_79], %54 {strides = array<i32>} : memref<256x144xf32, #tpu.memory_space<vmem>>, vector<256x8xf32>,
    %c1_80 = arith.constant 1 : index
    %c0_81 = arith.constant 0 : index
    %c0_82 = arith.constant 0 : index
    %56 = vector.load %arg11[%c1_80, %c0_81, %c0_82] : memref<18x18x8xf32, #tpu.memory_space<vmem>>, vector<16x16x8xf32>
    %57 = vector.shape_cast %56 : vector<16x16x8xf32> to vector<256x8xf32>
    %c0_83 = arith.constant 0 : index
    %c24 = arith.constant 24 : index
    %58 = vector.load %arg12[%c0_83, %c24] : memref<256x144xf32, #tpu.memory_space<vmem>>, vector<256x8xf32>
    tpu.vector_store %arg12[%c0_83, %c24], %57 {strides = array<i32>} : memref<256x144xf32, #tpu.memory_space<vmem>>, vector<256x8xf32>,
    %c1_84 = arith.constant 1 : index
    %c1_85 = arith.constant 1 : index
    %c0_86 = arith.constant 0 : index
    %59 = vector.load %arg11[%c1_84, %c1_85, %c0_86] : memref<18x18x8xf32, #tpu.memory_space<vmem>>, vector<16x16x8xf32>
    %60 = vector.shape_cast %59 : vector<16x16x8xf32> to vector<256x8xf32>
    %c0_87 = arith.constant 0 : index
    %c32_88 = arith.constant 32 : index
    %61 = vector.load %arg12[%c0_87, %c32_88] : memref<256x144xf32, #tpu.memory_space<vmem>>, vector<256x8xf32>
    tpu.vector_store %arg12[%c0_87, %c32_88], %60 {strides = array<i32>} : memref<256x144xf32, #tpu.memory_space<vmem>>, vector<256x8xf32>,
    %c1_89 = arith.constant 1 : index
    %c2_90 = arith.constant 2 : index
    %c0_91 = arith.constant 0 : index
    %62 = vector.load %arg11[%c1_89, %c2_90, %c0_91] : memref<18x18x8xf32, #tpu.memory_space<vmem>>, vector<16x16x8xf32>
    %63 = vector.shape_cast %62 : vector<16x16x8xf32> to vector<256x8xf32>
    %c0_92 = arith.constant 0 : index
    %c40 = arith.constant 40 : index
    %64 = vector.load %arg12[%c0_92, %c40] : memref<256x144xf32, #tpu.memory_space<vmem>>, vector<256x8xf32>
    tpu.vector_store %arg12[%c0_92, %c40], %63 {strides = array<i32>} : memref<256x144xf32, #tpu.memory_space<vmem>>, vector<256x8xf32>,
    %c2_93 = arith.constant 2 : index
    %c0_94 = arith.constant 0 : index
    %c0_95 = arith.constant 0 : index
    %65 = vector.load %arg11[%c2_93, %c0_94, %c0_95] : memref<18x18x8xf32, #tpu.memory_space<vmem>>, vector<16x16x8xf32>
    %66 = vector.shape_cast %65 : vector<16x16x8xf32> to vector<256x8xf32>
    %c0_96 = arith.constant 0 : index
    %c48_97 = arith.constant 48 : index
    %67 = vector.load %arg12[%c0_96, %c48_97] : memref<256x144xf32, #tpu.memory_space<vmem>>, vector<256x8xf32>
    tpu.vector_store %arg12[%c0_96, %c48_97], %66 {strides = array<i32>} : memref<256x144xf32, #tpu.memory_space<vmem>>, vector<256x8xf32>,
    %c2_98 = arith.constant 2 : index
    %c1_99 = arith.constant 1 : index
    %c0_100 = arith.constant 0 : index
    %68 = vector.load %arg11[%c2_98, %c1_99, %c0_100] : memref<18x18x8xf32, #tpu.memory_space<vmem>>, vector<16x16x8xf32>
    %69 = vector.shape_cast %68 : vector<16x16x8xf32> to vector<256x8xf32>
    %c0_101 = arith.constant 0 : index
    %c56 = arith.constant 56 : index
    %70 = vector.load %arg12[%c0_101, %c56] : memref<256x144xf32, #tpu.memory_space<vmem>>, vector<256x8xf32>
    tpu.vector_store %arg12[%c0_101, %c56], %69 {strides = array<i32>} : memref<256x144xf32, #tpu.memory_space<vmem>>, vector<256x8xf32>,
    %c2_102 = arith.constant 2 : index
    %c2_103 = arith.constant 2 : index
    %c0_104 = arith.constant 0 : index
    %71 = vector.load %arg11[%c2_102, %c2_103, %c0_104] : memref<18x18x8xf32, #tpu.memory_space<vmem>>, vector<16x16x8xf32>
    %72 = vector.shape_cast %71 : vector<16x16x8xf32> to vector<256x8xf32>
    %c0_105 = arith.constant 0 : index
    %c64_106 = arith.constant 64 : index
    %73 = vector.load %arg12[%c0_105, %c64_106] : memref<256x144xf32, #tpu.memory_space<vmem>>, vector<256x8xf32>
    tpu.vector_store %arg12[%c0_105, %c64_106], %72 {strides = array<i32>} : memref<256x144xf32, #tpu.memory_space<vmem>>, vector<256x8xf32>,
    %c0_107 = arith.constant 0 : index
    %c0_108 = arith.constant 0 : index
    %74 = vector.load %arg12[%c0_107, %c0_108] : memref<256x144xf32, #tpu.memory_space<vmem>>, vector<256x72xf32>
    %c0_109 = arith.constant 0 : index
    %c0_110 = arith.constant 0 : index
    %75 = vector.load %arg5[%c0_109, %c0_110] : memref<72x8xf32, #tpu.memory_space<vmem>>, vector<72x8xf32>
    %cst_111 = arith.constant dense<0.000000e+00> : vector<256x8xf32>
    %76 = tpu.matmul %74, %75, %cst_111 {dimension_numbers = #tpu.dot_dimension_numbers<[1], [0], [0], [1], [0, 0, 1, 1], [], []>} : vector<256x72xf32>, vector<72x8xf32>, vector<256x8xf32> -> vector<256x8xf32>
    %c0_112 = arith.constant 0 : index
    %c0_113 = arith.constant 0 : index
    %77 = vector.load %arg6[%c0_112, %c0_113] : memref<1x8xf32, #tpu.memory_space<vmem>>, vector<1x8xf32>
    %78 = vector.broadcast %77 : vector<1x8xf32> to vector<256x8xf32>
    %79 = arith.addf %76, %78 : vector<256x8xf32>
    %cst_114 = arith.constant 0.000000e+00 : f32
    %80 = vector.broadcast %cst_114 : f32 to vector<256x8xf32>
    %81 = arith.maximumf %79, %80 : vector<256x8xf32>
    %c0_115 = arith.constant 0 : index
    %c0_116 = arith.constant 0 : index
    %82 = vector.load %arg7[%c0_115, %c0_116] : memref<8x16xf32, #tpu.memory_space<vmem>>, vector<8x16xf32>
    %cst_117 = arith.constant dense<0.000000e+00> : vector<256x16xf32>
    %83 = tpu.matmul %81, %82, %cst_117 {dimension_numbers = #tpu.dot_dimension_numbers<[1], [0], [0], [1], [0, 0, 1, 1], [], []>} : vector<256x8xf32>, vector<8x16xf32>, vector<256x16xf32> -> vector<256x16xf32>
    %c0_118 = arith.constant 0 : index
    %c0_119 = arith.constant 0 : index
    %84 = vector.load %arg8[%c0_118, %c0_119] : memref<1x16xf32, #tpu.memory_space<vmem>>, vector<1x16xf32>
    %85 = vector.broadcast %84 : vector<1x16xf32> to vector<256x16xf32>
    %86 = arith.addf %83, %85 : vector<256x16xf32>
    %c0_120 = arith.constant 0 : index
    %c0_121 = arith.constant 0 : index
    %c0_122 = arith.constant 0 : index
    %87 = vector.load %arg9[%c0_120, %c0_121, %c0_122] : memref<1x256x16xf32, #tpu.memory_space<vmem>>, vector<1x256x16xf32>
    %88 = vector.shape_cast %87 : vector<1x256x16xf32> to vector<256x16xf32>
    %89 = vector.shape_cast %86 : vector<256x16xf32> to vector<1x256x16xf32>
    tpu.vector_store %arg9[%c0_120, %c0_121, %c0_122], %89 {strides = array<i32>} : memref<1x256x16xf32, #tpu.memory_space<vmem>>, vector<1x256x16xf32>,
    return
  }
  func.func @transform_0(%arg0: i32) -> (i32, i32, i32, i32) {
    %c0_i32 = arith.constant 0 : i32
    %c0_i32_0 = arith.constant 0 : i32
    %c0_i32_1 = arith.constant 0 : i32
    %c0_i32_2 = arith.constant 0 : i32
    return %arg0, %c0_i32, %c0_i32_0, %c0_i32_1 : i32, i32, i32, i32
  }
  func.func @transform_1(%arg0: i32) -> (i32, i32, i32, i32) {
    %c0_i32 = arith.constant 0 : i32
    %c0_i32_0 = arith.constant 0 : i32
    %c0_i32_1 = arith.constant 0 : i32
    %c0_i32_2 = arith.constant 0 : i32
    return %arg0, %c0_i32, %c0_i32_0, %c0_i32_1 : i32, i32, i32, i32
  }
  func.func @transform_2(%arg0: i32) -> (i32, i32) {
    %c0_i32 = arith.constant 0 : i32
    %c0_i32_0 = arith.constant 0 : i32
    %c0_i32_1 = arith.constant 0 : i32
    return %c0_i32, %c0_i32_0 : i32, i32
  }
  func.func @transform_3(%arg0: i32) -> (i32, i32) {
    %c0_i32 = arith.constant 0 : i32
    %c0_i32_0 = arith.constant 0 : i32
    %c0_i32_1 = arith.constant 0 : i32
    return %c0_i32, %c0_i32_0 : i32, i32
  }
  func.func @transform_4(%arg0: i32) -> (i32, i32) {
    %c0_i32 = arith.constant 0 : i32
    %c0_i32_0 = arith.constant 0 : i32
    %c0_i32_1 = arith.constant 0 : i32
    return %c0_i32, %c0_i32_0 : i32, i32
  }
  func.func @transform_5(%arg0: i32) -> (i32, i32) {
    %c0_i32 = arith.constant 0 : i32
    %c0_i32_0 = arith.constant 0 : i32
    %c0_i32_1 = arith.constant 0 : i32
    return %c0_i32, %c0_i32_0 : i32, i32
  }
  func.func @transform_6(%arg0: i32) -> (i32, i32) {
    %c0_i32 = arith.constant 0 : i32
    %c0_i32_0 = arith.constant 0 : i32
    %c0_i32_1 = arith.constant 0 : i32
    return %c0_i32, %c0_i32_0 : i32, i32
  }
  func.func @transform_7(%arg0: i32) -> (i32, i32) {
    %c0_i32 = arith.constant 0 : i32
    %c0_i32_0 = arith.constant 0 : i32
    %c0_i32_1 = arith.constant 0 : i32
    return %c0_i32, %c0_i32_0 : i32, i32
  }
  func.func @transform_8(%arg0: i32) -> (i32, i32, i32) {
    %c0_i32 = arith.constant 0 : i32
    %c0_i32_0 = arith.constant 0 : i32
    %c0_i32_1 = arith.constant 0 : i32
    return %arg0, %c0_i32, %c0_i32_0 : i32, i32, i32
  }
}

</mosaic_0001>

<llo_original>
// kernel: tpu_custom_call.1
$region0: #{tpu_custom_call.1}
  #allocation0 [shape = 'u32[]', space=smem, size = 0x4, offset = 0x4, fixed_abs, tag = 'smem constant byte address 0x4 - core index']
  #allocation1 [shape = 'u32[72,128]{1,0:T(1,128)}', space=vmem, size = 0x9000, scoped, tag = 'internal scratch']
  #allocation2 [shape = 'f32[18,18,16]{2,1,0:T(8,128)}', space=vmem, size = 0x36000, scoped, tag = 'scratch operand']
  #allocation3 [shape = 'f32[18,18,8]{2,1,0:T(8,128)}', space=vmem, size = 0x36000, scoped, tag = 'scratch operand']
  #allocation4 [shape = 'f32[256,144]{1,0:T(8,128)}', space=vmem, size = 0x40000, scoped, tag = 'scratch operand']
  %s0 = inlined_call_operand.vmem [shape: f32[2,16,16,8], index: 0, kind: input, shape index: {}]
  %s1 = inlined_call_operand.vmem [shape: f32[2,16,16,8], index: 1, kind: input, shape index: {}]
  %s2 = inlined_call_operand.vmem [shape: f32[144,8], index: 2, kind: input, shape index: {}]
  %s3 = inlined_call_operand.vmem [shape: f32[1,8], index: 3, kind: input, shape index: {}]
  %s4 = inlined_call_operand.vmem [shape: f32[72,8], index: 4, kind: input, shape index: {}]
  %s5 = inlined_call_operand.vmem [shape: f32[1,8], index: 5, kind: input, shape index: {}]
  %s6 = inlined_call_operand.vmem [shape: f32[8,16], index: 6, kind: input, shape index: {}]
  %s7 = inlined_call_operand.vmem [shape: f32[1,16], index: 7, kind: input, shape index: {}]
  %s8 = inlined_call_operand.vmem [shape: f32[2,256,16], index: 8, kind: output, shape index: {}]
  %s9 = sld [smem:[#allocation0]]
  $region65: #{tpu_custom_call.1} parent=0
    _
  %s11 = ssub.s32 1, %s9
  %s12 = scalar_select 0, %s11, %s9
  loop: start=0, step=1, limit=4
  $region2: #{tpu_custom_call.1} parent=0 // loop_pre_header
    _
  $region3: #{tpu_custom_call.1} parent=0 // loop_header
    %s14 = sphi 0, %s18
    %p15 = scmp.ge.s32.totalorder %s14, 4
    %s24 = sphi 0, %s26
    %s27 = sphi 0, %s24
    %s28 = sphi 0, %s27
    %s44 = sphi 0, %s28
    %s50 = sphi 0, %s52
    %s53 = sphi 0, %s50
    %s54 = sphi 0, %s53
    %s70 = sphi 0, %s54
    %s74 = sphi 0, %s74
    %s76 = sphi 0, %s74
    %s77 = sphi 0, %s76
    %s91 = sphi 0, %s77
    %s95 = sphi 0, %s95
    %s97 = sphi 0, %s95
    %s98 = sphi 0, %s97
    %s112 = sphi 0, %s98
    %s116 = sphi 0, %s116
    %s118 = sphi 0, %s116
    %s119 = sphi 0, %s118
    %s133 = sphi 0, %s119
    %s137 = sphi 0, %s137
    %s139 = sphi 0, %s137
    %s140 = sphi 0, %s139
    %s154 = sphi 0, %s140
    %s158 = sphi 0, %s158
    %s160 = sphi 0, %s158
    %s161 = sphi 0, %s160
    %s175 = sphi 0, %s161
    %s179 = sphi 0, %s179
    %s181 = sphi 0, %s179
    %s182 = sphi 0, %s181
    %s196 = sphi 0, %s182
    %s202 = sphi 0, %s204
    %s205 = sphi 0, %s202
    %s206 = sphi 0, %s205
    %s222 = sphi 0, %s206
  $region4: #{tpu_custom_call.1} parent=0 // loop_header_branch
    %17 = sbr.rel (%p15) target = $region8
  $region5: #{tpu_custom_call.1} parent=0 // loop_body
    %s19 = ssub.s32 %s14, 1
    %s20 = ssub.s32 %s14, 2
    %s21 = sadd.s32 %s14, 1
    %s22 = ssub.s32 %s14, %s21
    %p23 = scmp.eq.s32.totalorder %s22, 0
    %s25 = sadd.s32 %s24, 1
    %s26 = scalar_select %p23, %s24, %s25
    %p29 = pneg %p23
    %p30 = scmp.eq.s32.totalorder %s14, 1
    %p31 = por %p29, %p30
    %p32 = scmp.ne.s32.totalorder %s24, %s27
    %p33 = scmp.eq.s32.totalorder %s14, 0
    %p34 = por %p32, %p33
    %p35 = scmp.ne.s32.totalorder %s24, %s27
    %p36 = scmp.eq.s32.totalorder %s19, 1
    %p37 = por %p35, %p36
    %p38 = scmp.ne.s32.totalorder %s27, %s28
    %p39 = scmp.eq.s32.totalorder %s19, 0
    %p40 = por %p38, %p39
    %p41 = scmp.ne.s32.totalorder %s27, %s28
    %p42 = scmp.eq.s32.totalorder %s20, 1
    %p43 = por %p41, %p42
    %p45 = scmp.ne.s32.totalorder %s28, %s44
    %p46 = scmp.eq.s32.totalorder %s20, 0
    %p47 = por %p45, %p46
    %s48 = ssub.s32 %s14, %s21
    %p49 = scmp.eq.s32.totalorder %s48, 0
    %s51 = sadd.s32 %s50, 1
    %s52 = scalar_select %p49, %s50, %s51
    %p55 = pneg %p49
    %p56 = scmp.eq.s32.totalorder %s14, 1
    %p57 = por %p55, %p56
    %p58 = scmp.ne.s32.totalorder %s50, %s53
    %p59 = scmp.eq.s32.totalorder %s14, 0
    %p60 = por %p58, %p59
    %p61 = scmp.ne.s32.totalorder %s50, %s53
    %p62 = scmp.eq.s32.totalorder %s19, 1
    %p63 = por %p61, %p62
    %p64 = scmp.ne.s32.totalorder %s53, %s54
    %p65 = scmp.eq.s32.totalorder %s19, 0
    %p66 = por %p64, %p65
    %p67 = scmp.ne.s32.totalorder %s53, %s54
    %p68 = scmp.eq.s32.totalorder %s20, 1
    %p69 = por %p67, %p68
    %p71 = scmp.ne.s32.totalorder %s54, %s70
    %p72 = scmp.eq.s32.totalorder %s20, 0
    %p73 = por %p71, %p72
    %s75 = sadd.s32 %s74, 1
    %p78 = scmp.eq.s32.totalorder %s14, 1
    %p79 = scmp.ne.s32.totalorder %s74, %s76
    %p80 = scmp.eq.s32.totalorder %s14, 0
    %p81 = por %p79, %p80
    %p82 = scmp.ne.s32.totalorder %s74, %s76
    %p83 = scmp.eq.s32.totalorder %s19, 1
    %p84 = por %p82, %p83
    %p85 = scmp.ne.s32.totalorder %s76, %s77
    %p86 = scmp.eq.s32.totalorder %s19, 0
    %p87 = por %p85, %p86
    %p88 = scmp.ne.s32.totalorder %s76, %s77
    %p89 = scmp.eq.s32.totalorder %s20, 1
    %p90 = por %p88, %p89
    %p92 = scmp.ne.s32.totalorder %s77, %s91
    %p93 = scmp.eq.s32.totalorder %s20, 0
    %p94 = por %p92, %p93
    %s96 = sadd.s32 %s95, 1
    %p99 = scmp.eq.s32.totalorder %s14, 1
    %p100 = scmp.ne.s32.totalorder %s95, %s97
    %p101 = scmp.eq.s32.totalorder %s14, 0
    %p102 = por %p100, %p101
    %p103 = scmp.ne.s32.totalorder %s95, %s97
    %p104 = scmp.eq.s32.totalorder %s19, 1
    %p105 = por %p103, %p104
    %p106 = scmp.ne.s32.totalorder %s97, %s98
    %p107 = scmp.eq.s32.totalorder %s19, 0
    %p108 = por %p106, %p107
    %p109 = scmp.ne.s32.totalorder %s97, %s98
    %p110 = scmp.eq.s32.totalorder %s20, 1
    %p111 = por %p109, %p110
    %p113 = scmp.ne.s32.totalorder %s98, %s112
    %p114 = scmp.eq.s32.totalorder %s20, 0
    %p115 = por %p113, %p114
    %s117 = sadd.s32 %s116, 1
    %p120 = scmp.eq.s32.totalorder %s14, 1
    %p121 = scmp.ne.s32.totalorder %s116, %s118
    %p122 = scmp.eq.s32.totalorder %s14, 0
    %p123 = por %p121, %p122
    %p124 = scmp.ne.s32.totalorder %s116, %s118
    %p125 = scmp.eq.s32.totalorder %s19, 1
    %p126 = por %p124, %p125
    %p127 = scmp.ne.s32.totalorder %s118, %s119
    %p128 = scmp.eq.s32.totalorder %s19, 0
    %p129 = por %p127, %p128
    %p130 = scmp.ne.s32.totalorder %s118, %s119
    %p131 = scmp.eq.s32.totalorder %s20, 1
    %p132 = por %p130, %p131
    %p134 = scmp.ne.s32.totalorder %s119, %s133
    %p135 = scmp.eq.s32.totalorder %s20, 0
    %p136 = por %p134, %p135
    %s138 = sadd.s32 %s137, 1
    %p141 = scmp.eq.s32.totalorder %s14, 1
    %p142 = scmp.ne.s32.totalorder %s137, %s139
    %p143 = scmp.eq.s32.totalorder %s14, 0
    %p144 = por %p142, %p143
    %p145 = scmp.ne.s32.totalorder %s137, %s139
    %p146 = scmp.eq.s32.totalorder %s19, 1
    %p147 = por %p145, %p146
    %p148 = scmp.ne.s32.totalorder %s139, %s140
    %p149 = scmp.eq.s32.totalorder %s19, 0
    %p150 = por %p148, %p149
    %p151 = scmp.ne.s32.totalorder %s139, %s140
    %p152 = scmp.eq.s32.totalorder %s20, 1
    %p153 = por %p151, %p152
    %p155 = scmp.ne.s32.totalorder %s140, %s154
    %p156 = scmp.eq.s32.totalorder %s20, 0
    %p157 = por %p155, %p156
    %s159 = sadd.s32 %s158, 1
    %p162 = scmp.eq.s32.totalorder %s14, 1
    %p163 = scmp.ne.s32.totalorder %s158, %s160
    %p164 = scmp.eq.s32.totalorder %s14, 0
    %p165 = por %p163, %p164
    %p166 = scmp.ne.s32.totalorder %s158, %s160
    %p167 = scmp.eq.s32.totalorder %s19, 1
    %p168 = por %p166, %p167
    %p169 = scmp.ne.s32.totalorder %s160, %s161
    %p170 = scmp.eq.s32.totalorder %s19, 0
    %p171 = por %p169, %p170
    %p172 = scmp.ne.s32.totalorder %s160, %s161
    %p173 = scmp.eq.s32.totalorder %s20, 1
    %p174 = por %p172, %p173
    %p176 = scmp.ne.s32.totalorder %s161, %s175
    %p177 = scmp.eq.s32.totalorder %s20, 0
    %p178 = por %p176, %p177
    %s180 = sadd.s32 %s179, 1
    %p183 = scmp.eq.s32.totalorder %s14, 1
    %p184 = scmp.ne.s32.totalorder %s179, %s181
    %p185 = scmp.eq.s32.totalorder %s14, 0
    %p186 = por %p184, %p185
    %p187 = scmp.ne.s32.totalorder %s179, %s181
    %p188 = scmp.eq.s32.totalorder %s19, 1
    %p189 = por %p187, %p188
    %p190 = scmp.ne.s32.totalorder %s181, %s182
    %p191 = scmp.eq.s32.totalorder %s19, 0
    %p192 = por %p190, %p191
    %p193 = scmp.ne.s32.totalorder %s181, %s182
    %p194 = scmp.eq.s32.totalorder %s20, 1
    %p195 = por %p193, %p194
    %p197 = scmp.ne.s32.totalorder %s182, %s196
    %p198 = scmp.eq.s32.totalorder %s20, 0
    %p199 = por %p197, %p198
    %s200 = ssub.s32 %s14, %s21
    %p201 = scmp.eq.s32.totalorder %s200, 0
    %s203 = sadd.s32 %s202, 1
    %s204 = scalar_select %p201, %s202, %s203
    %p207 = pneg %p201
    %p208 = scmp.eq.s32.totalorder %s14, 1
    %p209 = por %p207, %p208
    %p210 = scmp.ne.s32.totalorder %s202, %s205
    %p211 = scmp.eq.s32.totalorder %s14, 0
    %p212 = por %p210, %p211
    %p213 = scmp.ne.s32.totalorder %s202, %s205
    %p214 = scmp.eq.s32.totalorder %s19, 1
    %p215 = por %p213, %p214
    %p216 = scmp.ne.s32.totalorder %s205, %s206
    %p217 = scmp.eq.s32.totalorder %s19, 0
    %p218 = por %p216, %p217
    %p219 = scmp.ne.s32.totalorder %s205, %s206
    %p220 = scmp.eq.s32.totalorder %s20, 1
    %p221 = por %p219, %p220
    %p223 = scmp.ne.s32.totalorder %s206, %s222
    %p224 = scmp.eq.s32.totalorder %s20, 0
    %p225 = por %p223, %p224
    %p226 = scmp.le.s32.totalorder 1, %s14
    %p227 = scmp.lt.s32.totalorder %s14, 3
    %p228 = pnand %p226, %p227
    %p229 = pneg %p228
    // Predicated region
    $region9: #{tpu_custom_call.1} parent=5 // pred_check
      _
    $region10: #{tpu_custom_call.1} parent=5 // pred_check_branch
      %231 = sbr.rel (%p228) target = $region12
    $region11: #{tpu_custom_call.1} parent=5 // pred_region
      %s232 = ssub.s32 %s14, 1
      // Predicated region
      $region13: #{tpu_custom_call.1} parent=11 // pred_check
        %p233 = pneg %p87
      $region14: #{tpu_custom_call.1} parent=11 // pred_check_branch
        %235 = sbr.rel (%p233) target = $region16
      $region15: #{tpu_custom_call.1} parent=11 // pred_region
        _
      $region16: #{tpu_custom_call.1} parent=11 // pred_fallthru
        _
      // Predicated region
      $region17: #{tpu_custom_call.1} parent=11 // pred_check
        %p236 = pneg %p108
      $region18: #{tpu_custom_call.1} parent=11 // pred_check_branch
        %238 = sbr.rel (%p236) target = $region20
      $region19: #{tpu_custom_call.1} parent=11 // pred_region
        _
      $region20: #{tpu_custom_call.1} parent=11 // pred_fallthru
        _
      // Predicated region
      $region21: #{tpu_custom_call.1} parent=11 // pred_check
        %p239 = pneg %p129
      $region22: #{tpu_custom_call.1} parent=11 // pred_check_branch
        %241 = sbr.rel (%p239) target = $region24
      $region23: #{tpu_custom_call.1} parent=11 // pred_region
        _
      $region24: #{tpu_custom_call.1} parent=11 // pred_fallthru
        _
      // Predicated region
      $region25: #{tpu_custom_call.1} parent=11 // pred_check
        %p242 = pneg %p150
      $region26: #{tpu_custom_call.1} parent=11 // pred_check_branch
        %244 = sbr.rel (%p242) target = $region28
      $region27: #{tpu_custom_call.1} parent=11 // pred_region
        _
      $region28: #{tpu_custom_call.1} parent=11 // pred_fallthru
        _
      // Predicated region
      $region29: #{tpu_custom_call.1} parent=11 // pred_check
        %p245 = pneg %p171
      $region30: #{tpu_custom_call.1} parent=11 // pred_check_branch
        %247 = sbr.rel (%p245) target = $region32
      $region31: #{tpu_custom_call.1} parent=11 // pred_region
        _
      $region32: #{tpu_custom_call.1} parent=11 // pred_fallthru
        _
      // Predicated region
      $region33: #{tpu_custom_call.1} parent=11 // pred_check
        %p248 = pneg %p192
      $region34: #{tpu_custom_call.1} parent=11 // pred_check_branch
        %250 = sbr.rel (%p248) target = $region36
      $region35: #{tpu_custom_call.1} parent=11 // pred_region
        _
      $region36: #{tpu_custom_call.1} parent=11 // pred_fallthru
        _
    $region12: #{tpu_custom_call.1} parent=5 // pred_fallthru
      _
    %p251 = scmp.lt.s32.totalorder %s14, 2
    // Predicated region
    $region37: #{tpu_custom_call.1} parent=5 // pred_check
      %p252 = pneg %p251
    $region38: #{tpu_custom_call.1} parent=5 // pred_check_branch
      %254 = sbr.rel (%p252) target = $region40
    $region39: #{tpu_custom_call.1} parent=5 // pred_region
      // Predicated region
      $region41: #{tpu_custom_call.1} parent=39 // pred_check
        %p255 = pneg %p34
      $region42: #{tpu_custom_call.1} parent=39 // pred_check_branch
        %257 = sbr.rel (%p255) target = $region44
      $region43: #{tpu_custom_call.1} parent=39 // pred_region
        %p258 = scmp.lt.s32.totalorder %s14, 1
        %s259 = scalar_select %p258, %s14, 1
        %s260 = smul.addr %s259, 32
        %s261 = smul.addr %s260, 8
        %s262 = scalar_lea.vmem %s0, %s261
      $region44: #{tpu_custom_call.1} parent=39 // pred_fallthru
        _
      // Predicated region
      $region45: #{tpu_custom_call.1} parent=39 // pred_check
        %p263 = pneg %p60
      $region46: #{tpu_custom_call.1} parent=39 // pred_check_branch
        %265 = sbr.rel (%p263) target = $region48
      $region47: #{tpu_custom_call.1} parent=39 // pred_region
        %p266 = scmp.lt.s32.totalorder %s14, 1
        %s267 = scalar_select %p266, %s14, 1
        %s268 = smul.addr %s267, 32
        %s269 = smul.addr %s268, 8
        %s270 = scalar_lea.vmem %s1, %s269
      $region48: #{tpu_custom_call.1} parent=39 // pred_fallthru
        _
    $region40: #{tpu_custom_call.1} parent=5 // pred_fallthru
      _
    %p271 = scmp.le.s32.totalorder 1, %s14
    %p272 = scmp.lt.s32.totalorder %s14, 3
    %p273 = pnand %p271, %p272
    %p274 = pneg %p273
    // Predicated region
    $region49: #{tpu_custom_call.1} parent=5 // pred_check
      _
    $region50: #{tpu_custom_call.1} parent=5 // pred_check_branch
      %276 = sbr.rel (%p273) target = $region52
    $region51: #{tpu_custom_call.1} parent=5 // pred_region
      %s277 = ssub.s32 %s14, 1
      %p278 = scmp.lt.s32.totalorder %s19, 1
      %s279 = scalar_select %p278, %s19, 1
      %s280 = smul.addr %s279, 32
      %s281 = smul.addr %s280, 8
      %s282 = scalar_lea.vmem %s0, %s281
      %p283 = pneg %p40
      %p284 = pneg %p37
      %p285 = scmp.lt.s32.totalorder %s19, 1
      %s286 = scalar_select %p285, %s19, 1
      %s287 = smul.addr %s286, 32
      %s288 = smul.addr %s287, 8
      %s289 = scalar_lea.vmem %s1, %s288
      %p290 = pneg %p66
      %p291 = pneg %p63
      %p292 = pneg %p87
      %p293 = pneg %p84
      %p294 = pneg %p108
      %p295 = pneg %p105
      %p296 = pneg %p129
      %p297 = pneg %p126
      %p298 = pneg %p150
      %p299 = pneg %p147
      %p300 = pneg %p171
      %p301 = pneg %p168
      %p302 = pneg %p192
      %p303 = pneg %p189
      %p304 = pneg %p218
      %p305 = pneg %p215
      %p306 = scmp.lt.s32.totalorder %s19, 1
      %s307 = scalar_select %p306, %s19, 1
      %s308 = smul.addr %s307, 32
      %s309 = smul.addr %s308, 8
      %s310 = scalar_lea.vmem %s8, %s309
      %p311 = scmp.lt.s32.totalorder %s19, 1
      %s312 = scalar_select %p311, %s19, 1
      %s313 = smul.addr %s312, 32
      %s314 = smul.addr %s313, 8
      %s315 = scalar_lea.vmem %s0, %s314
      %p316 = scmp.lt.s32.totalorder %s19, 1
      %s317 = scalar_select %p316, %s19, 1
      %s318 = smul.addr %s317, 32
      %s319 = smul.addr %s318, 8
      %s320 = scalar_lea.vmem %s1, %s319
      %p321 = scmp.lt.s32.totalorder %s19, 1
      %s322 = scalar_select %p321, %s19, 1
      %s323 = smul.addr %s322, 32
      %s324 = smul.addr %s323, 8
      %s325 = scalar_lea.vmem %s8, %s324
      %vm326 = vcmask 130048
      %327 = vst.msk [vmem:[#allocation2] sm:$0xff] %vm326, 0.0
      %328 = vst.msk [vmem:[#allocation2 + $0x8] sm:$0xff] %vm326, 0.0
      %vm329 = vcmask 123904
      %330 = vst.msk [vmem:[#allocation2 + $0x10] sm:$0x3] %vm329, 0.0
      %331 = vst.msk [vmem:[#allocation2 + $0x18] sm:$0xff] %vm326, 0.0
      %332 = vst.msk [vmem:[#allocation2 + $0x20] sm:$0xff] %vm326, 0.0
      %333 = vst.msk [vmem:[#allocation2 + $0x28] sm:$0x3] %vm329, 0.0
      %334 = vst.msk [vmem:[#allocation2 + $0x30] sm:$0xff] %vm326, 0.0
      %335 = vst.msk [vmem:[#allocation2 + $0x38] sm:$0xff] %vm326, 0.0
      %336 = vst.msk [vmem:[#allocation2 + $0x40] sm:$0x3] %vm329, 0.0
      %337 = vst.msk [vmem:[#allocation2 + $0x48] sm:$0xff] %vm326, 0.0
      %338 = vst.msk [vmem:[#allocation2 + $0x50] sm:$0xff] %vm326, 0.0
      %339 = vst.msk [vmem:[#allocation2 + $0x58] sm:$0x3] %vm329, 0.0
      %340 = vst.msk [vmem:[#allocation2 + $0x60] sm:$0xff] %vm326, 0.0
      %341 = vst.msk [vmem:[#allocation2 + $0x68] sm:$0xff] %vm326, 0.0
      %342 = vst.msk [vmem:[#allocation2 + $0x70] sm:$0x3] %vm329, 0.0
      %343 = vst.msk [vmem:[#allocation2 + $0x78] sm:$0xff] %vm326, 0.0
      %344 = vst.msk [vmem:[#allocation2 + $0x80] sm:$0xff] %vm326, 0.0
      %345 = vst.msk [vmem:[#allocation2 + $0x88] sm:$0x3] %vm329, 0.0
      %346 = vst.msk [vmem:[#allocation2 + $0x90] sm:$0xff] %vm326, 0.0
      %347 = vst.msk [vmem:[#allocation2 + $0x98] sm:$0xff] %vm326, 0.0
      %348 = vst.msk [vmem:[#allocation2 + $0xa0] sm:$0x3] %vm329, 0.0
      %349 = vst.msk [vmem:[#allocation2 + $0xa8] sm:$0xff] %vm326, 0.0
      %350 = vst.msk [vmem:[#allocation2 + $0xb0] sm:$0xff] %vm326, 0.0
      %351 = vst.msk [vmem:[#allocation2 + $0xb8] sm:$0x3] %vm329, 0.0
      %352 = vst.msk [vmem:[#allocation2 + $0xc0] sm:$0xff] %vm326, 0.0
      %353 = vst.msk [vmem:[#allocation2 + $0xc8] sm:$0xff] %vm326, 0.0
      %354 = vst.msk [vmem:[#allocation2 + $0xd0] sm:$0x3] %vm329, 0.0
      %355 = vst.msk [vmem:[#allocation2 + $0xd8] sm:$0xff] %vm326, 0.0
      %356 = vst.msk [vmem:[#allocation2 + $0xe0] sm:$0xff] %vm326, 0.0
      %357 = vst.msk [vmem:[#allocation2 + $0xe8] sm:$0x3] %vm329, 0.0
      %358 = vst.msk [vmem:[#allocation2 + $0xf0] sm:$0xff] %vm326, 0.0
      %359 = vst.msk [vmem:[#allocation2 + $0xf8] sm:$0xff] %vm326, 0.0
      %360 = vst.msk [vmem:[#allocation2 + $0x100] sm:$0x3] %vm329, 0.0
      %361 = vst.msk [vmem:[#allocation2 + $0x108] sm:$0xff] %vm326, 0.0
      %362 = vst.msk [vmem:[#allocation2 + $0x110] sm:$0xff] %vm326, 0.0
      %363 = vst.msk [vmem:[#allocation2 + $0x118] sm:$0x3] %vm329, 0.0
      %364 = vst.msk [vmem:[#allocation2 + $0x120] sm:$0xff] %vm326, 0.0
      %365 = vst.msk [vmem:[#allocation2 + $0x128] sm:$0xff] %vm326, 0.0
      %366 = vst.msk [vmem:[#allocation2 + $0x130] sm:$0x3] %vm329, 0.0
      %367 = vst.msk [vmem:[#allocation2 + $0x138] sm:$0xff] %vm326, 0.0
      %368 = vst.msk [vmem:[#allocation2 + $0x140] sm:$0xff] %vm326, 0.0
      %369 = vst.msk [vmem:[#allocation2 + $0x148] sm:$0x3] %vm329, 0.0
      %370 = vst.msk [vmem:[#allocation2 + $0x150] sm:$0xff] %vm326, 0.0
      %371 = vst.msk [vmem:[#allocation2 + $0x158] sm:$0xff] %vm326, 0.0
      %372 = vst.msk [vmem:[#allocation2 + $0x160] sm:$0x3] %vm329, 0.0
      %373 = vst.msk [vmem:[#allocation2 + $0x168] sm:$0xff] %vm326, 0.0
      %374 = vst.msk [vmem:[#allocation2 + $0x170] sm:$0xff] %vm326, 0.0
      %375 = vst.msk [vmem:[#allocation2 + $0x178] sm:$0x3] %vm329, 0.0
      %376 = vst.msk [vmem:[#allocation2 + $0x180] sm:$0xff] %vm326, 0.0
      %377 = vst.msk [vmem:[#allocation2 + $0x188] sm:$0xff] %vm326, 0.0
      %378 = vst.msk [vmem:[#allocation2 + $0x190] sm:$0x3] %vm329, 0.0
      %379 = vst.msk [vmem:[#allocation2 + $0x198] sm:$0xff] %vm326, 0.0
      %380 = vst.msk [vmem:[#allocation2 + $0x1a0] sm:$0xff] %vm326, 0.0
      %381 = vst.msk [vmem:[#allocation2 + $0x1a8] sm:$0x3] %vm329, 0.0
      %v382 = vld [vmem:[%s315] sm:$0xff]
      %v383 = vld [vmem:[%s315 + $0x8] sm:$0xff]
      %v384 = vld [vmem:[%s315 + $0x10] sm:$0xff]
      %v385 = vld [vmem:[%s315 + $0x18] sm:$0xff]
      %v386 = vld [vmem:[%s315 + $0x20] sm:$0xff]
      %v387 = vld [vmem:[%s315 + $0x28] sm:$0xff]
      %v388 = vld [vmem:[%s315 + $0x30] sm:$0xff]
      %v389 = vld [vmem:[%s315 + $0x38] sm:$0xff]
      %v390 = vld [vmem:[%s315 + $0x40] sm:$0xff]
      %v391 = vld [vmem:[%s315 + $0x48] sm:$0xff]
      %v392 = vld [vmem:[%s315 + $0x50] sm:$0xff]
      %v393 = vld [vmem:[%s315 + $0x58] sm:$0xff]
      %v394 = vld [vmem:[%s315 + $0x60] sm:$0xff]
      %v395 = vld [vmem:[%s315 + $0x68] sm:$0xff]
      %v396 = vld [vmem:[%s315 + $0x70] sm:$0xff]
      %v397 = vld [vmem:[%s315 + $0x78] sm:$0xff]
      %v398 = vld [vmem:[%s315 + $0x80] sm:$0xff]
      %v399 = vld [vmem:[%s315 + $0x88] sm:$0xff]
      %v400 = vld [vmem:[%s315 + $0x90] sm:$0xff]
      %v401 = vld [vmem:[%s315 + $0x98] sm:$0xff]
      %v402 = vld [vmem:[%s315 + $0xa0] sm:$0xff]
      %v403 = vld [vmem:[%s315 + $0xa8] sm:$0xff]
      %v404 = vld [vmem:[%s315 + $0xb0] sm:$0xff]
      %v405 = vld [vmem:[%s315 + $0xb8] sm:$0xff]
      %v406 = vld [vmem:[%s315 + $0xc0] sm:$0xff]
      %v407 = vld [vmem:[%s315 + $0xc8] sm:$0xff]
      %v408 = vld [vmem:[%s315 + $0xd0] sm:$0xff]
      %v409 = vld [vmem:[%s315 + $0xd8] sm:$0xff]
      %v410 = vld [vmem:[%s315 + $0xe0] sm:$0xff]
      %v411 = vld [vmem:[%s315 + $0xe8] sm:$0xff]
      %v412 = vld [vmem:[%s315 + $0xf0] sm:$0xff]
      %v413 = vld [vmem:[%s315 + $0xf8] sm:$0xff]
      %s414 = scalar_lea.vmem [#allocation2], 24
      %vm415 = vcmask 64512
      %416 = vst.msk [vmem:[%s414 + $0x1] sm:$0xff] %vm415, %v382
      %417 = vst.msk [vmem:[%s414 + $0x9] sm:$0xff] %vm415, %v383
      %418 = vst.msk [vmem:[%s414 + $0x19] sm:$0xff] %vm415, %v384
      %419 = vst.msk [vmem:[%s414 + $0x21] sm:$0xff] %vm415, %v385
      %420 = vst.msk [vmem:[%s414 + $0x31] sm:$0xff] %vm415, %v386
      %421 = vst.msk [vmem:[%s414 + $0x39] sm:$0xff] %vm415, %v387
      %422 = vst.msk [vmem:[%s414 + $0x49] sm:$0xff] %vm415, %v388
      %423 = vst.msk [vmem:[%s414 + $0x51] sm:$0xff] %vm415, %v389
      %424 = vst.msk [vmem:[%s414 + $0x61] sm:$0xff] %vm415, %v390
      %425 = vst.msk [vmem:[%s414 + $0x69] sm:$0xff] %vm415, %v391
      %426 = vst.msk [vmem:[%s414 + $0x79] sm:$0xff] %vm415, %v392
      %427 = vst.msk [vmem:[%s414 + $0x81] sm:$0xff] %vm415, %v393
      %428 = vst.msk [vmem:[%s414 + $0x91] sm:$0xff] %vm415, %v394
      %429 = vst.msk [vmem:[%s414 + $0x99] sm:$0xff] %vm415, %v395
      %430 = vst.msk [vmem:[%s414 + $0xa9] sm:$0xff] %vm415, %v396
      %431 = vst.msk [vmem:[%s414 + $0xb1] sm:$0xff] %vm415, %v397
      %432 = vst.msk [vmem:[%s414 + $0xc1] sm:$0xff] %vm415, %v398
      %433 = vst.msk [vmem:[%s414 + $0xc9] sm:$0xff] %vm415, %v399
      %434 = vst.msk [vmem:[%s414 + $0xd9] sm:$0xff] %vm415, %v400
      %435 = vst.msk [vmem:[%s414 + $0xe1] sm:$0xff] %vm415, %v401
      %436 = vst.msk [vmem:[%s414 + $0xf1] sm:$0xff] %vm415, %v402
      %437 = vst.msk [vmem:[%s414 + $0xf9] sm:$0xff] %vm415, %v403
      %438 = vst.msk [vmem:[%s414 + $0x109] sm:$0xff] %vm415, %v404
      %439 = vst.msk [vmem:[%s414 + $0x111] sm:$0xff] %vm415, %v405
      %440 = vst.msk [vmem:[%s414 + $0x121] sm:$0xff] %vm415, %v406
      %441 = vst.msk [vmem:[%s414 + $0x129] sm:$0xff] %vm415, %v407
      %442 = vst.msk [vmem:[%s414 + $0x139] sm:$0xff] %vm415, %v408
      %443 = vst.msk [vmem:[%s414 + $0x141] sm:$0xff] %vm415, %v409
      %444 = vst.msk [vmem:[%s414 + $0x151] sm:$0xff] %vm415, %v410
      %445 = vst.msk [vmem:[%s414 + $0x159] sm:$0xff] %vm415, %v411
      %446 = vst.msk [vmem:[%s414 + $0x169] sm:$0xff] %vm415, %v412
      %447 = vst.msk [vmem:[%s414 + $0x171] sm:$0xff] %vm415, %v413
      %v448 = vld [vmem:[%s320] sm:$0xff]
      %v449 = vld [vmem:[%s320 + $0x8] sm:$0xff]
      %v450 = vld [vmem:[%s320 + $0x10] sm:$0xff]
      %v451 = vld [vmem:[%s320 + $0x18] sm:$0xff]
      %v452 = vld [vmem:[%s320 + $0x20] sm:$0xff]
      %v453 = vld [vmem:[%s320 + $0x28] sm:$0xff]
      %v454 = vld [vmem:[%s320 + $0x30] sm:$0xff]
      %v455 = vld [vmem:[%s320 + $0x38] sm:$0xff]
      %v456 = vld [vmem:[%s320 + $0x40] sm:$0xff]
      %v457 = vld [vmem:[%s320 + $0x48] sm:$0xff]
      %v458 = vld [vmem:[%s320 + $0x50] sm:$0xff]
      %v459 = vld [vmem:[%s320 + $0x58] sm:$0xff]
      %v460 = vld [vmem:[%s320 + $0x60] sm:$0xff]
      %v461 = vld [vmem:[%s320 + $0x68] sm:$0xff]
      %v462 = vld [vmem:[%s320 + $0x70] sm:$0xff]
      %v463 = vld [vmem:[%s320 + $0x78] sm:$0xff]
      %v464 = vld [vmem:[%s320 + $0x80] sm:$0xff]
      %v465 = vld [vmem:[%s320 + $0x88] sm:$0xff]
      %v466 = vld [vmem:[%s320 + $0x90] sm:$0xff]
      %v467 = vld [vmem:[%s320 + $0x98] sm:$0xff]
      %v468 = vld [vmem:[%s320 + $0xa0] sm:$0xff]
      %v469 = vld [vmem:[%s320 + $0xa8] sm:$0xff]
      %v470 = vld [vmem:[%s320 + $0xb0] sm:$0xff]
      %v471 = vld [vmem:[%s320 + $0xb8] sm:$0xff]
      %v472 = vld [vmem:[%s320 + $0xc0] sm:$0xff]
      %v473 = vld [vmem:[%s320 + $0xc8] sm:$0xff]
      %v474 = vld [vmem:[%s320 + $0xd0] sm:$0xff]
      %v475 = vld [vmem:[%s320 + $0xd8] sm:$0xff]
      %v476 = vld [vmem:[%s320 + $0xe0] sm:$0xff]
      %v477 = vld [vmem:[%s320 + $0xe8] sm:$0xff]
      %v478 = vld [vmem:[%s320 + $0xf0] sm:$0xff]
      %v479 = vld [vmem:[%s320 + $0xf8] sm:$0xff]
      %512 = vrot.lane.b32.xlu0 %v448, 8
      %v513 = vpop.permute.xlu0 %512
      %514 = vrot.lane.b32.xlu0 %v449, 8
      %v515 = vpop.permute.xlu0 %514
      %516 = vrot.lane.b32.xlu0 %v450, 8
      %v517 = vpop.permute.xlu0 %516
      %518 = vrot.lane.b32.xlu0 %v451, 8
      %v519 = vpop.permute.xlu0 %518
      %520 = vrot.lane.b32.xlu0 %v452, 8
      %v521 = vpop.permute.xlu0 %520
      %522 = vrot.lane.b32.xlu0 %v453, 8
      %v523 = vpop.permute.xlu0 %522
      %524 = vrot.lane.b32.xlu0 %v454, 8
      %v525 = vpop.permute.xlu0 %524
      %526 = vrot.lane.b32.xlu0 %v455, 8
      %v527 = vpop.permute.xlu0 %526
      %528 = vrot.lane.b32.xlu0 %v456, 8
      %v529 = vpop.permute.xlu0 %528
      %530 = vrot.lane.b32.xlu0 %v457, 8
      %v531 = vpop.permute.xlu0 %530
      %532 = vrot.lane.b32.xlu0 %v458, 8
      %v533 = vpop.permute.xlu0 %532
      %534 = vrot.lane.b32.xlu0 %v459, 8
      %v535 = vpop.permute.xlu0 %534
      %536 = vrot.lane.b32.xlu0 %v460, 8
      %v537 = vpop.permute.xlu0 %536
      %538 = vrot.lane.b32.xlu0 %v461, 8
      %v539 = vpop.permute.xlu0 %538
      %540 = vrot.lane.b32.xlu0 %v462, 8
      %v541 = vpop.permute.xlu0 %540
      %542 = vrot.lane.b32.xlu0 %v463, 8
      %v543 = vpop.permute.xlu0 %542
      %544 = vrot.lane.b32.xlu0 %v464, 8
      %v545 = vpop.permute.xlu0 %544
      %546 = vrot.lane.b32.xlu0 %v465, 8
      %v547 = vpop.permute.xlu0 %546
      %548 = vrot.lane.b32.xlu0 %v466, 8
      %v549 = vpop.permute.xlu0 %548
      %550 = vrot.lane.b32.xlu0 %v467, 8
      %v551 = vpop.permute.xlu0 %550
      %552 = vrot.lane.b32.xlu0 %v468, 8
      %v553 = vpop.permute.xlu0 %552
      %554 = vrot.lane.b32.xlu0 %v469, 8
      %v555 = vpop.permute.xlu0 %554
      %556 = vrot.lane.b32.xlu0 %v470, 8
      %v557 = vpop.permute.xlu0 %556
      %558 = vrot.lane.b32.xlu0 %v471, 8
      %v559 = vpop.permute.xlu0 %558
      %560 = vrot.lane.b32.xlu0 %v472, 8
      %v561 = vpop.permute.xlu0 %560
      %562 = vrot.lane.b32.xlu0 %v473, 8
      %v563 = vpop.permute.xlu0 %562
      %564 = vrot.lane.b32.xlu0 %v474, 8
      %v565 = vpop.permute.xlu0 %564
      %566 = vrot.lane.b32.xlu0 %v475, 8
      %v567 = vpop.permute.xlu0 %566
      %568 = vrot.lane.b32.xlu0 %v476, 8
      %v569 = vpop.permute.xlu0 %568
      %570 = vrot.lane.b32.xlu0 %v477, 8
      %v571 = vpop.permute.xlu0 %570
      %572 = vrot.lane.b32.xlu0 %v478, 8
      %v573 = vpop.permute.xlu0 %572
      %574 = vrot.lane.b32.xlu0 %v479, 8
      %v575 = vpop.permute.xlu0 %574
      %vm608 = vcmask 130112
      %609 = vst.msk [vmem:[%s414 + $0x1] sm:$0xff] %vm608, %v513
      %610 = vst.msk [vmem:[%s414 + $0x9] sm:$0xff] %vm608, %v515
      %611 = vst.msk [vmem:[%s414 + $0x19] sm:$0xff] %vm608, %v517
      %612 = vst.msk [vmem:[%s414 + $0x21] sm:$0xff] %vm608, %v519
      %613 = vst.msk [vmem:[%s414 + $0x31] sm:$0xff] %vm608, %v521
      %614 = vst.msk [vmem:[%s414 + $0x39] sm:$0xff] %vm608, %v523
      %615 = vst.msk [vmem:[%s414 + $0x49] sm:$0xff] %vm608, %v525
      %616 = vst.msk [vmem:[%s414 + $0x51] sm:$0xff] %vm608, %v527
      %617 = vst.msk [vmem:[%s414 + $0x61] sm:$0xff] %vm608, %v529
      %618 = vst.msk [vmem:[%s414 + $0x69] sm:$0xff] %vm608, %v531
      %619 = vst.msk [vmem:[%s414 + $0x79] sm:$0xff] %vm608, %v533
      %620 = vst.msk [vmem:[%s414 + $0x81] sm:$0xff] %vm608, %v535
      %621 = vst.msk [vmem:[%s414 + $0x91] sm:$0xff] %vm608, %v537
      %622 = vst.msk [vmem:[%s414 + $0x99] sm:$0xff] %vm608, %v539
      %623 = vst.msk [vmem:[%s414 + $0xa9] sm:$0xff] %vm608, %v541
      %624 = vst.msk [vmem:[%s414 + $0xb1] sm:$0xff] %vm608, %v543
      %625 = vst.msk [vmem:[%s414 + $0xc1] sm:$0xff] %vm608, %v545
      %626 = vst.msk [vmem:[%s414 + $0xc9] sm:$0xff] %vm608, %v547
      %627 = vst.msk [vmem:[%s414 + $0xd9] sm:$0xff] %vm608, %v549
      %628 = vst.msk [vmem:[%s414 + $0xe1] sm:$0xff] %vm608, %v551
      %629 = vst.msk [vmem:[%s414 + $0xf1] sm:$0xff] %vm608, %v553
      %630 = vst.msk [vmem:[%s414 + $0xf9] sm:$0xff] %vm608, %v555
      %631 = vst.msk [vmem:[%s414 + $0x109] sm:$0xff] %vm608, %v557
      %632 = vst.msk [vmem:[%s414 + $0x111] sm:$0xff] %vm608, %v559
      %633 = vst.msk [vmem:[%s414 + $0x121] sm:$0xff] %vm608, %v561
      %634 = vst.msk [vmem:[%s414 + $0x129] sm:$0xff] %vm608, %v563
      %635 = vst.msk [vmem:[%s414 + $0x139] sm:$0xff] %vm608, %v565
      %636 = vst.msk [vmem:[%s414 + $0x141] sm:$0xff] %vm608, %v567
      %637 = vst.msk [vmem:[%s414 + $0x151] sm:$0xff] %vm608, %v569
      %638 = vst.msk [vmem:[%s414 + $0x159] sm:$0xff] %vm608, %v571
      %639 = vst.msk [vmem:[%s414 + $0x169] sm:$0xff] %vm608, %v573
      %640 = vst.msk [vmem:[%s414 + $0x171] sm:$0xff] %vm608, %v575
      %v641 = vld [vmem:[#allocation2] sm:$0xff]
      %v642 = vld [vmem:[#allocation2 + $0x8] sm:$0xff]
      %v643 = vld [vmem:[#allocation2 + $0x18] sm:$0xff]
      %v644 = vld [vmem:[#allocation2 + $0x20] sm:$0xff]
      %v645 = vld [vmem:[#allocation2 + $0x30] sm:$0xff]
      %v646 = vld [vmem:[#allocation2 + $0x38] sm:$0xff]
      %v647 = vld [vmem:[#allocation2 + $0x48] sm:$0xff]
      %v648 = vld [vmem:[#allocation2 + $0x50] sm:$0xff]
      %v649 = vld [vmem:[#allocation2 + $0x60] sm:$0xff]
      %v650 = vld [vmem:[#allocation2 + $0x68] sm:$0xff]
      %v651 = vld [vmem:[#allocation2 + $0x78] sm:$0xff]
      %v652 = vld [vmem:[#allocation2 + $0x80] sm:$0xff]
      %v653 = vld [vmem:[#allocation2 + $0x90] sm:$0xff]
      %v654 = vld [vmem:[#allocation2 + $0x98] sm:$0xff]
      %v655 = vld [vmem:[#allocation2 + $0xa8] sm:$0xff]
      %v656 = vld [vmem:[#allocation2 + $0xb0] sm:$0xff]
      %v657 = vld [vmem:[#allocation2 + $0xc0] sm:$0xff]
      %v658 = vld [vmem:[#allocation2 + $0xc8] sm:$0xff]
      %v659 = vld [vmem:[#allocation2 + $0xd8] sm:$0xff]
      %v660 = vld [vmem:[#allocation2 + $0xe0] sm:$0xff]
      %v661 = vld [vmem:[#allocation2 + $0xf0] sm:$0xff]
      %v662 = vld [vmem:[#allocation2 + $0xf8] sm:$0xff]
      %v663 = vld [vmem:[#allocation2 + $0x108] sm:$0xff]
      %v664 = vld [vmem:[#allocation2 + $0x110] sm:$0xff]
      %v665 = vld [vmem:[#allocation2 + $0x120] sm:$0xff]
      %v666 = vld [vmem:[#allocation2 + $0x128] sm:$0xff]
      %v667 = vld [vmem:[#allocation2 + $0x138] sm:$0xff]
      %v668 = vld [vmem:[#allocation2 + $0x140] sm:$0xff]
      %v669 = vld [vmem:[#allocation2 + $0x150] sm:$0xff]
      %v670 = vld [vmem:[#allocation2 + $0x158] sm:$0xff]
      %v671 = vld [vmem:[#allocation2 + $0x168] sm:$0xff]
      %v672 = vld [vmem:[#allocation2 + $0x170] sm:$0xff]
      %673 = vst.msk [vmem:[#allocation4] sm:$0xff] %vm326, %v641
      %674 = vst.msk [vmem:[#allocation4 + $0x10] sm:$0xff] %vm326, %v642
      %675 = vst.msk [vmem:[#allocation4 + $0x20] sm:$0xff] %vm326, %v643
      %676 = vst.msk [vmem:[#allocation4 + $0x30] sm:$0xff] %vm326, %v644
      %677 = vst.msk [vmem:[#allocation4 + $0x40] sm:$0xff] %vm326, %v645
      %678 = vst.msk [vmem:[#allocation4 + $0x50] sm:$0xff] %vm326, %v646
      %679 = vst.msk [vmem:[#allocation4 + $0x60] sm:$0xff] %vm326, %v647
      %680 = vst.msk [vmem:[#allocation4 + $0x70] sm:$0xff] %vm326, %v648
      %681 = vst.msk [vmem:[#allocation4 + $0x80] sm:$0xff] %vm326, %v649
      %682 = vst.msk [vmem:[#allocation4 + $0x90] sm:$0xff] %vm326, %v650
      %683 = vst.msk [vmem:[#allocation4 + $0xa0] sm:$0xff] %vm326, %v651
      %684 = vst.msk [vmem:[#allocation4 + $0xb0] sm:$0xff] %vm326, %v652
      %685 = vst.msk [vmem:[#allocation4 + $0xc0] sm:$0xff] %vm326, %v653
      %686 = vst.msk [vmem:[#allocation4 + $0xd0] sm:$0xff] %vm326, %v654
      %687 = vst.msk [vmem:[#allocation4 + $0xe0] sm:$0xff] %vm326, %v655
      %688 = vst.msk [vmem:[#allocation4 + $0xf0] sm:$0xff] %vm326, %v656
      %689 = vst.msk [vmem:[#allocation4 + $0x100] sm:$0xff] %vm326, %v657
      %690 = vst.msk [vmem:[#allocation4 + $0x110] sm:$0xff] %vm326, %v658
      %691 = vst.msk [vmem:[#allocation4 + $0x120] sm:$0xff] %vm326, %v659
      %692 = vst.msk [vmem:[#allocation4 + $0x130] sm:$0xff] %vm326, %v660
      %693 = vst.msk [vmem:[#allocation4 + $0x140] sm:$0xff] %vm326, %v661
      %694 = vst.msk [vmem:[#allocation4 + $0x150] sm:$0xff] %vm326, %v662
      %695 = vst.msk [vmem:[#allocation4 + $0x160] sm:$0xff] %vm326, %v663
      %696 = vst.msk [vmem:[#allocation4 + $0x170] sm:$0xff] %vm326, %v664
      %697 = vst.msk [vmem:[#allocation4 + $0x180] sm:$0xff] %vm326, %v665
      %698 = vst.msk [vmem:[#allocation4 + $0x190] sm:$0xff] %vm326, %v666
      %699 = vst.msk [vmem:[#allocation4 + $0x1a0] sm:$0xff] %vm326, %v667
      %700 = vst.msk [vmem:[#allocation4 + $0x1b0] sm:$0xff] %vm326, %v668
      %701 = vst.msk [vmem:[#allocation4 + $0x1c0] sm:$0xff] %vm326, %v669
      %702 = vst.msk [vmem:[#allocation4 + $0x1d0] sm:$0xff] %vm326, %v670
      %703 = vst.msk [vmem:[#allocation4 + $0x1e0] sm:$0xff] %vm326, %v671
      %704 = vst.msk [vmem:[#allocation4 + $0x1f0] sm:$0xff] %vm326, %v672
      %v705 = vld [vmem:[#allocation2 + $0x1] sm:$0xff]
      %v706 = vld [vmem:[#allocation2 + $0x9] sm:$0xff]
      %v707 = vld [vmem:[#allocation2 + $0x19] sm:$0xff]
      %v708 = vld [vmem:[#allocation2 + $0x21] sm:$0xff]
      %v709 = vld [vmem:[#allocation2 + $0x31] sm:$0xff]
      %v710 = vld [vmem:[#allocation2 + $0x39] sm:$0xff]
      %v711 = vld [vmem:[#allocation2 + $0x49] sm:$0xff]
      %v712 = vld [vmem:[#allocation2 + $0x51] sm:$0xff]
      %v713 = vld [vmem:[#allocation2 + $0x61] sm:$0xff]
      %v714 = vld [vmem:[#allocation2 + $0x69] sm:$0xff]
      %v715 = vld [vmem:[#allocation2 + $0x79] sm:$0xff]
      %v716 = vld [vmem:[#allocation2 + $0x81] sm:$0xff]
      %v717 = vld [vmem:[#allocation2 + $0x91] sm:$0xff]
      %v718 = vld [vmem:[#allocation2 + $0x99] sm:$0xff]
      %v719 = vld [vmem:[#allocation2 + $0xa9] sm:$0xff]
      %v720 = vld [vmem:[#allocation2 + $0xb1] sm:$0xff]
      %v721 = vld [vmem:[#allocation2 + $0xc1] sm:$0xff]
      %v722 = vld [vmem:[#allocation2 + $0xc9] sm:$0xff]
      %v723 = vld [vmem:[#allocation2 + $0xd9] sm:$0xff]
      %v724 = vld [vmem:[#allocation2 + $0xe1] sm:$0xff]
      %v725 = vld [vmem:[#allocation2 + $0xf1] sm:$0xff]
      %v726 = vld [vmem:[#allocation2 + $0xf9] sm:$0xff]
      %v727 = vld [vmem:[#allocation2 + $0x109] sm:$0xff]
      %v728 = vld [vmem:[#allocation2 + $0x111] sm:$0xff]
      %v729 = vld [vmem:[#allocation2 + $0x121] sm:$0xff]
      %v730 = vld [vmem:[#allocation2 + $0x129] sm:$0xff]
      %v731 = vld [vmem:[#allocation2 + $0x139] sm:$0xff]
      %v732 = vld [vmem:[#allocation2 + $0x141] sm:$0xff]
      %v733 = vld [vmem:[#allocation2 + $0x151] sm:$0xff]
      %v734 = vld [vmem:[#allocation2 + $0x159] sm:$0xff]
      %v735 = vld [vmem:[#allocation2 + $0x169] sm:$0xff]
      %v736 = vld [vmem:[#allocation2 + $0x171] sm:$0xff]
      %769 = vrot.lane.b32.xlu0 %v705, 16
      %v770 = vpop.permute.xlu0 %769
      %771 = vrot.lane.b32.xlu0 %v706, 16
      %v772 = vpop.permute.xlu0 %771
      %773 = vrot.lane.b32.xlu0 %v707, 16
      %v774 = vpop.permute.xlu0 %773
      %775 = vrot.lane.b32.xlu0 %v708, 16
      %v776 = vpop.permute.xlu0 %775
      %777 = vrot.lane.b32.xlu0 %v709, 16
      %v778 = vpop.permute.xlu0 %777
      %779 = vrot.lane.b32.xlu0 %v710, 16
      %v780 = vpop.permute.xlu0 %779
      %781 = vrot.lane.b32.xlu0 %v711, 16
      %v782 = vpop.permute.xlu0 %781
      %783 = vrot.lane.b32.xlu0 %v712, 16
      %v784 = vpop.permute.xlu0 %783
      %785 = vrot.lane.b32.xlu0 %v713, 16
      %v786 = vpop.permute.xlu0 %785
      %787 = vrot.lane.b32.xlu0 %v714, 16
      %v788 = vpop.permute.xlu0 %787
      %789 = vrot.lane.b32.xlu0 %v715, 16
      %v790 = vpop.permute.xlu0 %789
      %791 = vrot.lane.b32.xlu0 %v716, 16
      %v792 = vpop.permute.xlu0 %791
      %793 = vrot.lane.b32.xlu0 %v717, 16
      %v794 = vpop.permute.xlu0 %793
      %795 = vrot.lane.b32.xlu0 %v718, 16
      %v796 = vpop.permute.xlu0 %795
      %797 = vrot.lane.b32.xlu0 %v719, 16
      %v798 = vpop.permute.xlu0 %797
      %799 = vrot.lane.b32.xlu0 %v720, 16
      %v800 = vpop.permute.xlu0 %799
      %801 = vrot.lane.b32.xlu0 %v721, 16
      %v802 = vpop.permute.xlu0 %801
      %803 = vrot.lane.b32.xlu0 %v722, 16
      %v804 = vpop.permute.xlu0 %803
      %805 = vrot.lane.b32.xlu0 %v723, 16
      %v806 = vpop.permute.xlu0 %805
      %807 = vrot.lane.b32.xlu0 %v724, 16
      %v808 = vpop.permute.xlu0 %807
      %809 = vrot.lane.b32.xlu0 %v725, 16
      %v810 = vpop.permute.xlu0 %809
      %811 = vrot.lane.b32.xlu0 %v726, 16
      %v812 = vpop.permute.xlu0 %811
      %813 = vrot.lane.b32.xlu0 %v727, 16
      %v814 = vpop.permute.xlu0 %813
      %815 = vrot.lane.b32.xlu0 %v728, 16
      %v816 = vpop.permute.xlu0 %815
      %817 = vrot.lane.b32.xlu0 %v729, 16
      %v818 = vpop.permute.xlu0 %817
      %819 = vrot.lane.b32.xlu0 %v730, 16
      %v820 = vpop.permute.xlu0 %819
      %821 = vrot.lane.b32.xlu0 %v731, 16
      %v822 = vpop.permute.xlu0 %821
      %823 = vrot.lane.b32.xlu0 %v732, 16
      %v824 = vpop.permute.xlu0 %823
      %825 = vrot.lane.b32.xlu0 %v733, 16
      %v826 = vpop.permute.xlu0 %825
      %827 = vrot.lane.b32.xlu0 %v734, 16
      %v828 = vpop.permute.xlu0 %827
      %829 = vrot.lane.b32.xlu0 %v735, 16
      %v830 = vpop.permute.xlu0 %829
      %831 = vrot.lane.b32.xlu0 %v736, 16
      %v832 = vpop.permute.xlu0 %831
      %vm865 = vcmask 261248
      %866 = vst.msk [vmem:[#allocation4] sm:$0xff] %vm865, %v770
      %867 = vst.msk [vmem:[#allocation4 + $0x10] sm:$0xff] %vm865, %v772
      %868 = vst.msk [vmem:[#allocation4 + $0x20] sm:$0xff] %vm865, %v774
      %869 = vst.msk [vmem:[#allocation4 + $0x30] sm:$0xff] %vm865, %v776
      %870 = vst.msk [vmem:[#allocation4 + $0x40] sm:$0xff] %vm865, %v778
      %871 = vst.msk [vmem:[#allocation4 + $0x50] sm:$0xff] %vm865, %v780
      %872 = vst.msk [vmem:[#allocation4 + $0x60] sm:$0xff] %vm865, %v782
      %873 = vst.msk [vmem:[#allocation4 + $0x70] sm:$0xff] %vm865, %v784
      %874 = vst.msk [vmem:[#allocation4 + $0x80] sm:$0xff] %vm865, %v786
      %875 = vst.msk [vmem:[#allocation4 + $0x90] sm:$0xff] %vm865, %v788
      %876 = vst.msk [vmem:[#allocation4 + $0xa0] sm:$0xff] %vm865, %v790
      %877 = vst.msk [vmem:[#allocation4 + $0xb0] sm:$0xff] %vm865, %v792
      %878 = vst.msk [vmem:[#allocation4 + $0xc0] sm:$0xff] %vm865, %v794
      %879 = vst.msk [vmem:[#allocation4 + $0xd0] sm:$0xff] %vm865, %v796
      %880 = vst.msk [vmem:[#allocation4 + $0xe0] sm:$0xff] %vm865, %v798
      %881 = vst.msk [vmem:[#allocation4 + $0xf0] sm:$0xff] %vm865, %v800
      %882 = vst.msk [vmem:[#allocation4 + $0x100] sm:$0xff] %vm865, %v802
      %883 = vst.msk [vmem:[#allocation4 + $0x110] sm:$0xff] %vm865, %v804
      %884 = vst.msk [vmem:[#allocation4 + $0x120] sm:$0xff] %vm865, %v806
      %885 = vst.msk [vmem:[#allocation4 + $0x130] sm:$0xff] %vm865, %v808
      %886 = vst.msk [vmem:[#allocation4 + $0x140] sm:$0xff] %vm865, %v810
      %887 = vst.msk [vmem:[#allocation4 + $0x150] sm:$0xff] %vm865, %v812
      %888 = vst.msk [vmem:[#allocation4 + $0x160] sm:$0xff] %vm865, %v814
      %889 = vst.msk [vmem:[#allocation4 + $0x170] sm:$0xff] %vm865, %v816
      %890 = vst.msk [vmem:[#allocation4 + $0x180] sm:$0xff] %vm865, %v818
      %891 = vst.msk [vmem:[#allocation4 + $0x190] sm:$0xff] %vm865, %v820
      %892 = vst.msk [vmem:[#allocation4 + $0x1a0] sm:$0xff] %vm865, %v822
      %893 = vst.msk [vmem:[#allocation4 + $0x1b0] sm:$0xff] %vm865, %v824
      %894 = vst.msk [vmem:[#allocation4 + $0x1c0] sm:$0xff] %vm865, %v826
      %895 = vst.msk [vmem:[#allocation4 + $0x1d0] sm:$0xff] %vm865, %v828
      %896 = vst.msk [vmem:[#allocation4 + $0x1e0] sm:$0xff] %vm865, %v830
      %897 = vst.msk [vmem:[#allocation4 + $0x1f0] sm:$0xff] %vm865, %v832
      %v898 = vld [vmem:[#allocation2 + $0x2] sm:$0xff]
      %v899 = vld [vmem:[#allocation2 + $0xa] sm:$0xff]
      %v900 = vld [vmem:[#allocation2 + $0x1a] sm:$0xff]
      %v901 = vld [vmem:[#allocation2 + $0x22] sm:$0xff]
      %v902 = vld [vmem:[#allocation2 + $0x32] sm:$0xff]
      %v903 = vld [vmem:[#allocation2 + $0x3a] sm:$0xff]
      %v904 = vld [vmem:[#allocation2 + $0x4a] sm:$0xff]
      %v905 = vld [vmem:[#allocation2 + $0x52] sm:$0xff]
      %v906 = vld [vmem:[#allocation2 + $0x62] sm:$0xff]
      %v907 = vld [vmem:[#allocation2 + $0x6a] sm:$0xff]
      %v908 = vld [vmem:[#allocation2 + $0x7a] sm:$0xff]
      %v909 = vld [vmem:[#allocation2 + $0x82] sm:$0xff]
      %v910 = vld [vmem:[#allocation2 + $0x92] sm:$0xff]
      %v911 = vld [vmem:[#allocation2 + $0x9a] sm:$0xff]
      %v912 = vld [vmem:[#allocation2 + $0xaa] sm:$0xff]
      %v913 = vld [vmem:[#allocation2 + $0xb2] sm:$0xff]
      %v914 = vld [vmem:[#allocation2 + $0xc2] sm:$0xff]
      %v915 = vld [vmem:[#allocation2 + $0xca] sm:$0xff]
      %v916 = vld [vmem:[#allocation2 + $0xda] sm:$0xff]
      %v917 = vld [vmem:[#allocation2 + $0xe2] sm:$0xff]
      %v918 = vld [vmem:[#allocation2 + $0xf2] sm:$0xff]
      %v919 = vld [vmem:[#allocation2 + $0xfa] sm:$0xff]
      %v920 = vld [vmem:[#allocation2 + $0x10a] sm:$0xff]
      %v921 = vld [vmem:[#allocation2 + $0x112] sm:$0xff]
      %v922 = vld [vmem:[#allocation2 + $0x122] sm:$0xff]
      %v923 = vld [vmem:[#allocation2 + $0x12a] sm:$0xff]
      %v924 = vld [vmem:[#allocation2 + $0x13a] sm:$0xff]
      %v925 = vld [vmem:[#allocation2 + $0x142] sm:$0xff]
      %v926 = vld [vmem:[#allocation2 + $0x152] sm:$0xff]
      %v927 = vld [vmem:[#allocation2 + $0x15a] sm:$0xff]
      %v928 = vld [vmem:[#allocation2 + $0x16a] sm:$0xff]
      %v929 = vld [vmem:[#allocation2 + $0x172] sm:$0xff]
      %962 = vrot.lane.b32.xlu0 %v898, 32
      %v963 = vpop.permute.xlu0 %962
      %964 = vrot.lane.b32.xlu0 %v899, 32
      %v965 = vpop.permute.xlu0 %964
      %966 = vrot.lane.b32.xlu0 %v900, 32
      %v967 = vpop.permute.xlu0 %966
      %968 = vrot.lane.b32.xlu0 %v901, 32
      %v969 = vpop.permute.xlu0 %968
      %970 = vrot.lane.b32.xlu0 %v902, 32
      %v971 = vpop.permute.xlu0 %970
      %972 = vrot.lane.b32.xlu0 %v903, 32
      %v973 = vpop.permute.xlu0 %972
      %974 = vrot.lane.b32.xlu0 %v904, 32
      %v975 = vpop.permute.xlu0 %974
      %976 = vrot.lane.b32.xlu0 %v905, 32
      %v977 = vpop.permute.xlu0 %976
      %978 = vrot.lane.b32.xlu0 %v906, 32
      %v979 = vpop.permute.xlu0 %978
      %980 = vrot.lane.b32.xlu0 %v907, 32
      %v981 = vpop.permute.xlu0 %980
      %982 = vrot.lane.b32.xlu0 %v908, 32
      %v983 = vpop.permute.xlu0 %982
      %984 = vrot.lane.b32.xlu0 %v909, 32
      %v985 = vpop.permute.xlu0 %984
      %986 = vrot.lane.b32.xlu0 %v910, 32
      %v987 = vpop.permute.xlu0 %986
      %988 = vrot.lane.b32.xlu0 %v911, 32
      %v989 = vpop.permute.xlu0 %988
      %990 = vrot.lane.b32.xlu0 %v912, 32
      %v991 = vpop.permute.xlu0 %990
      %992 = vrot.lane.b32.xlu0 %v913, 32
      %v993 = vpop.permute.xlu0 %992
      %994 = vrot.lane.b32.xlu0 %v914, 32
      %v995 = vpop.permute.xlu0 %994
      %996 = vrot.lane.b32.xlu0 %v915, 32
      %v997 = vpop.permute.xlu0 %996
      %998 = vrot.lane.b32.xlu0 %v916, 32
      %v999 = vpop.permute.xlu0 %998
      %1000 = vrot.lane.b32.xlu0 %v917, 32
      %v1001 = vpop.permute.xlu0 %1000
      %1002 = vrot.lane.b32.xlu0 %v918, 32
      %v1003 = vpop.permute.xlu0 %1002
      %1004 = vrot.lane.b32.xlu0 %v919, 32
      %v1005 = vpop.permute.xlu0 %1004
      %1006 = vrot.lane.b32.xlu0 %v920, 32
      %v1007 = vpop.permute.xlu0 %1006
      %1008 = vrot.lane.b32.xlu0 %v921, 32
      %v1009 = vpop.permute.xlu0 %1008
      %1010 = vrot.lane.b32.xlu0 %v922, 32
      %v1011 = vpop.permute.xlu0 %1010
      %1012 = vrot.lane.b32.xlu0 %v923, 32
      %v1013 = vpop.permute.xlu0 %1012
      %1014 = vrot.lane.b32.xlu0 %v924, 32
      %v1015 = vpop.permute.xlu0 %1014
      %1016 = vrot.lane.b32.xlu0 %v925, 32
      %v1017 = vpop.permute.xlu0 %1016
      %1018 = vrot.lane.b32.xlu0 %v926, 32
      %v1019 = vpop.permute.xlu0 %1018
      %1020 = vrot.lane.b32.xlu0 %v927, 32
      %v1021 = vpop.permute.xlu0 %1020
      %1022 = vrot.lane.b32.xlu0 %v928, 32
      %v1023 = vpop.permute.xlu0 %1022
      %1024 = vrot.lane.b32.xlu0 %v929, 32
      %v1025 = vpop.permute.xlu0 %1024
      %vm1058 = vcmask 392448
      %1059 = vst.msk [vmem:[#allocation4] sm:$0xff] %vm1058, %v963
      %1060 = vst.msk [vmem:[#allocation4 + $0x10] sm:$0xff] %vm1058, %v965
      %1061 = vst.msk [vmem:[#allocation4 + $0x20] sm:$0xff] %vm1058, %v967
      %1062 = vst.msk [vmem:[#allocation4 + $0x30] sm:$0xff] %vm1058, %v969
      %1063 = vst.msk [vmem:[#allocation4 + $0x40] sm:$0xff] %vm1058, %v971
      %1064 = vst.msk [vmem:[#allocation4 + $0x50] sm:$0xff] %vm1058, %v973
      %1065 = vst.msk [vmem:[#allocation4 + $0x60] sm:$0xff] %vm1058, %v975
      %1066 = vst.msk [vmem:[#allocation4 + $0x70] sm:$0xff] %vm1058, %v977
      %1067 = vst.msk [vmem:[#allocation4 + $0x80] sm:$0xff] %vm1058, %v979
      %1068 = vst.msk [vmem:[#allocation4 + $0x90] sm:$0xff] %vm1058, %v981
      %1069 = vst.msk [vmem:[#allocation4 + $0xa0] sm:$0xff] %vm1058, %v983
      %1070 = vst.msk [vmem:[#allocation4 + $0xb0] sm:$0xff] %vm1058, %v985
      %1071 = vst.msk [vmem:[#allocation4 + $0xc0] sm:$0xff] %vm1058, %v987
      %1072 = vst.msk [vmem:[#allocation4 + $0xd0] sm:$0xff] %vm1058, %v989
      %1073 = vst.msk [vmem:[#allocation4 + $0xe0] sm:$0xff] %vm1058, %v991
      %1074 = vst.msk [vmem:[#allocation4 + $0xf0] sm:$0xff] %vm1058, %v993
      %1075 = vst.msk [vmem:[#allocation4 + $0x100] sm:$0xff] %vm1058, %v995
      %1076 = vst.msk [vmem:[#allocation4 + $0x110] sm:$0xff] %vm1058, %v997
      %1077 = vst.msk [vmem:[#allocation4 + $0x120] sm:$0xff] %vm1058, %v999
      %1078 = vst.msk [vmem:[#allocation4 + $0x130] sm:$0xff] %vm1058, %v1001
      %1079 = vst.msk [vmem:[#allocation4 + $0x140] sm:$0xff] %vm1058, %v1003
      %1080 = vst.msk [vmem:[#allocation4 + $0x150] sm:$0xff] %vm1058, %v1005
      %1081 = vst.msk [vmem:[#allocation4 + $0x160] sm:$0xff] %vm1058, %v1007
      %1082 = vst.msk [vmem:[#allocation4 + $0x170] sm:$0xff] %vm1058, %v1009
      %1083 = vst.msk [vmem:[#allocation4 + $0x180] sm:$0xff] %vm1058, %v1011
      %1084 = vst.msk [vmem:[#allocation4 + $0x190] sm:$0xff] %vm1058, %v1013
      %1085 = vst.msk [vmem:[#allocation4 + $0x1a0] sm:$0xff] %vm1058, %v1015
      %1086 = vst.msk [vmem:[#allocation4 + $0x1b0] sm:$0xff] %vm1058, %v1017
      %1087 = vst.msk [vmem:[#allocation4 + $0x1c0] sm:$0xff] %vm1058, %v1019
      %1088 = vst.msk [vmem:[#allocation4 + $0x1d0] sm:$0xff] %vm1058, %v1021
      %1089 = vst.msk [vmem:[#allocation4 + $0x1e0] sm:$0xff] %vm1058, %v1023
      %1090 = vst.msk [vmem:[#allocation4 + $0x1f0] sm:$0xff] %vm1058, %v1025
      %v1091 = vld [vmem:[%s414] sm:$0xff]
      %v1092 = vld [vmem:[%s414 + $0x8] sm:$0xff]
      %v1093 = vld [vmem:[%s414 + $0x18] sm:$0xff]
      %v1094 = vld [vmem:[%s414 + $0x20] sm:$0xff]
      %v1095 = vld [vmem:[%s414 + $0x30] sm:$0xff]
      %v1096 = vld [vmem:[%s414 + $0x38] sm:$0xff]
      %v1097 = vld [vmem:[%s414 + $0x48] sm:$0xff]
      %v1098 = vld [vmem:[%s414 + $0x50] sm:$0xff]
      %v1099 = vld [vmem:[%s414 + $0x60] sm:$0xff]
      %v1100 = vld [vmem:[%s414 + $0x68] sm:$0xff]
      %v1101 = vld [vmem:[%s414 + $0x78] sm:$0xff]
      %v1102 = vld [vmem:[%s414 + $0x80] sm:$0xff]
      %v1103 = vld [vmem:[%s414 + $0x90] sm:$0xff]
      %v1104 = vld [vmem:[%s414 + $0x98] sm:$0xff]
      %v1105 = vld [vmem:[%s414 + $0xa8] sm:$0xff]
      %v1106 = vld [vmem:[%s414 + $0xb0] sm:$0xff]
      %v1107 = vld [vmem:[%s414 + $0xc0] sm:$0xff]
      %v1108 = vld [vmem:[%s414 + $0xc8] sm:$0xff]
      %v1109 = vld [vmem:[%s414 + $0xd8] sm:$0xff]
      %v1110 = vld [vmem:[%s414 + $0xe0] sm:$0xff]
      %v1111 = vld [vmem:[%s414 + $0xf0] sm:$0xff]
      %v1112 = vld [vmem:[%s414 + $0xf8] sm:$0xff]
      %v1113 = vld [vmem:[%s414 + $0x108] sm:$0xff]
      %v1114 = vld [vmem:[%s414 + $0x110] sm:$0xff]
      %v1115 = vld [vmem:[%s414 + $0x120] sm:$0xff]
      %v1116 = vld [vmem:[%s414 + $0x128] sm:$0xff]
      %v1117 = vld [vmem:[%s414 + $0x138] sm:$0xff]
      %v1118 = vld [vmem:[%s414 + $0x140] sm:$0xff]
      %v1119 = vld [vmem:[%s414 + $0x150] sm:$0xff]
      %v1120 = vld [vmem:[%s414 + $0x158] sm:$0xff]
      %v1121 = vld [vmem:[%s414 + $0x168] sm:$0xff]
      %v1122 = vld [vmem:[%s414 + $0x170] sm:$0xff]
      %1155 = vrot.lane.b32.xlu0 %v1091, 48
      %v1156 = vpop.permute.xlu0 %1155
      %1157 = vrot.lane.b32.xlu0 %v1092, 48
      %v1158 = vpop.permute.xlu0 %1157
      %1159 = vrot.lane.b32.xlu0 %v1093, 48
      %v1160 = vpop.permute.xlu0 %1159
      %1161 = vrot.lane.b32.xlu0 %v1094, 48
      %v1162 = vpop.permute.xlu0 %1161
      %1163 = vrot.lane.b32.xlu0 %v1095, 48
      %v1164 = vpop.permute.xlu0 %1163
      %1165 = vrot.lane.b32.xlu0 %v1096, 48
      %v1166 = vpop.permute.xlu0 %1165
      %1167 = vrot.lane.b32.xlu0 %v1097, 48
      %v1168 = vpop.permute.xlu0 %1167
      %1169 = vrot.lane.b32.xlu0 %v1098, 48
      %v1170 = vpop.permute.xlu0 %1169
      %1171 = vrot.lane.b32.xlu0 %v1099, 48
      %v1172 = vpop.permute.xlu0 %1171
      %1173 = vrot.lane.b32.xlu0 %v1100, 48
      %v1174 = vpop.permute.xlu0 %1173
      %1175 = vrot.lane.b32.xlu0 %v1101, 48
      %v1176 = vpop.permute.xlu0 %1175
      %1177 = vrot.lane.b32.xlu0 %v1102, 48
      %v1178 = vpop.permute.xlu0 %1177
      %1179 = vrot.lane.b32.xlu0 %v1103, 48
      %v1180 = vpop.permute.xlu0 %1179
      %1181 = vrot.lane.b32.xlu0 %v1104, 48
      %v1182 = vpop.permute.xlu0 %1181
      %1183 = vrot.lane.b32.xlu0 %v1105, 48
      %v1184 = vpop.permute.xlu0 %1183
      %1185 = vrot.lane.b32.xlu0 %v1106, 48
      %v1186 = vpop.permute.xlu0 %1185
      %1187 = vrot.lane.b32.xlu0 %v1107, 48
      %v1188 = vpop.permute.xlu0 %1187
      %1189 = vrot.lane.b32.xlu0 %v1108, 48
      %v1190 = vpop.permute.xlu0 %1189
      %1191 = vrot.lane.b32.xlu0 %v1109, 48
      %v1192 = vpop.permute.xlu0 %1191
      %1193 = vrot.lane.b32.xlu0 %v1110, 48
      %v1194 = vpop.permute.xlu0 %1193
      %1195 = vrot.lane.b32.xlu0 %v1111, 48
      %v1196 = vpop.permute.xlu0 %1195
      %1197 = vrot.lane.b32.xlu0 %v1112, 48
      %v1198 = vpop.permute.xlu0 %1197
      %1199 = vrot.lane.b32.xlu0 %v1113, 48
      %v1200 = vpop.permute.xlu0 %1199
      %1201 = vrot.lane.b32.xlu0 %v1114, 48
      %v1202 = vpop.permute.xlu0 %1201
      %1203 = vrot.lane.b32.xlu0 %v1115, 48
      %v1204 = vpop.permute.xlu0 %1203
      %1205 = vrot.lane.b32.xlu0 %v1116, 48
      %v1206 = vpop.permute.xlu0 %1205
      %1207 = vrot.lane.b32.xlu0 %v1117, 48
      %v1208 = vpop.permute.xlu0 %1207
      %1209 = vrot.lane.b32.xlu0 %v1118, 48
      %v1210 = vpop.permute.xlu0 %1209
      %1211 = vrot.lane.b32.xlu0 %v1119, 48
      %v1212 = vpop.permute.xlu0 %1211
      %1213 = vrot.lane.b32.xlu0 %v1120, 48
      %v1214 = vpop.permute.xlu0 %1213
      %1215 = vrot.lane.b32.xlu0 %v1121, 48
      %v1216 = vpop.permute.xlu0 %1215
      %1217 = vrot.lane.b32.xlu0 %v1122, 48
      %v1218 = vpop.permute.xlu0 %1217
      %vm1251 = vcmask 523648
      %1252 = vst.msk [vmem:[#allocation4] sm:$0xff] %vm1251, %v1156
      %1253 = vst.msk [vmem:[#allocation4 + $0x10] sm:$0xff] %vm1251, %v1158
      %1254 = vst.msk [vmem:[#allocation4 + $0x20] sm:$0xff] %vm1251, %v1160
      %1255 = vst.msk [vmem:[#allocation4 + $0x30] sm:$0xff] %vm1251, %v1162
      %1256 = vst.msk [vmem:[#allocation4 + $0x40] sm:$0xff] %vm1251, %v1164
      %1257 = vst.msk [vmem:[#allocation4 + $0x50] sm:$0xff] %vm1251, %v1166
      %1258 = vst.msk [vmem:[#allocation4 + $0x60] sm:$0xff] %vm1251, %v1168
      %1259 = vst.msk [vmem:[#allocation4 + $0x70] sm:$0xff] %vm1251, %v1170
      %1260 = vst.msk [vmem:[#allocation4 + $0x80] sm:$0xff] %vm1251, %v1172
      %1261 = vst.msk [vmem:[#allocation4 + $0x90] sm:$0xff] %vm1251, %v1174
      %1262 = vst.msk [vmem:[#allocation4 + $0xa0] sm:$0xff] %vm1251, %v1176
      %1263 = vst.msk [vmem:[#allocation4 + $0xb0] sm:$0xff] %vm1251, %v1178
      %1264 = vst.msk [vmem:[#allocation4 + $0xc0] sm:$0xff] %vm1251, %v1180
      %1265 = vst.msk [vmem:[#allocation4 + $0xd0] sm:$0xff] %vm1251, %v1182
      %1266 = vst.msk [vmem:[#allocation4 + $0xe0] sm:$0xff] %vm1251, %v1184
      %1267 = vst.msk [vmem:[#allocation4 + $0xf0] sm:$0xff] %vm1251, %v1186
      %1268 = vst.msk [vmem:[#allocation4 + $0x100] sm:$0xff] %vm1251, %v1188
      %1269 = vst.msk [vmem:[#allocation4 + $0x110] sm:$0xff] %vm1251, %v1190
      %1270 = vst.msk [vmem:[#allocation4 + $0x120] sm:$0xff] %vm1251, %v1192
      %1271 = vst.msk [vmem:[#allocation4 + $0x130] sm:$0xff] %vm1251, %v1194
      %1272 = vst.msk [vmem:[#allocation4 + $0x140] sm:$0xff] %vm1251, %v1196
      %1273 = vst.msk [vmem:[#allocation4 + $0x150] sm:$0xff] %vm1251, %v1198
      %1274 = vst.msk [vmem:[#allocation4 + $0x160] sm:$0xff] %vm1251, %v1200
      %1275 = vst.msk [vmem:[#allocation4 + $0x170] sm:$0xff] %vm1251, %v1202
      %1276 = vst.msk [vmem:[#allocation4 + $0x180] sm:$0xff] %vm1251, %v1204
      %1277 = vst.msk [vmem:[#allocation4 + $0x190] sm:$0xff] %vm1251, %v1206
      %1278 = vst.msk [vmem:[#allocation4 + $0x1a0] sm:$0xff] %vm1251, %v1208
      %1279 = vst.msk [vmem:[#allocation4 + $0x1b0] sm:$0xff] %vm1251, %v1210
      %1280 = vst.msk [vmem:[#allocation4 + $0x1c0] sm:$0xff] %vm1251, %v1212
      %1281 = vst.msk [vmem:[#allocation4 + $0x1d0] sm:$0xff] %vm1251, %v1214
      %1282 = vst.msk [vmem:[#allocation4 + $0x1e0] sm:$0xff] %vm1251, %v1216
      %1283 = vst.msk [vmem:[#allocation4 + $0x1f0] sm:$0xff] %vm1251, %v1218
      %v1284 = vld [vmem:[%s414 + $0x1] sm:$0xff]
      %v1285 = vld [vmem:[%s414 + $0x9] sm:$0xff]
      %v1286 = vld [vmem:[%s414 + $0x19] sm:$0xff]
      %v1287 = vld [vmem:[%s414 + $0x21] sm:$0xff]
      %v1288 = vld [vmem:[%s414 + $0x31] sm:$0xff]
      %v1289 = vld [vmem:[%s414 + $0x39] sm:$0xff]
      %v1290 = vld [vmem:[%s414 + $0x49] sm:$0xff]
      %v1291 = vld [vmem:[%s414 + $0x51] sm:$0xff]
      %v1292 = vld [vmem:[%s414 + $0x61] sm:$0xff]
      %v1293 = vld [vmem:[%s414 + $0x69] sm:$0xff]
      %v1294 = vld [vmem:[%s414 + $0x79] sm:$0xff]
      %v1295 = vld [vmem:[%s414 + $0x81] sm:$0xff]
      %v1296 = vld [vmem:[%s414 + $0x91] sm:$0xff]
      %v1297 = vld [vmem:[%s414 + $0x99] sm:$0xff]
      %v1298 = vld [vmem:[%s414 + $0xa9] sm:$0xff]
      %v1299 = vld [vmem:[%s414 + $0xb1] sm:$0xff]
      %v1300 = vld [vmem:[%s414 + $0xc1] sm:$0xff]
      %v1301 = vld [vmem:[%s414 + $0xc9] sm:$0xff]
      %v1302 = vld [vmem:[%s414 + $0xd9] sm:$0xff]
      %v1303 = vld [vmem:[%s414 + $0xe1] sm:$0xff]
      %v1304 = vld [vmem:[%s414 + $0xf1] sm:$0xff]
      %v1305 = vld [vmem:[%s414 + $0xf9] sm:$0xff]
      %v1306 = vld [vmem:[%s414 + $0x109] sm:$0xff]
      %v1307 = vld [vmem:[%s414 + $0x111] sm:$0xff]
      %v1308 = vld [vmem:[%s414 + $0x121] sm:$0xff]
      %v1309 = vld [vmem:[%s414 + $0x129] sm:$0xff]
      %v1310 = vld [vmem:[%s414 + $0x139] sm:$0xff]
      %v1311 = vld [vmem:[%s414 + $0x141] sm:$0xff]
      %v1312 = vld [vmem:[%s414 + $0x151] sm:$0xff]
      %v1313 = vld [vmem:[%s414 + $0x159] sm:$0xff]
      %v1314 = vld [vmem:[%s414 + $0x169] sm:$0xff]
      %v1315 = vld [vmem:[%s414 + $0x171] sm:$0xff]
      %1348 = vrot.lane.b32.xlu0 %v1284, 64
      %v1349 = vpop.permute.xlu0 %1348
      %1350 = vrot.lane.b32.xlu0 %v1285, 64
      %v1351 = vpop.permute.xlu0 %1350
      %1352 = vrot.lane.b32.xlu0 %v1286, 64
      %v1353 = vpop.permute.xlu0 %1352
      %1354 = vrot.lane.b32.xlu0 %v1287, 64
      %v1355 = vpop.permute.xlu0 %1354
      %1356 = vrot.lane.b32.xlu0 %v1288, 64
      %v1357 = vpop.permute.xlu0 %1356
      %1358 = vrot.lane.b32.xlu0 %v1289, 64
      %v1359 = vpop.permute.xlu0 %1358
      %1360 = vrot.lane.b32.xlu0 %v1290, 64
      %v1361 = vpop.permute.xlu0 %1360
      %1362 = vrot.lane.b32.xlu0 %v1291, 64
      %v1363 = vpop.permute.xlu0 %1362
      %1364 = vrot.lane.b32.xlu0 %v1292, 64
      %v1365 = vpop.permute.xlu0 %1364
      %1366 = vrot.lane.b32.xlu0 %v1293, 64
      %v1367 = vpop.permute.xlu0 %1366
      %1368 = vrot.lane.b32.xlu0 %v1294, 64
      %v1369 = vpop.permute.xlu0 %1368
      %1370 = vrot.lane.b32.xlu0 %v1295, 64
      %v1371 = vpop.permute.xlu0 %1370
      %1372 = vrot.lane.b32.xlu0 %v1296, 64
      %v1373 = vpop.permute.xlu0 %1372
      %1374 = vrot.lane.b32.xlu0 %v1297, 64
      %v1375 = vpop.permute.xlu0 %1374
      %1376 = vrot.lane.b32.xlu0 %v1298, 64
      %v1377 = vpop.permute.xlu0 %1376
      %1378 = vrot.lane.b32.xlu0 %v1299, 64
      %v1379 = vpop.permute.xlu0 %1378
      %1380 = vrot.lane.b32.xlu0 %v1300, 64
      %v1381 = vpop.permute.xlu0 %1380
      %1382 = vrot.lane.b32.xlu0 %v1301, 64
      %v1383 = vpop.permute.xlu0 %1382
      %1384 = vrot.lane.b32.xlu0 %v1302, 64
      %v1385 = vpop.permute.xlu0 %1384
      %1386 = vrot.lane.b32.xlu0 %v1303, 64
      %v1387 = vpop.permute.xlu0 %1386
      %1388 = vrot.lane.b32.xlu0 %v1304, 64
      %v1389 = vpop.permute.xlu0 %1388
      %1390 = vrot.lane.b32.xlu0 %v1305, 64
      %v1391 = vpop.permute.xlu0 %1390
      %1392 = vrot.lane.b32.xlu0 %v1306, 64
      %v1393 = vpop.permute.xlu0 %1392
      %1394 = vrot.lane.b32.xlu0 %v1307, 64
      %v1395 = vpop.permute.xlu0 %1394
      %1396 = vrot.lane.b32.xlu0 %v1308, 64
      %v1397 = vpop.permute.xlu0 %1396
      %1398 = vrot.lane.b32.xlu0 %v1309, 64
      %v1399 = vpop.permute.xlu0 %1398
      %1400 = vrot.lane.b32.xlu0 %v1310, 64
      %v1401 = vpop.permute.xlu0 %1400
      %1402 = vrot.lane.b32.xlu0 %v1311, 64
      %v1403 = vpop.permute.xlu0 %1402
      %1404 = vrot.lane.b32.xlu0 %v1312, 64
      %v1405 = vpop.permute.xlu0 %1404
      %1406 = vrot.lane.b32.xlu0 %v1313, 64
      %v1407 = vpop.permute.xlu0 %1406
      %1408 = vrot.lane.b32.xlu0 %v1314, 64
      %v1409 = vpop.permute.xlu0 %1408
      %1410 = vrot.lane.b32.xlu0 %v1315, 64
      %v1411 = vpop.permute.xlu0 %1410
      %vm1444 = vcmask 654848
      %1445 = vst.msk [vmem:[#allocation4] sm:$0xff] %vm1444, %v1349
      %1446 = vst.msk [vmem:[#allocation4 + $0x10] sm:$0xff] %vm1444, %v1351
      %1447 = vst.msk [vmem:[#allocation4 + $0x20] sm:$0xff] %vm1444, %v1353
      %1448 = vst.msk [vmem:[#allocation4 + $0x30] sm:$0xff] %vm1444, %v1355
      %1449 = vst.msk [vmem:[#allocation4 + $0x40] sm:$0xff] %vm1444, %v1357
      %1450 = vst.msk [vmem:[#allocation4 + $0x50] sm:$0xff] %vm1444, %v1359
      %1451 = vst.msk [vmem:[#allocation4 + $0x60] sm:$0xff] %vm1444, %v1361
      %1452 = vst.msk [vmem:[#allocation4 + $0x70] sm:$0xff] %vm1444, %v1363
      %1453 = vst.msk [vmem:[#allocation4 + $0x80] sm:$0xff] %vm1444, %v1365
      %1454 = vst.msk [vmem:[#allocation4 + $0x90] sm:$0xff] %vm1444, %v1367
      %1455 = vst.msk [vmem:[#allocation4 + $0xa0] sm:$0xff] %vm1444, %v1369
      %1456 = vst.msk [vmem:[#allocation4 + $0xb0] sm:$0xff] %vm1444, %v1371
      %1457 = vst.msk [vmem:[#allocation4 + $0xc0] sm:$0xff] %vm1444, %v1373
      %1458 = vst.msk [vmem:[#allocation4 + $0xd0] sm:$0xff] %vm1444, %v1375
      %1459 = vst.msk [vmem:[#allocation4 + $0xe0] sm:$0xff] %vm1444, %v1377
      %1460 = vst.msk [vmem:[#allocation4 + $0xf0] sm:$0xff] %vm1444, %v1379
      %1461 = vst.msk [vmem:[#allocation4 + $0x100] sm:$0xff] %vm1444, %v1381
      %1462 = vst.msk [vmem:[#allocation4 + $0x110] sm:$0xff] %vm1444, %v1383
      %1463 = vst.msk [vmem:[#allocation4 + $0x120] sm:$0xff] %vm1444, %v1385
      %1464 = vst.msk [vmem:[#allocation4 + $0x130] sm:$0xff] %vm1444, %v1387
      %1465 = vst.msk [vmem:[#allocation4 + $0x140] sm:$0xff] %vm1444, %v1389
      %1466 = vst.msk [vmem:[#allocation4 + $0x150] sm:$0xff] %vm1444, %v1391
      %1467 = vst.msk [vmem:[#allocation4 + $0x160] sm:$0xff] %vm1444, %v1393
      %1468 = vst.msk [vmem:[#allocation4 + $0x170] sm:$0xff] %vm1444, %v1395
      %1469 = vst.msk [vmem:[#allocation4 + $0x180] sm:$0xff] %vm1444, %v1397
      %1470 = vst.msk [vmem:[#allocation4 + $0x190] sm:$0xff] %vm1444, %v1399
      %1471 = vst.msk [vmem:[#allocation4 + $0x1a0] sm:$0xff] %vm1444, %v1401
      %1472 = vst.msk [vmem:[#allocation4 + $0x1b0] sm:$0xff] %vm1444, %v1403
      %1473 = vst.msk [vmem:[#allocation4 + $0x1c0] sm:$0xff] %vm1444, %v1405
      %1474 = vst.msk [vmem:[#allocation4 + $0x1d0] sm:$0xff] %vm1444, %v1407
      %1475 = vst.msk [vmem:[#allocation4 + $0x1e0] sm:$0xff] %vm1444, %v1409
      %1476 = vst.msk [vmem:[#allocation4 + $0x1f0] sm:$0xff] %vm1444, %v1411
      %v1477 = vld [vmem:[%s414 + $0x2] sm:$0xff]
      %v1478 = vld [vmem:[%s414 + $0xa] sm:$0xff]
      %v1479 = vld [vmem:[%s414 + $0x1a] sm:$0xff]
      %v1480 = vld [vmem:[%s414 + $0x22] sm:$0xff]
      %v1481 = vld [vmem:[%s414 + $0x32] sm:$0xff]
      %v1482 = vld [vmem:[%s414 + $0x3a] sm:$0xff]
      %v1483 = vld [vmem:[%s414 + $0x4a] sm:$0xff]
      %v1484 = vld [vmem:[%s414 + $0x52] sm:$0xff]
      %v1485 = vld [vmem:[%s414 + $0x62] sm:$0xff]
      %v1486 = vld [vmem:[%s414 + $0x6a] sm:$0xff]
      %v1487 = vld [vmem:[%s414 + $0x7a] sm:$0xff]
      %v1488 = vld [vmem:[%s414 + $0x82] sm:$0xff]
      %v1489 = vld [vmem:[%s414 + $0x92] sm:$0xff]
      %v1490 = vld [vmem:[%s414 + $0x9a] sm:$0xff]
      %v1491 = vld [vmem:[%s414 + $0xaa] sm:$0xff]
      %v1492 = vld [vmem:[%s414 + $0xb2] sm:$0xff]
      %v1493 = vld [vmem:[%s414 + $0xc2] sm:$0xff]
      %v1494 = vld [vmem:[%s414 + $0xca] sm:$0xff]
      %v1495 = vld [vmem:[%s414 + $0xda] sm:$0xff]
      %v1496 = vld [vmem:[%s414 + $0xe2] sm:$0xff]
      %v1497 = vld [vmem:[%s414 + $0xf2] sm:$0xff]
      %v1498 = vld [vmem:[%s414 + $0xfa] sm:$0xff]
      %v1499 = vld [vmem:[%s414 + $0x10a] sm:$0xff]
      %v1500 = vld [vmem:[%s414 + $0x112] sm:$0xff]
      %v1501 = vld [vmem:[%s414 + $0x122] sm:$0xff]
      %v1502 = vld [vmem:[%s414 + $0x12a] sm:$0xff]
      %v1503 = vld [vmem:[%s414 + $0x13a] sm:$0xff]
      %v1504 = vld [vmem:[%s414 + $0x142] sm:$0xff]
      %v1505 = vld [vmem:[%s414 + $0x152] sm:$0xff]
      %v1506 = vld [vmem:[%s414 + $0x15a] sm:$0xff]
      %v1507 = vld [vmem:[%s414 + $0x16a] sm:$0xff]
      %v1508 = vld [vmem:[%s414 + $0x172] sm:$0xff]
      %1541 = vrot.lane.b32.xlu0 %v1477, 80
      %v1542 = vpop.permute.xlu0 %1541
      %1543 = vrot.lane.b32.xlu0 %v1478, 80
      %v1544 = vpop.permute.xlu0 %1543
      %1545 = vrot.lane.b32.xlu0 %v1479, 80
      %v1546 = vpop.permute.xlu0 %1545
      %1547 = vrot.lane.b32.xlu0 %v1480, 80
      %v1548 = vpop.permute.xlu0 %1547
      %1549 = vrot.lane.b32.xlu0 %v1481, 80
      %v1550 = vpop.permute.xlu0 %1549
      %1551 = vrot.lane.b32.xlu0 %v1482, 80
      %v1552 = vpop.permute.xlu0 %1551
      %1553 = vrot.lane.b32.xlu0 %v1483, 80
      %v1554 = vpop.permute.xlu0 %1553
      %1555 = vrot.lane.b32.xlu0 %v1484, 80
      %v1556 = vpop.permute.xlu0 %1555
      %1557 = vrot.lane.b32.xlu0 %v1485, 80
      %v1558 = vpop.permute.xlu0 %1557
      %1559 = vrot.lane.b32.xlu0 %v1486, 80
      %v1560 = vpop.permute.xlu0 %1559
      %1561 = vrot.lane.b32.xlu0 %v1487, 80
      %v1562 = vpop.permute.xlu0 %1561
      %1563 = vrot.lane.b32.xlu0 %v1488, 80
      %v1564 = vpop.permute.xlu0 %1563
      %1565 = vrot.lane.b32.xlu0 %v1489, 80
      %v1566 = vpop.permute.xlu0 %1565
      %1567 = vrot.lane.b32.xlu0 %v1490, 80
      %v1568 = vpop.permute.xlu0 %1567
      %1569 = vrot.lane.b32.xlu0 %v1491, 80
      %v1570 = vpop.permute.xlu0 %1569
      %1571 = vrot.lane.b32.xlu0 %v1492, 80
      %v1572 = vpop.permute.xlu0 %1571
      %1573 = vrot.lane.b32.xlu0 %v1493, 80
      %v1574 = vpop.permute.xlu0 %1573
      %1575 = vrot.lane.b32.xlu0 %v1494, 80
      %v1576 = vpop.permute.xlu0 %1575
      %1577 = vrot.lane.b32.xlu0 %v1495, 80
      %v1578 = vpop.permute.xlu0 %1577
      %1579 = vrot.lane.b32.xlu0 %v1496, 80
      %v1580 = vpop.permute.xlu0 %1579
      %1581 = vrot.lane.b32.xlu0 %v1497, 80
      %v1582 = vpop.permute.xlu0 %1581
      %1583 = vrot.lane.b32.xlu0 %v1498, 80
      %v1584 = vpop.permute.xlu0 %1583
      %1585 = vrot.lane.b32.xlu0 %v1499, 80
      %v1586 = vpop.permute.xlu0 %1585
      %1587 = vrot.lane.b32.xlu0 %v1500, 80
      %v1588 = vpop.permute.xlu0 %1587
      %1589 = vrot.lane.b32.xlu0 %v1501, 80
      %v1590 = vpop.permute.xlu0 %1589
      %1591 = vrot.lane.b32.xlu0 %v1502, 80
      %v1592 = vpop.permute.xlu0 %1591
      %1593 = vrot.lane.b32.xlu0 %v1503, 80
      %v1594 = vpop.permute.xlu0 %1593
      %1595 = vrot.lane.b32.xlu0 %v1504, 80
      %v1596 = vpop.permute.xlu0 %1595
      %1597 = vrot.lane.b32.xlu0 %v1505, 80
      %v1598 = vpop.permute.xlu0 %1597
      %1599 = vrot.lane.b32.xlu0 %v1506, 80
      %v1600 = vpop.permute.xlu0 %1599
      %1601 = vrot.lane.b32.xlu0 %v1507, 80
      %v1602 = vpop.permute.xlu0 %1601
      %1603 = vrot.lane.b32.xlu0 %v1508, 80
      %v1604 = vpop.permute.xlu0 %1603
      %vm1637 = vcmask 786048
      %1638 = vst.msk [vmem:[#allocation4] sm:$0xff] %vm1637, %v1542
      %1639 = vst.msk [vmem:[#allocation4 + $0x10] sm:$0xff] %vm1637, %v1544
      %1640 = vst.msk [vmem:[#allocation4 + $0x20] sm:$0xff] %vm1637, %v1546
      %1641 = vst.msk [vmem:[#allocation4 + $0x30] sm:$0xff] %vm1637, %v1548
      %1642 = vst.msk [vmem:[#allocation4 + $0x40] sm:$0xff] %vm1637, %v1550
      %1643 = vst.msk [vmem:[#allocation4 + $0x50] sm:$0xff] %vm1637, %v1552
      %1644 = vst.msk [vmem:[#allocation4 + $0x60] sm:$0xff] %vm1637, %v1554
      %1645 = vst.msk [vmem:[#allocation4 + $0x70] sm:$0xff] %vm1637, %v1556
      %1646 = vst.msk [vmem:[#allocation4 + $0x80] sm:$0xff] %vm1637, %v1558
      %1647 = vst.msk [vmem:[#allocation4 + $0x90] sm:$0xff] %vm1637, %v1560
      %1648 = vst.msk [vmem:[#allocation4 + $0xa0] sm:$0xff] %vm1637, %v1562
      %1649 = vst.msk [vmem:[#allocation4 + $0xb0] sm:$0xff] %vm1637, %v1564
      %1650 = vst.msk [vmem:[#allocation4 + $0xc0] sm:$0xff] %vm1637, %v1566
      %1651 = vst.msk [vmem:[#allocation4 + $0xd0] sm:$0xff] %vm1637, %v1568
      %1652 = vst.msk [vmem:[#allocation4 + $0xe0] sm:$0xff] %vm1637, %v1570
      %1653 = vst.msk [vmem:[#allocation4 + $0xf0] sm:$0xff] %vm1637, %v1572
      %1654 = vst.msk [vmem:[#allocation4 + $0x100] sm:$0xff] %vm1637, %v1574
      %1655 = vst.msk [vmem:[#allocation4 + $0x110] sm:$0xff] %vm1637, %v1576
      %1656 = vst.msk [vmem:[#allocation4 + $0x120] sm:$0xff] %vm1637, %v1578
      %1657 = vst.msk [vmem:[#allocation4 + $0x130] sm:$0xff] %vm1637, %v1580
      %1658 = vst.msk [vmem:[#allocation4 + $0x140] sm:$0xff] %vm1637, %v1582
      %1659 = vst.msk [vmem:[#allocation4 + $0x150] sm:$0xff] %vm1637, %v1584
      %1660 = vst.msk [vmem:[#allocation4 + $0x160] sm:$0xff] %vm1637, %v1586
      %1661 = vst.msk [vmem:[#allocation4 + $0x170] sm:$0xff] %vm1637, %v1588
      %1662 = vst.msk [vmem:[#allocation4 + $0x180] sm:$0xff] %vm1637, %v1590
      %1663 = vst.msk [vmem:[#allocation4 + $0x190] sm:$0xff] %vm1637, %v1592
      %1664 = vst.msk [vmem:[#allocation4 + $0x1a0] sm:$0xff] %vm1637, %v1594
      %1665 = vst.msk [vmem:[#allocation4 + $0x1b0] sm:$0xff] %vm1637, %v1596
      %1666 = vst.msk [vmem:[#allocation4 + $0x1c0] sm:$0xff] %vm1637, %v1598
      %1667 = vst.msk [vmem:[#allocation4 + $0x1d0] sm:$0xff] %vm1637, %v1600
      %1668 = vst.msk [vmem:[#allocation4 + $0x1e0] sm:$0xff] %vm1637, %v1602
      %1669 = vst.msk [vmem:[#allocation4 + $0x1f0] sm:$0xff] %vm1637, %v1604
      %s1670 = scalar_lea.vmem [#allocation2], 48
      %v1671 = vld [vmem:[%s1670] sm:$0xff]
      %v1672 = vld [vmem:[%s1670 + $0x8] sm:$0xff]
      %v1673 = vld [vmem:[%s1670 + $0x18] sm:$0xff]
      %v1674 = vld [vmem:[%s1670 + $0x20] sm:$0xff]
      %v1675 = vld [vmem:[%s1670 + $0x30] sm:$0xff]
      %v1676 = vld [vmem:[%s1670 + $0x38] sm:$0xff]
      %v1677 = vld [vmem:[%s1670 + $0x48] sm:$0xff]
      %v1678 = vld [vmem:[%s1670 + $0x50] sm:$0xff]
      %v1679 = vld [vmem:[%s1670 + $0x60] sm:$0xff]
      %v1680 = vld [vmem:[%s1670 + $0x68] sm:$0xff]
      %v1681 = vld [vmem:[%s1670 + $0x78] sm:$0xff]
      %v1682 = vld [vmem:[%s1670 + $0x80] sm:$0xff]
      %v1683 = vld [vmem:[%s1670 + $0x90] sm:$0xff]
      %v1684 = vld [vmem:[%s1670 + $0x98] sm:$0xff]
      %v1685 = vld [vmem:[%s1670 + $0xa8] sm:$0xff]
      %v1686 = vld [vmem:[%s1670 + $0xb0] sm:$0xff]
      %v1687 = vld [vmem:[%s1670 + $0xc0] sm:$0xff]
      %v1688 = vld [vmem:[%s1670 + $0xc8] sm:$0xff]
      %v1689 = vld [vmem:[%s1670 + $0xd8] sm:$0xff]
      %v1690 = vld [vmem:[%s1670 + $0xe0] sm:$0xff]
      %v1691 = vld [vmem:[%s1670 + $0xf0] sm:$0xff]
      %v1692 = vld [vmem:[%s1670 + $0xf8] sm:$0xff]
      %v1693 = vld [vmem:[%s1670 + $0x108] sm:$0xff]
      %v1694 = vld [vmem:[%s1670 + $0x110] sm:$0xff]
      %v1695 = vld [vmem:[%s1670 + $0x120] sm:$0xff]
      %v1696 = vld [vmem:[%s1670 + $0x128] sm:$0xff]
      %v1697 = vld [vmem:[%s1670 + $0x138] sm:$0xff]
      %v1698 = vld [vmem:[%s1670 + $0x140] sm:$0xff]
      %v1699 = vld [vmem:[%s1670 + $0x150] sm:$0xff]
      %v1700 = vld [vmem:[%s1670 + $0x158] sm:$0xff]
      %v1701 = vld [vmem:[%s1670 + $0x168] sm:$0xff]
      %v1702 = vld [vmem:[%s1670 + $0x170] sm:$0xff]
      %1735 = vrot.lane.b32.xlu0 %v1671, 96
      %v1736 = vpop.permute.xlu0 %1735
      %1737 = vrot.lane.b32.xlu0 %v1672, 96
      %v1738 = vpop.permute.xlu0 %1737
      %1739 = vrot.lane.b32.xlu0 %v1673, 96
      %v1740 = vpop.permute.xlu0 %1739
      %1741 = vrot.lane.b32.xlu0 %v1674, 96
      %v1742 = vpop.permute.xlu0 %1741
      %1743 = vrot.lane.b32.xlu0 %v1675, 96
      %v1744 = vpop.permute.xlu0 %1743
      %1745 = vrot.lane.b32.xlu0 %v1676, 96
      %v1746 = vpop.permute.xlu0 %1745
      %1747 = vrot.lane.b32.xlu0 %v1677, 96
      %v1748 = vpop.permute.xlu0 %1747
      %1749 = vrot.lane.b32.xlu0 %v1678, 96
      %v1750 = vpop.permute.xlu0 %1749
      %1751 = vrot.lane.b32.xlu0 %v1679, 96
      %v1752 = vpop.permute.xlu0 %1751
      %1753 = vrot.lane.b32.xlu0 %v1680, 96
      %v1754 = vpop.permute.xlu0 %1753
      %1755 = vrot.lane.b32.xlu0 %v1681, 96
      %v1756 = vpop.permute.xlu0 %1755
      %1757 = vrot.lane.b32.xlu0 %v1682, 96
      %v1758 = vpop.permute.xlu0 %1757
      %1759 = vrot.lane.b32.xlu0 %v1683, 96
      %v1760 = vpop.permute.xlu0 %1759
      %1761 = vrot.lane.b32.xlu0 %v1684, 96
      %v1762 = vpop.permute.xlu0 %1761
      %1763 = vrot.lane.b32.xlu0 %v1685, 96
      %v1764 = vpop.permute.xlu0 %1763
      %1765 = vrot.lane.b32.xlu0 %v1686, 96
      %v1766 = vpop.permute.xlu0 %1765
      %1767 = vrot.lane.b32.xlu0 %v1687, 96
      %v1768 = vpop.permute.xlu0 %1767
      %1769 = vrot.lane.b32.xlu0 %v1688, 96
      %v1770 = vpop.permute.xlu0 %1769
      %1771 = vrot.lane.b32.xlu0 %v1689, 96
      %v1772 = vpop.permute.xlu0 %1771
      %1773 = vrot.lane.b32.xlu0 %v1690, 96
      %v1774 = vpop.permute.xlu0 %1773
      %1775 = vrot.lane.b32.xlu0 %v1691, 96
      %v1776 = vpop.permute.xlu0 %1775
      %1777 = vrot.lane.b32.xlu0 %v1692, 96
      %v1778 = vpop.permute.xlu0 %1777
      %1779 = vrot.lane.b32.xlu0 %v1693, 96
      %v1780 = vpop.permute.xlu0 %1779
      %1781 = vrot.lane.b32.xlu0 %v1694, 96
      %v1782 = vpop.permute.xlu0 %1781
      %1783 = vrot.lane.b32.xlu0 %v1695, 96
      %v1784 = vpop.permute.xlu0 %1783
      %1785 = vrot.lane.b32.xlu0 %v1696, 96
      %v1786 = vpop.permute.xlu0 %1785
      %1787 = vrot.lane.b32.xlu0 %v1697, 96
      %v1788 = vpop.permute.xlu0 %1787
      %1789 = vrot.lane.b32.xlu0 %v1698, 96
      %v1790 = vpop.permute.xlu0 %1789
      %1791 = vrot.lane.b32.xlu0 %v1699, 96
      %v1792 = vpop.permute.xlu0 %1791
      %1793 = vrot.lane.b32.xlu0 %v1700, 96
      %v1794 = vpop.permute.xlu0 %1793
      %1795 = vrot.lane.b32.xlu0 %v1701, 96
      %v1796 = vpop.permute.xlu0 %1795
      %1797 = vrot.lane.b32.xlu0 %v1702, 96
      %v1798 = vpop.permute.xlu0 %1797
      %vm1831 = vcmask 917248
      %1832 = vst.msk [vmem:[#allocation4] sm:$0xff] %vm1831, %v1736
      %1833 = vst.msk [vmem:[#allocation4 + $0x10] sm:$0xff] %vm1831, %v1738
      %1834 = vst.msk [vmem:[#allocation4 + $0x20] sm:$0xff] %vm1831, %v1740
      %1835 = vst.msk [vmem:[#allocation4 + $0x30] sm:$0xff] %vm1831, %v1742
      %1836 = vst.msk [vmem:[#allocation4 + $0x40] sm:$0xff] %vm1831, %v1744
      %1837 = vst.msk [vmem:[#allocation4 + $0x50] sm:$0xff] %vm1831, %v1746
      %1838 = vst.msk [vmem:[#allocation4 + $0x60] sm:$0xff] %vm1831, %v1748
      %1839 = vst.msk [vmem:[#allocation4 + $0x70] sm:$0xff] %vm1831, %v1750
      %1840 = vst.msk [vmem:[#allocation4 + $0x80] sm:$0xff] %vm1831, %v1752
      %1841 = vst.msk [vmem:[#allocation4 + $0x90] sm:$0xff] %vm1831, %v1754
      %1842 = vst.msk [vmem:[#allocation4 + $0xa0] sm:$0xff] %vm1831, %v1756
      %1843 = vst.msk [vmem:[#allocation4 + $0xb0] sm:$0xff] %vm1831, %v1758
      %1844 = vst.msk [vmem:[#allocation4 + $0xc0] sm:$0xff] %vm1831, %v1760
      %1845 = vst.msk [vmem:[#allocation4 + $0xd0] sm:$0xff] %vm1831, %v1762
      %1846 = vst.msk [vmem:[#allocation4 + $0xe0] sm:$0xff] %vm1831, %v1764
      %1847 = vst.msk [vmem:[#allocation4 + $0xf0] sm:$0xff] %vm1831, %v1766
      %1848 = vst.msk [vmem:[#allocation4 + $0x100] sm:$0xff] %vm1831, %v1768
      %1849 = vst.msk [vmem:[#allocation4 + $0x110] sm:$0xff] %vm1831, %v1770
      %1850 = vst.msk [vmem:[#allocation4 + $0x120] sm:$0xff] %vm1831, %v1772
      %1851 = vst.msk [vmem:[#allocation4 + $0x130] sm:$0xff] %vm1831, %v1774
      %1852 = vst.msk [vmem:[#allocation4 + $0x140] sm:$0xff] %vm1831, %v1776
      %1853 = vst.msk [vmem:[#allocation4 + $0x150] sm:$0xff] %vm1831, %v1778
      %1854 = vst.msk [vmem:[#allocation4 + $0x160] sm:$0xff] %vm1831, %v1780
      %1855 = vst.msk [vmem:[#allocation4 + $0x170] sm:$0xff] %vm1831, %v1782
      %1856 = vst.msk [vmem:[#allocation4 + $0x180] sm:$0xff] %vm1831, %v1784
      %1857 = vst.msk [vmem:[#allocation4 + $0x190] sm:$0xff] %vm1831, %v1786
      %1858 = vst.msk [vmem:[#allocation4 + $0x1a0] sm:$0xff] %vm1831, %v1788
      %1859 = vst.msk [vmem:[#allocation4 + $0x1b0] sm:$0xff] %vm1831, %v1790
      %1860 = vst.msk [vmem:[#allocation4 + $0x1c0] sm:$0xff] %vm1831, %v1792
      %1861 = vst.msk [vmem:[#allocation4 + $0x1d0] sm:$0xff] %vm1831, %v1794
      %1862 = vst.msk [vmem:[#allocation4 + $0x1e0] sm:$0xff] %vm1831, %v1796
      %1863 = vst.msk [vmem:[#allocation4 + $0x1f0] sm:$0xff] %vm1831, %v1798
      %v1864 = vld [vmem:[%s1670 + $0x1] sm:$0xff]
      %v1865 = vld [vmem:[%s1670 + $0x9] sm:$0xff]
      %v1866 = vld [vmem:[%s1670 + $0x19] sm:$0xff]
      %v1867 = vld [vmem:[%s1670 + $0x21] sm:$0xff]
      %v1868 = vld [vmem:[%s1670 + $0x31] sm:$0xff]
      %v1869 = vld [vmem:[%s1670 + $0x39] sm:$0xff]
      %v1870 = vld [vmem:[%s1670 + $0x49] sm:$0xff]
      %v1871 = vld [vmem:[%s1670 + $0x51] sm:$0xff]
      %v1872 = vld [vmem:[%s1670 + $0x61] sm:$0xff]
      %v1873 = vld [vmem:[%s1670 + $0x69] sm:$0xff]
      %v1874 = vld [vmem:[%s1670 + $0x79] sm:$0xff]
      %v1875 = vld [vmem:[%s1670 + $0x81] sm:$0xff]
      %v1876 = vld [vmem:[%s1670 + $0x91] sm:$0xff]
      %v1877 = vld [vmem:[%s1670 + $0x99] sm:$0xff]
      %v1878 = vld [vmem:[%s1670 + $0xa9] sm:$0xff]
      %v1879 = vld [vmem:[%s1670 + $0xb1] sm:$0xff]
      %v1880 = vld [vmem:[%s1670 + $0xc1] sm:$0xff]
      %v1881 = vld [vmem:[%s1670 + $0xc9] sm:$0xff]
      %v1882 = vld [vmem:[%s1670 + $0xd9] sm:$0xff]
      %v1883 = vld [vmem:[%s1670 + $0xe1] sm:$0xff]
      %v1884 = vld [vmem:[%s1670 + $0xf1] sm:$0xff]
      %v1885 = vld [vmem:[%s1670 + $0xf9] sm:$0xff]
      %v1886 = vld [vmem:[%s1670 + $0x109] sm:$0xff]
      %v1887 = vld [vmem:[%s1670 + $0x111] sm:$0xff]
      %v1888 = vld [vmem:[%s1670 + $0x121] sm:$0xff]
      %v1889 = vld [vmem:[%s1670 + $0x129] sm:$0xff]
      %v1890 = vld [vmem:[%s1670 + $0x139] sm:$0xff]
      %v1891 = vld [vmem:[%s1670 + $0x141] sm:$0xff]
      %v1892 = vld [vmem:[%s1670 + $0x151] sm:$0xff]
      %v1893 = vld [vmem:[%s1670 + $0x159] sm:$0xff]
      %v1894 = vld [vmem:[%s1670 + $0x169] sm:$0xff]
      %v1895 = vld [vmem:[%s1670 + $0x171] sm:$0xff]
      %1928 = vrot.lane.b32.xlu0 %v1864, 112
      %v1929 = vpop.permute.xlu0 %1928
      %1930 = vrot.lane.b32.xlu0 %v1865, 112
      %v1931 = vpop.permute.xlu0 %1930
      %1932 = vrot.lane.b32.xlu0 %v1866, 112
      %v1933 = vpop.permute.xlu0 %1932
      %1934 = vrot.lane.b32.xlu0 %v1867, 112
      %v1935 = vpop.permute.xlu0 %1934
      %1936 = vrot.lane.b32.xlu0 %v1868, 112
      %v1937 = vpop.permute.xlu0 %1936
      %1938 = vrot.lane.b32.xlu0 %v1869, 112
      %v1939 = vpop.permute.xlu0 %1938
      %1940 = vrot.lane.b32.xlu0 %v1870, 112
      %v1941 = vpop.permute.xlu0 %1940
      %1942 = vrot.lane.b32.xlu0 %v1871, 112
      %v1943 = vpop.permute.xlu0 %1942
      %1944 = vrot.lane.b32.xlu0 %v1872, 112
      %v1945 = vpop.permute.xlu0 %1944
      %1946 = vrot.lane.b32.xlu0 %v1873, 112
      %v1947 = vpop.permute.xlu0 %1946
      %1948 = vrot.lane.b32.xlu0 %v1874, 112
      %v1949 = vpop.permute.xlu0 %1948
      %1950 = vrot.lane.b32.xlu0 %v1875, 112
      %v1951 = vpop.permute.xlu0 %1950
      %1952 = vrot.lane.b32.xlu0 %v1876, 112
      %v1953 = vpop.permute.xlu0 %1952
      %1954 = vrot.lane.b32.xlu0 %v1877, 112
      %v1955 = vpop.permute.xlu0 %1954
      %1956 = vrot.lane.b32.xlu0 %v1878, 112
      %v1957 = vpop.permute.xlu0 %1956
      %1958 = vrot.lane.b32.xlu0 %v1879, 112
      %v1959 = vpop.permute.xlu0 %1958
      %1960 = vrot.lane.b32.xlu0 %v1880, 112
      %v1961 = vpop.permute.xlu0 %1960
      %1962 = vrot.lane.b32.xlu0 %v1881, 112
      %v1963 = vpop.permute.xlu0 %1962
      %1964 = vrot.lane.b32.xlu0 %v1882, 112
      %v1965 = vpop.permute.xlu0 %1964
      %1966 = vrot.lane.b32.xlu0 %v1883, 112
      %v1967 = vpop.permute.xlu0 %1966
      %1968 = vrot.lane.b32.xlu0 %v1884, 112
      %v1969 = vpop.permute.xlu0 %1968
      %1970 = vrot.lane.b32.xlu0 %v1885, 112
      %v1971 = vpop.permute.xlu0 %1970
      %1972 = vrot.lane.b32.xlu0 %v1886, 112
      %v1973 = vpop.permute.xlu0 %1972
      %1974 = vrot.lane.b32.xlu0 %v1887, 112
      %v1975 = vpop.permute.xlu0 %1974
      %1976 = vrot.lane.b32.xlu0 %v1888, 112
      %v1977 = vpop.permute.xlu0 %1976
      %1978 = vrot.lane.b32.xlu0 %v1889, 112
      %v1979 = vpop.permute.xlu0 %1978
      %1980 = vrot.lane.b32.xlu0 %v1890, 112
      %v1981 = vpop.permute.xlu0 %1980
      %1982 = vrot.lane.b32.xlu0 %v1891, 112
      %v1983 = vpop.permute.xlu0 %1982
      %1984 = vrot.lane.b32.xlu0 %v1892, 112
      %v1985 = vpop.permute.xlu0 %1984
      %1986 = vrot.lane.b32.xlu0 %v1893, 112
      %v1987 = vpop.permute.xlu0 %1986
      %1988 = vrot.lane.b32.xlu0 %v1894, 112
      %v1989 = vpop.permute.xlu0 %1988
      %1990 = vrot.lane.b32.xlu0 %v1895, 112
      %v1991 = vpop.permute.xlu0 %1990
      %vm2024 = vcmask 1048448
      %2025 = vst.msk [vmem:[#allocation4] sm:$0xff] %vm2024, %v1929
      %2026 = vst.msk [vmem:[#allocation4 + $0x10] sm:$0xff] %vm2024, %v1931
      %2027 = vst.msk [vmem:[#allocation4 + $0x20] sm:$0xff] %vm2024, %v1933
      %2028 = vst.msk [vmem:[#allocation4 + $0x30] sm:$0xff] %vm2024, %v1935
      %2029 = vst.msk [vmem:[#allocation4 + $0x40] sm:$0xff] %vm2024, %v1937
      %2030 = vst.msk [vmem:[#allocation4 + $0x50] sm:$0xff] %vm2024, %v1939
      %2031 = vst.msk [vmem:[#allocation4 + $0x60] sm:$0xff] %vm2024, %v1941
      %2032 = vst.msk [vmem:[#allocation4 + $0x70] sm:$0xff] %vm2024, %v1943
      %2033 = vst.msk [vmem:[#allocation4 + $0x80] sm:$0xff] %vm2024, %v1945
      %2034 = vst.msk [vmem:[#allocation4 + $0x90] sm:$0xff] %vm2024, %v1947
      %2035 = vst.msk [vmem:[#allocation4 + $0xa0] sm:$0xff] %vm2024, %v1949
      %2036 = vst.msk [vmem:[#allocation4 + $0xb0] sm:$0xff] %vm2024, %v1951
      %2037 = vst.msk [vmem:[#allocation4 + $0xc0] sm:$0xff] %vm2024, %v1953
      %2038 = vst.msk [vmem:[#allocation4 + $0xd0] sm:$0xff] %vm2024, %v1955
      %2039 = vst.msk [vmem:[#allocation4 + $0xe0] sm:$0xff] %vm2024, %v1957
      %2040 = vst.msk [vmem:[#allocation4 + $0xf0] sm:$0xff] %vm2024, %v1959
      %2041 = vst.msk [vmem:[#allocation4 + $0x100] sm:$0xff] %vm2024, %v1961
      %2042 = vst.msk [vmem:[#allocation4 + $0x110] sm:$0xff] %vm2024, %v1963
      %2043 = vst.msk [vmem:[#allocation4 + $0x120] sm:$0xff] %vm2024, %v1965
      %2044 = vst.msk [vmem:[#allocation4 + $0x130] sm:$0xff] %vm2024, %v1967
      %2045 = vst.msk [vmem:[#allocation4 + $0x140] sm:$0xff] %vm2024, %v1969
      %2046 = vst.msk [vmem:[#allocation4 + $0x150] sm:$0xff] %vm2024, %v1971
      %2047 = vst.msk [vmem:[#allocation4 + $0x160] sm:$0xff] %vm2024, %v1973
      %2048 = vst.msk [vmem:[#allocation4 + $0x170] sm:$0xff] %vm2024, %v1975
      %2049 = vst.msk [vmem:[#allocation4 + $0x180] sm:$0xff] %vm2024, %v1977
      %2050 = vst.msk [vmem:[#allocation4 + $0x190] sm:$0xff] %vm2024, %v1979
      %2051 = vst.msk [vmem:[#allocation4 + $0x1a0] sm:$0xff] %vm2024, %v1981
      %2052 = vst.msk [vmem:[#allocation4 + $0x1b0] sm:$0xff] %vm2024, %v1983
      %2053 = vst.msk [vmem:[#allocation4 + $0x1c0] sm:$0xff] %vm2024, %v1985
      %2054 = vst.msk [vmem:[#allocation4 + $0x1d0] sm:$0xff] %vm2024, %v1987
      %2055 = vst.msk [vmem:[#allocation4 + $0x1e0] sm:$0xff] %vm2024, %v1989
      %2056 = vst.msk [vmem:[#allocation4 + $0x1f0] sm:$0xff] %vm2024, %v1991
      %v2057 = vld [vmem:[%s1670 + $0x2] sm:$0xff]
      %v2058 = vld [vmem:[%s1670 + $0xa] sm:$0xff]
      %v2059 = vld [vmem:[%s1670 + $0x1a] sm:$0xff]
      %v2060 = vld [vmem:[%s1670 + $0x22] sm:$0xff]
      %v2061 = vld [vmem:[%s1670 + $0x32] sm:$0xff]
      %v2062 = vld [vmem:[%s1670 + $0x3a] sm:$0xff]
      %v2063 = vld [vmem:[%s1670 + $0x4a] sm:$0xff]
      %v2064 = vld [vmem:[%s1670 + $0x52] sm:$0xff]
      %v2065 = vld [vmem:[%s1670 + $0x62] sm:$0xff]
      %v2066 = vld [vmem:[%s1670 + $0x6a] sm:$0xff]
      %v2067 = vld [vmem:[%s1670 + $0x7a] sm:$0xff]
      %v2068 = vld [vmem:[%s1670 + $0x82] sm:$0xff]
      %v2069 = vld [vmem:[%s1670 + $0x92] sm:$0xff]
      %v2070 = vld [vmem:[%s1670 + $0x9a] sm:$0xff]
      %v2071 = vld [vmem:[%s1670 + $0xaa] sm:$0xff]
      %v2072 = vld [vmem:[%s1670 + $0xb2] sm:$0xff]
      %v2073 = vld [vmem:[%s1670 + $0xc2] sm:$0xff]
      %v2074 = vld [vmem:[%s1670 + $0xca] sm:$0xff]
      %v2075 = vld [vmem:[%s1670 + $0xda] sm:$0xff]
      %v2076 = vld [vmem:[%s1670 + $0xe2] sm:$0xff]
      %v2077 = vld [vmem:[%s1670 + $0xf2] sm:$0xff]
      %v2078 = vld [vmem:[%s1670 + $0xfa] sm:$0xff]
      %v2079 = vld [vmem:[%s1670 + $0x10a] sm:$0xff]
      %v2080 = vld [vmem:[%s1670 + $0x112] sm:$0xff]
      %v2081 = vld [vmem:[%s1670 + $0x122] sm:$0xff]
      %v2082 = vld [vmem:[%s1670 + $0x12a] sm:$0xff]
      %v2083 = vld [vmem:[%s1670 + $0x13a] sm:$0xff]
      %v2084 = vld [vmem:[%s1670 + $0x142] sm:$0xff]
      %v2085 = vld [vmem:[%s1670 + $0x152] sm:$0xff]
      %v2086 = vld [vmem:[%s1670 + $0x15a] sm:$0xff]
      %v2087 = vld [vmem:[%s1670 + $0x16a] sm:$0xff]
      %v2088 = vld [vmem:[%s1670 + $0x172] sm:$0xff]
      %2089 = vst.msk [vmem:[#allocation4 + $0x8] sm:$0xff] %vm326, %v2057
      %2090 = vst.msk [vmem:[#allocation4 + $0x18] sm:$0xff] %vm326, %v2058
      %2091 = vst.msk [vmem:[#allocation4 + $0x28] sm:$0xff] %vm326, %v2059
      %2092 = vst.msk [vmem:[#allocation4 + $0x38] sm:$0xff] %vm326, %v2060
      %2093 = vst.msk [vmem:[#allocation4 + $0x48] sm:$0xff] %vm326, %v2061
      %2094 = vst.msk [vmem:[#allocation4 + $0x58] sm:$0xff] %vm326, %v2062
      %2095 = vst.msk [vmem:[#allocation4 + $0x68] sm:$0xff] %vm326, %v2063
      %2096 = vst.msk [vmem:[#allocation4 + $0x78] sm:$0xff] %vm326, %v2064
      %2097 = vst.msk [vmem:[#allocation4 + $0x88] sm:$0xff] %vm326, %v2065
      %2098 = vst.msk [vmem:[#allocation4 + $0x98] sm:$0xff] %vm326, %v2066
      %2099 = vst.msk [vmem:[#allocation4 + $0xa8] sm:$0xff] %vm326, %v2067
      %2100 = vst.msk [vmem:[#allocation4 + $0xb8] sm:$0xff] %vm326, %v2068
      %2101 = vst.msk [vmem:[#allocation4 + $0xc8] sm:$0xff] %vm326, %v2069
      %2102 = vst.msk [vmem:[#allocation4 + $0xd8] sm:$0xff] %vm326, %v2070
      %2103 = vst.msk [vmem:[#allocation4 + $0xe8] sm:$0xff] %vm326, %v2071
      %2104 = vst.msk [vmem:[#allocation4 + $0xf8] sm:$0xff] %vm326, %v2072
      %2105 = vst.msk [vmem:[#allocation4 + $0x108] sm:$0xff] %vm326, %v2073
      %2106 = vst.msk [vmem:[#allocation4 + $0x118] sm:$0xff] %vm326, %v2074
      %2107 = vst.msk [vmem:[#allocation4 + $0x128] sm:$0xff] %vm326, %v2075
      %2108 = vst.msk [vmem:[#allocation4 + $0x138] sm:$0xff] %vm326, %v2076
      %2109 = vst.msk [vmem:[#allocation4 + $0x148] sm:$0xff] %vm326, %v2077
      %2110 = vst.msk [vmem:[#allocation4 + $0x158] sm:$0xff] %vm326, %v2078
      %2111 = vst.msk [vmem:[#allocation4 + $0x168] sm:$0xff] %vm326, %v2079
      %2112 = vst.msk [vmem:[#allocation4 + $0x178] sm:$0xff] %vm326, %v2080
      %2113 = vst.msk [vmem:[#allocation4 + $0x188] sm:$0xff] %vm326, %v2081
      %2114 = vst.msk [vmem:[#allocation4 + $0x198] sm:$0xff] %vm326, %v2082
      %2115 = vst.msk [vmem:[#allocation4 + $0x1a8] sm:$0xff] %vm326, %v2083
      %2116 = vst.msk [vmem:[#allocation4 + $0x1b8] sm:$0xff] %vm326, %v2084
      %2117 = vst.msk [vmem:[#allocation4 + $0x1c8] sm:$0xff] %vm326, %v2085
      %2118 = vst.msk [vmem:[#allocation4 + $0x1d8] sm:$0xff] %vm326, %v2086
      %2119 = vst.msk [vmem:[#allocation4 + $0x1e8] sm:$0xff] %vm326, %v2087
      %2120 = vst.msk [vmem:[#allocation4 + $0x1f8] sm:$0xff] %vm326, %v2088
      %v2121 = vld [vmem:[#allocation4] sm:$0xff]
      %v2122 = vld [vmem:[#allocation4 + $0x8] sm:$0xff]
      %v2123 = vld [vmem:[#allocation4 + $0x10] sm:$0xff]
      %v2124 = vld [vmem:[#allocation4 + $0x18] sm:$0xff]
      %v2125 = vld [vmem:[#allocation4 + $0x20] sm:$0xff]
      %v2126 = vld [vmem:[#allocation4 + $0x28] sm:$0xff]
      %v2127 = vld [vmem:[#allocation4 + $0x30] sm:$0xff]
      %v2128 = vld [vmem:[#allocation4 + $0x38] sm:$0xff]
      %v2129 = vld [vmem:[#allocation4 + $0x40] sm:$0xff]
      %v2130 = vld [vmem:[#allocation4 + $0x48] sm:$0xff]
      %v2131 = vld [vmem:[#allocation4 + $0x50] sm:$0xff]
      %v2132 = vld [vmem:[#allocation4 + $0x58] sm:$0xff]
      %v2133 = vld [vmem:[#allocation4 + $0x60] sm:$0xff]
      %v2134 = vld [vmem:[#allocation4 + $0x68] sm:$0xff]
      %v2135 = vld [vmem:[#allocation4 + $0x70] sm:$0xff]
      %v2136 = vld [vmem:[#allocation4 + $0x78] sm:$0xff]
      %v2137 = vld [vmem:[#allocation4 + $0x80] sm:$0xff]
      %v2138 = vld [vmem:[#allocation4 + $0x88] sm:$0xff]
      %v2139 = vld [vmem:[#allocation4 + $0x90] sm:$0xff]
      %v2140 = vld [vmem:[#allocation4 + $0x98] sm:$0xff]
      %v2141 = vld [vmem:[#allocation4 + $0xa0] sm:$0xff]
      %v2142 = vld [vmem:[#allocation4 + $0xa8] sm:$0xff]
      %v2143 = vld [vmem:[#allocation4 + $0xb0] sm:$0xff]
      %v2144 = vld [vmem:[#allocation4 + $0xb8] sm:$0xff]
      %v2145 = vld [vmem:[#allocation4 + $0xc0] sm:$0xff]
      %v2146 = vld [vmem:[#allocation4 + $0xc8] sm:$0xff]
      %v2147 = vld [vmem:[#allocation4 + $0xd0] sm:$0xff]
      %v2148 = vld [vmem:[#allocation4 + $0xd8] sm:$0xff]
      %v2149 = vld [vmem:[#allocation4 + $0xe0] sm:$0xff]
      %v2150 = vld [vmem:[#allocation4 + $0xe8] sm:$0xff]
      %v2151 = vld [vmem:[#allocation4 + $0xf0] sm:$0xff]
      %v2152 = vld [vmem:[#allocation4 + $0xf8] sm:$0xff]
      %v2153 = vld [vmem:[#allocation4 + $0x100] sm:$0xff]
      %v2154 = vld [vmem:[#allocation4 + $0x108] sm:$0xff]
      %v2155 = vld [vmem:[#allocation4 + $0x110] sm:$0xff]
      %v2156 = vld [vmem:[#allocation4 + $0x118] sm:$0xff]
      %v2157 = vld [vmem:[#allocation4 + $0x120] sm:$0xff]
      %v2158 = vld [vmem:[#allocation4 + $0x128] sm:$0xff]
      %v2159 = vld [vmem:[#allocation4 + $0x130] sm:$0xff]
      %v2160 = vld [vmem:[#allocation4 + $0x138] sm:$0xff]
      %v2161 = vld [vmem:[#allocation4 + $0x140] sm:$0xff]
      %v2162 = vld [vmem:[#allocation4 + $0x148] sm:$0xff]
      %v2163 = vld [vmem:[#allocation4 + $0x150] sm:$0xff]
      %v2164 = vld [vmem:[#allocation4 + $0x158] sm:$0xff]
      %v2165 = vld [vmem:[#allocation4 + $0x160] sm:$0xff]
      %v2166 = vld [vmem:[#allocation4 + $0x168] sm:$0xff]
      %v2167 = vld [vmem:[#allocation4 + $0x170] sm:$0xff]
      %v2168 = vld [vmem:[#allocation4 + $0x178] sm:$0xff]
      %v2169 = vld [vmem:[#allocation4 + $0x180] sm:$0xff]
      %v2170 = vld [vmem:[#allocation4 + $0x188] sm:$0xff]
      %v2171 = vld [vmem:[#allocation4 + $0x190] sm:$0xff]
      %v2172 = vld [vmem:[#allocation4 + $0x198] sm:$0xff]
      %v2173 = vld [vmem:[#allocation4 + $0x1a0] sm:$0xff]
      %v2174 = vld [vmem:[#allocation4 + $0x1a8] sm:$0xff]
      %v2175 = vld [vmem:[#allocation4 + $0x1b0] sm:$0xff]
      %v2176 = vld [vmem:[#allocation4 + $0x1b8] sm:$0xff]
      %v2177 = vld [vmem:[#allocation4 + $0x1c0] sm:$0xff]
      %v2178 = vld [vmem:[#allocation4 + $0x1c8] sm:$0xff]
      %v2179 = vld [vmem:[#allocation4 + $0x1d0] sm:$0xff]
      %v2180 = vld [vmem:[#allocation4 + $0x1d8] sm:$0xff]
      %v2181 = vld [vmem:[#allocation4 + $0x1e0] sm:$0xff]
      %v2182 = vld [vmem:[#allocation4 + $0x1e8] sm:$0xff]
      %v2183 = vld [vmem:[#allocation4 + $0x1f0] sm:$0xff]
      %v2184 = vld [vmem:[#allocation4 + $0x1f8] sm:$0xff]
      %v2185 = vld [vmem:[%s2] sm:$0xff]
      %v2186 = vld [vmem:[%s2 + $0x8] sm:$0xff]
      %v2187 = vld [vmem:[%s2 + $0x10] sm:$0xff]
      %v2188 = vld [vmem:[%s2 + $0x18] sm:$0xff]
      %v2189 = vld [vmem:[%s2 + $0x20] sm:$0xff]
      %v2190 = vld [vmem:[%s2 + $0x28] sm:$0xff]
      %v2191 = vld [vmem:[%s2 + $0x30] sm:$0xff]
      %v2192 = vld [vmem:[%s2 + $0x38] sm:$0xff]
      %v2193 = vld [vmem:[%s2 + $0x40] sm:$0xff]
      %v2194 = vld [vmem:[%s2 + $0x48] sm:$0xff]
      %v2195 = vld [vmem:[%s2 + $0x50] sm:$0xff]
      %v2196 = vld [vmem:[%s2 + $0x58] sm:$0xff]
      %v2197 = vld [vmem:[%s2 + $0x60] sm:$0xff]
      %v2198 = vld [vmem:[%s2 + $0x68] sm:$0xff]
      %v2199 = vld [vmem:[%s2 + $0x70] sm:$0xff]
      %v2200 = vld [vmem:[%s2 + $0x78] sm:$0xff]
      %v2201 = vld [vmem:[%s2 + $0x80] sm:$0xff]
      %v2202 = vld [vmem:[%s2 + $0x88] sm:$0xff]
      %v2203 = vld [vmem:[%s3] sm:$0x1]
      %v2205 = vperm.slane %v2203, 0
      %v2208 = vsel %vm326, %v2122, 0
      %v2211 = vsel %vm326, %v2124, 0
      %v2214 = vsel %vm326, %v2126, 0
      %v2217 = vsel %vm326, %v2128, 0
      %v2220 = vsel %vm326, %v2130, 0
      %v2223 = vsel %vm326, %v2132, 0
      %v2226 = vsel %vm326, %v2134, 0
      %v2229 = vsel %vm326, %v2136, 0
      %v2232 = vsel %vm326, %v2138, 0
      %v2235 = vsel %vm326, %v2140, 0
      %v2238 = vsel %vm326, %v2142, 0
      %v2241 = vsel %vm326, %v2144, 0
      %v2244 = vsel %vm326, %v2146, 0
      %v2247 = vsel %vm326, %v2148, 0
      %v2250 = vsel %vm326, %v2150, 0
      %v2253 = vsel %vm326, %v2152, 0
      %v2256 = vsel %vm326, %v2154, 0
      %v2259 = vsel %vm326, %v2156, 0
      %v2262 = vsel %vm326, %v2158, 0
      %v2265 = vsel %vm326, %v2160, 0
      %v2268 = vsel %vm326, %v2162, 0
      %v2271 = vsel %vm326, %v2164, 0
      %v2274 = vsel %vm326, %v2166, 0
      %v2277 = vsel %vm326, %v2168, 0
      %v2280 = vsel %vm326, %v2170, 0
      %v2283 = vsel %vm326, %v2172, 0
      %v2286 = vsel %vm326, %v2174, 0
      %v2289 = vsel %vm326, %v2176, 0
      %v2292 = vsel %vm326, %v2178, 0
      %v2295 = vsel %vm326, %v2180, 0
      %v2298 = vsel %vm326, %v2182, 0
      %v2301 = vsel %vm326, %v2184, 0
      %2303 = vmatpush.msra.mxu0 %v2200
      %2304 = vmatpush.msra.mxu0 %v2199
      %2305 = vmatpush.msra.mxu0 %v2198
      %2306 = vmatpush.msra.mxu0 %v2197
      %2307 = vmatpush.msra.mxu0 %v2196
      %2308 = vmatpush.msra.mxu0 %v2195
      %2309 = vmatpush.msra.mxu0 %v2194
      %2310 = vmatpush.msra.mxu0 %v2193
      %2311 = vmatpush.msra.mxu0 %v2192
      %2312 = vmatpush.msra.mxu0 %v2191
      %2313 = vmatpush.msra.mxu0 %v2190
      %2314 = vmatpush.msra.mxu0 %v2189
      %2315 = vmatpush.msra.mxu0 %v2188
      %2316 = vmatpush.msra.mxu0 %v2187
      %2317 = vmatpush.msra.mxu0 %v2186
      %2318 = vmatpush.msra.mxu0 %v2185
      %2319 = vmatmul.f32.gmra.mxu0 %v2121
      %v2320 = vpop.f32.mrf.mxu0
      %v2321 = vadd.f32 %v2205, %v2320
      %2322 = vmatmul.f32.gmra.mxu0 %v2123
      %v2323 = vpop.f32.mrf.mxu0
      %v2324 = vadd.f32 %v2205, %v2323
      %2325 = vmatmul.f32.gmra.mxu0 %v2125
      %v2326 = vpop.f32.mrf.mxu0
      %v2327 = vadd.f32 %v2205, %v2326
      %2328 = vmatmul.f32.gmra.mxu0 %v2127
      %v2329 = vpop.f32.mrf.mxu0
      %v2330 = vadd.f32 %v2205, %v2329
      %2331 = vmatmul.f32.gmra.mxu0 %v2129
      %v2332 = vpop.f32.mrf.mxu0
      %v2333 = vadd.f32 %v2205, %v2332
      %2334 = vmatmul.f32.gmra.mxu0 %v2131
      %v2335 = vpop.f32.mrf.mxu0
      %v2336 = vadd.f32 %v2205, %v2335
      %2337 = vmatmul.f32.gmra.mxu0 %v2133
      %v2338 = vpop.f32.mrf.mxu0
      %v2339 = vadd.f32 %v2205, %v2338
      %2340 = vmatmul.f32.gmra.mxu0 %v2135
      %v2341 = vpop.f32.mrf.mxu0
      %v2342 = vadd.f32 %v2205, %v2341
      %2343 = vmatmul.f32.gmra.mxu0 %v2137
      %v2344 = vpop.f32.mrf.mxu0
      %v2345 = vadd.f32 %v2205, %v2344
      %2346 = vmatmul.f32.gmra.mxu0 %v2139
      %v2347 = vpop.f32.mrf.mxu0
      %v2348 = vadd.f32 %v2205, %v2347
      %2349 = vmatmul.f32.gmra.mxu0 %v2141
      %v2350 = vpop.f32.mrf.mxu0
      %v2351 = vadd.f32 %v2205, %v2350
      %2352 = vmatmul.f32.gmra.mxu0 %v2143
      %v2353 = vpop.f32.mrf.mxu0
      %v2354 = vadd.f32 %v2205, %v2353
      %2355 = vmatmul.f32.gmra.mxu0 %v2145
      %v2356 = vpop.f32.mrf.mxu0
      %v2357 = vadd.f32 %v2205, %v2356
      %2358 = vmatmul.f32.gmra.mxu0 %v2147
      %v2359 = vpop.f32.mrf.mxu0
      %v2360 = vadd.f32 %v2205, %v2359
      %2361 = vmatmul.f32.gmra.mxu0 %v2149
      %v2362 = vpop.f32.mrf.mxu0
      %v2363 = vadd.f32 %v2205, %v2362
      %2364 = vmatmul.f32.gmra.mxu0 %v2151
      %v2365 = vpop.f32.mrf.mxu0
      %v2366 = vadd.f32 %v2205, %v2365
      %2367 = vmatmul.f32.gmra.mxu0 %v2153
      %v2368 = vpop.f32.mrf.mxu0
      %v2369 = vadd.f32 %v2205, %v2368
      %2370 = vmatmul.f32.gmra.mxu0 %v2155
      %v2371 = vpop.f32.mrf.mxu0
      %v2372 = vadd.f32 %v2205, %v2371
      %2373 = vmatmul.f32.gmra.mxu0 %v2157
      %v2374 = vpop.f32.mrf.mxu0
      %v2375 = vadd.f32 %v2205, %v2374
      %2376 = vmatmul.f32.gmra.mxu0 %v2159
      %v2377 = vpop.f32.mrf.mxu0
      %v2378 = vadd.f32 %v2205, %v2377
      %2379 = vmatmul.f32.gmra.mxu0 %v2161
      %v2380 = vpop.f32.mrf.mxu0
      %v2381 = vadd.f32 %v2205, %v2380
      %2382 = vmatmul.f32.gmra.mxu0 %v2163
      %v2383 = vpop.f32.mrf.mxu0
      %v2384 = vadd.f32 %v2205, %v2383
      %2385 = vmatmul.f32.gmra.mxu0 %v2165
      %v2386 = vpop.f32.mrf.mxu0
      %v2387 = vadd.f32 %v2205, %v2386
      %2388 = vmatmul.f32.gmra.mxu0 %v2167
      %v2389 = vpop.f32.mrf.mxu0
      %v2390 = vadd.f32 %v2205, %v2389
      %2391 = vmatmul.f32.gmra.mxu0 %v2169
      %v2392 = vpop.f32.mrf.mxu0
      %v2393 = vadd.f32 %v2205, %v2392
      %2394 = vmatmul.f32.gmra.mxu0 %v2171
      %v2395 = vpop.f32.mrf.mxu0
      %v2396 = vadd.f32 %v2205, %v2395
      %2397 = vmatmul.f32.gmra.mxu0 %v2173
      %v2398 = vpop.f32.mrf.mxu0
      %v2399 = vadd.f32 %v2205, %v2398
      %2400 = vmatmul.f32.gmra.mxu0 %v2175
      %v2401 = vpop.f32.mrf.mxu0
      %v2402 = vadd.f32 %v2205, %v2401
      %2403 = vmatmul.f32.gmra.mxu0 %v2177
      %v2404 = vpop.f32.mrf.mxu0
      %v2405 = vadd.f32 %v2205, %v2404
      %2406 = vmatmul.f32.gmra.mxu0 %v2179
      %v2407 = vpop.f32.mrf.mxu0
      %v2408 = vadd.f32 %v2205, %v2407
      %2409 = vmatmul.f32.gmra.mxu0 %v2181
      %v2410 = vpop.f32.mrf.mxu0
      %v2411 = vadd.f32 %v2205, %v2410
      %2412 = vmatmul.f32.gmra.mxu0 %v2183
      %v2413 = vpop.f32.mrf.mxu0
      %v2414 = vadd.f32 %v2205, %v2413
      %2415 = vdwg.mxu0
      %2416 = vmatpush.msra.mxu0 0.0
      %2417 = vmatpush.msra.mxu0 0.0
      %2418 = vmatpush.msra.mxu0 0.0
      %2419 = vmatpush.msra.mxu0 0.0
      %2420 = vmatpush.msra.mxu0 0.0
      %2421 = vmatpush.msra.mxu0 0.0
      %2422 = vmatpush.msra.mxu0 0.0
      %2423 = vmatpush.msra.mxu0 0.0
      %2424 = vmatpush.msra.mxu0 0.0
      %2425 = vmatpush.msra.mxu0 0.0
      %2426 = vmatpush.msra.mxu0 0.0
      %2427 = vmatpush.msra.mxu0 0.0
      %2428 = vmatpush.msra.mxu0 0.0
      %2429 = vmatpush.msra.mxu0 0.0
      %2430 = vmatpush.msra.mxu0 %v2202
      %2431 = vmatpush.msra.mxu0 %v2201
      %2432 = vmatmul.f32.gmra.mxu0 %v2208
      %v2433 = vpop.f32.mrf.mxu0
      %v2434 = vadd.f32 %v2321, %v2433
      %2435 = vmatmul.f32.gmra.mxu0 %v2211
      %v2436 = vpop.f32.mrf.mxu0
      %v2437 = vadd.f32 %v2324, %v2436
      %2438 = vmatmul.f32.gmra.mxu0 %v2214
      %v2439 = vpop.f32.mrf.mxu0
      %v2440 = vadd.f32 %v2327, %v2439
      %2441 = vmatmul.f32.gmra.mxu0 %v2217
      %v2442 = vpop.f32.mrf.mxu0
      %v2443 = vadd.f32 %v2330, %v2442
      %2444 = vmatmul.f32.gmra.mxu0 %v2220
      %v2445 = vpop.f32.mrf.mxu0
      %v2446 = vadd.f32 %v2333, %v2445
      %2447 = vmatmul.f32.gmra.mxu0 %v2223
      %v2448 = vpop.f32.mrf.mxu0
      %v2449 = vadd.f32 %v2336, %v2448
      %2450 = vmatmul.f32.gmra.mxu0 %v2226
      %v2451 = vpop.f32.mrf.mxu0
      %v2452 = vadd.f32 %v2339, %v2451
      %2453 = vmatmul.f32.gmra.mxu0 %v2229
      %v2454 = vpop.f32.mrf.mxu0
      %v2455 = vadd.f32 %v2342, %v2454
      %2456 = vmatmul.f32.gmra.mxu0 %v2232
      %v2457 = vpop.f32.mrf.mxu0
      %v2458 = vadd.f32 %v2345, %v2457
      %2459 = vmatmul.f32.gmra.mxu0 %v2235
      %v2460 = vpop.f32.mrf.mxu0
      %v2461 = vadd.f32 %v2348, %v2460
      %2462 = vmatmul.f32.gmra.mxu0 %v2238
      %v2463 = vpop.f32.mrf.mxu0
      %v2464 = vadd.f32 %v2351, %v2463
      %2465 = vmatmul.f32.gmra.mxu0 %v2241
      %v2466 = vpop.f32.mrf.mxu0
      %v2467 = vadd.f32 %v2354, %v2466
      %2468 = vmatmul.f32.gmra.mxu0 %v2244
      %v2469 = vpop.f32.mrf.mxu0
      %v2470 = vadd.f32 %v2357, %v2469
      %2471 = vmatmul.f32.gmra.mxu0 %v2247
      %v2472 = vpop.f32.mrf.mxu0
      %v2473 = vadd.f32 %v2360, %v2472
      %2474 = vmatmul.f32.gmra.mxu0 %v2250
      %v2475 = vpop.f32.mrf.mxu0
      %v2476 = vadd.f32 %v2363, %v2475
      %2477 = vmatmul.f32.gmra.mxu0 %v2253
      %v2478 = vpop.f32.mrf.mxu0
      %v2479 = vadd.f32 %v2366, %v2478
      %2480 = vmatmul.f32.gmra.mxu0 %v2256
      %v2481 = vpop.f32.mrf.mxu0
      %v2482 = vadd.f32 %v2369, %v2481
      %2483 = vmatmul.f32.gmra.mxu0 %v2259
      %v2484 = vpop.f32.mrf.mxu0
      %v2485 = vadd.f32 %v2372, %v2484
      %2486 = vmatmul.f32.gmra.mxu0 %v2262
      %v2487 = vpop.f32.mrf.mxu0
      %v2488 = vadd.f32 %v2375, %v2487
      %2489 = vmatmul.f32.gmra.mxu0 %v2265
      %v2490 = vpop.f32.mrf.mxu0
      %v2491 = vadd.f32 %v2378, %v2490
      %2492 = vmatmul.f32.gmra.mxu0 %v2268
      %v2493 = vpop.f32.mrf.mxu0
      %v2494 = vadd.f32 %v2381, %v2493
      %2495 = vmatmul.f32.gmra.mxu0 %v2271
      %v2496 = vpop.f32.mrf.mxu0
      %v2497 = vadd.f32 %v2384, %v2496
      %2498 = vmatmul.f32.gmra.mxu0 %v2274
      %v2499 = vpop.f32.mrf.mxu0
      %v2500 = vadd.f32 %v2387, %v2499
      %2501 = vmatmul.f32.gmra.mxu0 %v2277
      %v2502 = vpop.f32.mrf.mxu0
      %v2503 = vadd.f32 %v2390, %v2502
      %2504 = vmatmul.f32.gmra.mxu0 %v2280
      %v2505 = vpop.f32.mrf.mxu0
      %v2506 = vadd.f32 %v2393, %v2505
      %2507 = vmatmul.f32.gmra.mxu0 %v2283
      %v2508 = vpop.f32.mrf.mxu0
      %v2509 = vadd.f32 %v2396, %v2508
      %2510 = vmatmul.f32.gmra.mxu0 %v2286
      %v2511 = vpop.f32.mrf.mxu0
      %v2512 = vadd.f32 %v2399, %v2511
      %2513 = vmatmul.f32.gmra.mxu0 %v2289
      %v2514 = vpop.f32.mrf.mxu0
      %v2515 = vadd.f32 %v2402, %v2514
      %2516 = vmatmul.f32.gmra.mxu0 %v2292
      %v2517 = vpop.f32.mrf.mxu0
      %v2518 = vadd.f32 %v2405, %v2517
      %2519 = vmatmul.f32.gmra.mxu0 %v2295
      %v2520 = vpop.f32.mrf.mxu0
      %v2521 = vadd.f32 %v2408, %v2520
      %2522 = vmatmul.f32.gmra.mxu0 %v2298
      %v2523 = vpop.f32.mrf.mxu0
      %v2524 = vadd.f32 %v2411, %v2523
      %2525 = vmatmul.f32.gmra.mxu0 %v2301
      %v2526 = vpop.f32.mrf.mxu0
      %v2527 = vadd.f32 %v2414, %v2526
      %2528 = vdwg.mxu0
      %v2529 = vmax.f32 %v2434, 0.0
      %v2530 = vmax.f32 %v2437, 0.0
      %v2531 = vmax.f32 %v2440, 0.0
      %v2532 = vmax.f32 %v2443, 0.0
      %v2533 = vmax.f32 %v2446, 0.0
      %v2534 = vmax.f32 %v2449, 0.0
      %v2535 = vmax.f32 %v2452, 0.0
      %v2536 = vmax.f32 %v2455, 0.0
      %v2537 = vmax.f32 %v2458, 0.0
      %v2538 = vmax.f32 %v2461, 0.0
      %v2539 = vmax.f32 %v2464, 0.0
      %v2540 = vmax.f32 %v2467, 0.0
      %v2541 = vmax.f32 %v2470, 0.0
      %v2542 = vmax.f32 %v2473, 0.0
      %v2543 = vmax.f32 %v2476, 0.0
      %v2544 = vmax.f32 %v2479, 0.0
      %v2545 = vmax.f32 %v2482, 0.0
      %v2546 = vmax.f32 %v2485, 0.0
      %v2547 = vmax.f32 %v2488, 0.0
      %v2548 = vmax.f32 %v2491, 0.0
      %v2549 = vmax.f32 %v2494, 0.0
      %v2550 = vmax.f32 %v2497, 0.0
      %v2551 = vmax.f32 %v2500, 0.0
      %v2552 = vmax.f32 %v2503, 0.0
      %v2553 = vmax.f32 %v2506, 0.0
      %v2554 = vmax.f32 %v2509, 0.0
      %v2555 = vmax.f32 %v2512, 0.0
      %v2556 = vmax.f32 %v2515, 0.0
      %v2557 = vmax.f32 %v2518, 0.0
      %v2558 = vmax.f32 %v2521, 0.0
      %v2559 = vmax.f32 %v2524, 0.0
      %v2560 = vmax.f32 %v2527, 0.0
      %2561 = vst.msk [vmem:[#allocation3] sm:$0xff] %vm415, 0.0
      %2562 = vst.msk [vmem:[#allocation3 + $0x8] sm:$0xff] %vm415, 0.0
      %vm2563 = vcmask 58368
      %2564 = vst.msk [vmem:[#allocation3 + $0x10] sm:$0x3] %vm2563, 0.0
      %2565 = vst.msk [vmem:[#allocation3 + $0x18] sm:$0xff] %vm415, 0.0
      %2566 = vst.msk [vmem:[#allocation3 + $0x20] sm:$0xff] %vm415, 0.0
      %2567 = vst.msk [vmem:[#allocation3 + $0x28] sm:$0x3] %vm2563, 0.0
      %2568 = vst.msk [vmem:[#allocation3 + $0x30] sm:$0xff] %vm415, 0.0
      %2569 = vst.msk [vmem:[#allocation3 + $0x38] sm:$0xff] %vm415, 0.0
      %2570 = vst.msk [vmem:[#allocation3 + $0x40] sm:$0x3] %vm2563, 0.0
      %2571 = vst.msk [vmem:[#allocation3 + $0x48] sm:$0xff] %vm415, 0.0
      %2572 = vst.msk [vmem:[#allocation3 + $0x50] sm:$0xff] %vm415, 0.0
      %2573 = vst.msk [vmem:[#allocation3 + $0x58] sm:$0x3] %vm2563, 0.0
      %2574 = vst.msk [vmem:[#allocation3 + $0x60] sm:$0xff] %vm415, 0.0
      %2575 = vst.msk [vmem:[#allocation3 + $0x68] sm:$0xff] %vm415, 0.0
      %2576 = vst.msk [vmem:[#allocation3 + $0x70] sm:$0x3] %vm2563, 0.0
      %2577 = vst.msk [vmem:[#allocation3 + $0x78] sm:$0xff] %vm415, 0.0
      %2578 = vst.msk [vmem:[#allocation3 + $0x80] sm:$0xff] %vm415, 0.0
      %2579 = vst.msk [vmem:[#allocation3 + $0x88] sm:$0x3] %vm2563, 0.0
      %2580 = vst.msk [vmem:[#allocation3 + $0x90] sm:$0xff] %vm415, 0.0
      %2581 = vst.msk [vmem:[#allocation3 + $0x98] sm:$0xff] %vm415, 0.0
      %2582 = vst.msk [vmem:[#allocation3 + $0xa0] sm:$0x3] %vm2563, 0.0
      %2583 = vst.msk [vmem:[#allocation3 + $0xa8] sm:$0xff] %vm415, 0.0
      %2584 = vst.msk [vmem:[#allocation3 + $0xb0] sm:$0xff] %vm415, 0.0
      %2585 = vst.msk [vmem:[#allocation3 + $0xb8] sm:$0x3] %vm2563, 0.0
      %2586 = vst.msk [vmem:[#allocation3 + $0xc0] sm:$0xff] %vm415, 0.0
      %2587 = vst.msk [vmem:[#allocation3 + $0xc8] sm:$0xff] %vm415, 0.0
      %2588 = vst.msk [vmem:[#allocation3 + $0xd0] sm:$0x3] %vm2563, 0.0
      %2589 = vst.msk [vmem:[#allocation3 + $0xd8] sm:$0xff] %vm415, 0.0
      %2590 = vst.msk [vmem:[#allocation3 + $0xe0] sm:$0xff] %vm415, 0.0
      %2591 = vst.msk [vmem:[#allocation3 + $0xe8] sm:$0x3] %vm2563, 0.0
      %2592 = vst.msk [vmem:[#allocation3 + $0xf0] sm:$0xff] %vm415, 0.0
      %2593 = vst.msk [vmem:[#allocation3 + $0xf8] sm:$0xff] %vm415, 0.0
      %2594 = vst.msk [vmem:[#allocation3 + $0x100] sm:$0x3] %vm2563, 0.0
      %2595 = vst.msk [vmem:[#allocation3 + $0x108] sm:$0xff] %vm415, 0.0
      %2596 = vst.msk [vmem:[#allocation3 + $0x110] sm:$0xff] %vm415, 0.0
      %2597 = vst.msk [vmem:[#allocation3 + $0x118] sm:$0x3] %vm2563, 0.0
      %2598 = vst.msk [vmem:[#allocation3 + $0x120] sm:$0xff] %vm415, 0.0
      %2599 = vst.msk [vmem:[#allocation3 + $0x128] sm:$0xff] %vm415, 0.0
      %2600 = vst.msk [vmem:[#allocation3 + $0x130] sm:$0x3] %vm2563, 0.0
      %2601 = vst.msk [vmem:[#allocation3 + $0x138] sm:$0xff] %vm415, 0.0
      %2602 = vst.msk [vmem:[#allocation3 + $0x140] sm:$0xff] %vm415, 0.0
      %2603 = vst.msk [vmem:[#allocation3 + $0x148] sm:$0x3] %vm2563, 0.0
      %2604 = vst.msk [vmem:[#allocation3 + $0x150] sm:$0xff] %vm415, 0.0
      %2605 = vst.msk [vmem:[#allocation3 + $0x158] sm:$0xff] %vm415, 0.0
      %2606 = vst.msk [vmem:[#allocation3 + $0x160] sm:$0x3] %vm2563, 0.0
      %2607 = vst.msk [vmem:[#allocation3 + $0x168] sm:$0xff] %vm415, 0.0
      %2608 = vst.msk [vmem:[#allocation3 + $0x170] sm:$0xff] %vm415, 0.0
      %2609 = vst.msk [vmem:[#allocation3 + $0x178] sm:$0x3] %vm2563, 0.0
      %2610 = vst.msk [vmem:[#allocation3 + $0x180] sm:$0xff] %vm415, 0.0
      %2611 = vst.msk [vmem:[#allocation3 + $0x188] sm:$0xff] %vm415, 0.0
      %2612 = vst.msk [vmem:[#allocation3 + $0x190] sm:$0x3] %vm2563, 0.0
      %2613 = vst.msk [vmem:[#allocation3 + $0x198] sm:$0xff] %vm415, 0.0
      %2614 = vst.msk [vmem:[#allocation3 + $0x1a0] sm:$0xff] %vm415, 0.0
      %2615 = vst.msk [vmem:[#allocation3 + $0x1a8] sm:$0x3] %vm2563, 0.0
      %s2616 = scalar_lea.vmem [#allocation3], 24
      %2617 = vst.msk [vmem:[%s2616 + $0x1] sm:$0xff] %vm415, %v2529
      %2618 = vst.msk [vmem:[%s2616 + $0x9] sm:$0xff] %vm415, %v2530
      %2619 = vst.msk [vmem:[%s2616 + $0x19] sm:$0xff] %vm415, %v2531
      %2620 = vst.msk [vmem:[%s2616 + $0x21] sm:$0xff] %vm415, %v2532
      %2621 = vst.msk [vmem:[%s2616 + $0x31] sm:$0xff] %vm415, %v2533
      %2622 = vst.msk [vmem:[%s2616 + $0x39] sm:$0xff] %vm415, %v2534
      %2623 = vst.msk [vmem:[%s2616 + $0x49] sm:$0xff] %vm415, %v2535
      %2624 = vst.msk [vmem:[%s2616 + $0x51] sm:$0xff] %vm415, %v2536
      %2625 = vst.msk [vmem:[%s2616 + $0x61] sm:$0xff] %vm415, %v2537
      %2626 = vst.msk [vmem:[%s2616 + $0x69] sm:$0xff] %vm415, %v2538
      %2627 = vst.msk [vmem:[%s2616 + $0x79] sm:$0xff] %vm415, %v2539
      %2628 = vst.msk [vmem:[%s2616 + $0x81] sm:$0xff] %vm415, %v2540
      %2629 = vst.msk [vmem:[%s2616 + $0x91] sm:$0xff] %vm415, %v2541
      %2630 = vst.msk [vmem:[%s2616 + $0x99] sm:$0xff] %vm415, %v2542
      %2631 = vst.msk [vmem:[%s2616 + $0xa9] sm:$0xff] %vm415, %v2543
      %2632 = vst.msk [vmem:[%s2616 + $0xb1] sm:$0xff] %vm415, %v2544
      %2633 = vst.msk [vmem:[%s2616 + $0xc1] sm:$0xff] %vm415, %v2545
      %2634 = vst.msk [vmem:[%s2616 + $0xc9] sm:$0xff] %vm415, %v2546
      %2635 = vst.msk [vmem:[%s2616 + $0xd9] sm:$0xff] %vm415, %v2547
      %2636 = vst.msk [vmem:[%s2616 + $0xe1] sm:$0xff] %vm415, %v2548
      %2637 = vst.msk [vmem:[%s2616 + $0xf1] sm:$0xff] %vm415, %v2549
      %2638 = vst.msk [vmem:[%s2616 + $0xf9] sm:$0xff] %vm415, %v2550
      %2639 = vst.msk [vmem:[%s2616 + $0x109] sm:$0xff] %vm415, %v2551
      %2640 = vst.msk [vmem:[%s2616 + $0x111] sm:$0xff] %vm415, %v2552
      %2641 = vst.msk [vmem:[%s2616 + $0x121] sm:$0xff] %vm415, %v2553
      %2642 = vst.msk [vmem:[%s2616 + $0x129] sm:$0xff] %vm415, %v2554
      %2643 = vst.msk [vmem:[%s2616 + $0x139] sm:$0xff] %vm415, %v2555
      %2644 = vst.msk [vmem:[%s2616 + $0x141] sm:$0xff] %vm415, %v2556
      %2645 = vst.msk [vmem:[%s2616 + $0x151] sm:$0xff] %vm415, %v2557
      %2646 = vst.msk [vmem:[%s2616 + $0x159] sm:$0xff] %vm415, %v2558
      %2647 = vst.msk [vmem:[%s2616 + $0x169] sm:$0xff] %vm415, %v2559
      %2648 = vst.msk [vmem:[%s2616 + $0x171] sm:$0xff] %vm415, %v2560
      %v2649 = vld [vmem:[#allocation3] sm:$0xff]
      %v2650 = vld [vmem:[#allocation3 + $0x8] sm:$0xff]
      %v2651 = vld [vmem:[#allocation3 + $0x18] sm:$0xff]
      %v2652 = vld [vmem:[#allocation3 + $0x20] sm:$0xff]
      %v2653 = vld [vmem:[#allocation3 + $0x30] sm:$0xff]
      %v2654 = vld [vmem:[#allocation3 + $0x38] sm:$0xff]
      %v2655 = vld [vmem:[#allocation3 + $0x48] sm:$0xff]
      %v2656 = vld [vmem:[#allocation3 + $0x50] sm:$0xff]
      %v2657 = vld [vmem:[#allocation3 + $0x60] sm:$0xff]
      %v2658 = vld [vmem:[#allocation3 + $0x68] sm:$0xff]
      %v2659 = vld [vmem:[#allocation3 + $0x78] sm:$0xff]
      %v2660 = vld [vmem:[#allocation3 + $0x80] sm:$0xff]
      %v2661 = vld [vmem:[#allocation3 + $0x90] sm:$0xff]
      %v2662 = vld [vmem:[#allocation3 + $0x98] sm:$0xff]
      %v2663 = vld [vmem:[#allocation3 + $0xa8] sm:$0xff]
      %v2664 = vld [vmem:[#allocation3 + $0xb0] sm:$0xff]
      %v2665 = vld [vmem:[#allocation3 + $0xc0] sm:$0xff]
      %v2666 = vld [vmem:[#allocation3 + $0xc8] sm:$0xff]
      %v2667 = vld [vmem:[#allocation3 + $0xd8] sm:$0xff]
      %v2668 = vld [vmem:[#allocation3 + $0xe0] sm:$0xff]
      %v2669 = vld [vmem:[#allocation3 + $0xf0] sm:$0xff]
      %v2670 = vld [vmem:[#allocation3 + $0xf8] sm:$0xff]
      %v2671 = vld [vmem:[#allocation3 + $0x108] sm:$0xff]
      %v2672 = vld [vmem:[#allocation3 + $0x110] sm:$0xff]
      %v2673 = vld [vmem:[#allocation3 + $0x120] sm:$0xff]
      %v2674 = vld [vmem:[#allocation3 + $0x128] sm:$0xff]
      %v2675 = vld [vmem:[#allocation3 + $0x138] sm:$0xff]
      %v2676 = vld [vmem:[#allocation3 + $0x140] sm:$0xff]
      %v2677 = vld [vmem:[#allocation3 + $0x150] sm:$0xff]
      %v2678 = vld [vmem:[#allocation3 + $0x158] sm:$0xff]
      %v2679 = vld [vmem:[#allocation3 + $0x168] sm:$0xff]
      %v2680 = vld [vmem:[#allocation3 + $0x170] sm:$0xff]
      %2681 = vst.msk [vmem:[#allocation4] sm:$0xff] %vm415, %v2649
      %2682 = vst.msk [vmem:[#allocation4 + $0x10] sm:$0xff] %vm415, %v2650
      %2683 = vst.msk [vmem:[#allocation4 + $0x20] sm:$0xff] %vm415, %v2651
      %2684 = vst.msk [vmem:[#allocation4 + $0x30] sm:$0xff] %vm415, %v2652
      %2685 = vst.msk [vmem:[#allocation4 + $0x40] sm:$0xff] %vm415, %v2653
      %2686 = vst.msk [vmem:[#allocation4 + $0x50] sm:$0xff] %vm415, %v2654
      %2687 = vst.msk [vmem:[#allocation4 + $0x60] sm:$0xff] %vm415, %v2655
      %2688 = vst.msk [vmem:[#allocation4 + $0x70] sm:$0xff] %vm415, %v2656
      %2689 = vst.msk [vmem:[#allocation4 + $0x80] sm:$0xff] %vm415, %v2657
      %2690 = vst.msk [vmem:[#allocation4 + $0x90] sm:$0xff] %vm415, %v2658
      %2691 = vst.msk [vmem:[#allocation4 + $0xa0] sm:$0xff] %vm415, %v2659
      %2692 = vst.msk [vmem:[#allocation4 + $0xb0] sm:$0xff] %vm415, %v2660
      %2693 = vst.msk [vmem:[#allocation4 + $0xc0] sm:$0xff] %vm415, %v2661
      %2694 = vst.msk [vmem:[#allocation4 + $0xd0] sm:$0xff] %vm415, %v2662
      %2695 = vst.msk [vmem:[#allocation4 + $0xe0] sm:$0xff] %vm415, %v2663
      %2696 = vst.msk [vmem:[#allocation4 + $0xf0] sm:$0xff] %vm415, %v2664
      %2697 = vst.msk [vmem:[#allocation4 + $0x100] sm:$0xff] %vm415, %v2665
      %2698 = vst.msk [vmem:[#allocation4 + $0x110] sm:$0xff] %vm415, %v2666
      %2699 = vst.msk [vmem:[#allocation4 + $0x120] sm:$0xff] %vm415, %v2667
      %2700 = vst.msk [vmem:[#allocation4 + $0x130] sm:$0xff] %vm415, %v2668
      %2701 = vst.msk [vmem:[#allocation4 + $0x140] sm:$0xff] %vm415, %v2669
      %2702 = vst.msk [vmem:[#allocation4 + $0x150] sm:$0xff] %vm415, %v2670
      %2703 = vst.msk [vmem:[#allocation4 + $0x160] sm:$0xff] %vm415, %v2671
      %2704 = vst.msk [vmem:[#allocation4 + $0x170] sm:$0xff] %vm415, %v2672
      %2705 = vst.msk [vmem:[#allocation4 + $0x180] sm:$0xff] %vm415, %v2673
      %2706 = vst.msk [vmem:[#allocation4 + $0x190] sm:$0xff] %vm415, %v2674
      %2707 = vst.msk [vmem:[#allocation4 + $0x1a0] sm:$0xff] %vm415, %v2675
      %2708 = vst.msk [vmem:[#allocation4 + $0x1b0] sm:$0xff] %vm415, %v2676
      %2709 = vst.msk [vmem:[#allocation4 + $0x1c0] sm:$0xff] %vm415, %v2677
      %2710 = vst.msk [vmem:[#allocation4 + $0x1d0] sm:$0xff] %vm415, %v2678
      %2711 = vst.msk [vmem:[#allocation4 + $0x1e0] sm:$0xff] %vm415, %v2679
      %2712 = vst.msk [vmem:[#allocation4 + $0x1f0] sm:$0xff] %vm415, %v2680
      %v2713 = vld [vmem:[#allocation3 + $0x1] sm:$0xff]
      %v2714 = vld [vmem:[#allocation3 + $0x9] sm:$0xff]
      %v2715 = vld [vmem:[#allocation3 + $0x19] sm:$0xff]
      %v2716 = vld [vmem:[#allocation3 + $0x21] sm:$0xff]
      %v2717 = vld [vmem:[#allocation3 + $0x31] sm:$0xff]
      %v2718 = vld [vmem:[#allocation3 + $0x39] sm:$0xff]
      %v2719 = vld [vmem:[#allocation3 + $0x49] sm:$0xff]
      %v2720 = vld [vmem:[#allocation3 + $0x51] sm:$0xff]
      %v2721 = vld [vmem:[#allocation3 + $0x61] sm:$0xff]
      %v2722 = vld [vmem:[#allocation3 + $0x69] sm:$0xff]
      %v2723 = vld [vmem:[#allocation3 + $0x79] sm:$0xff]
      %v2724 = vld [vmem:[#allocation3 + $0x81] sm:$0xff]
      %v2725 = vld [vmem:[#allocation3 + $0x91] sm:$0xff]
      %v2726 = vld [vmem:[#allocation3 + $0x99] sm:$0xff]
      %v2727 = vld [vmem:[#allocation3 + $0xa9] sm:$0xff]
      %v2728 = vld [vmem:[#allocation3 + $0xb1] sm:$0xff]
      %v2729 = vld [vmem:[#allocation3 + $0xc1] sm:$0xff]
      %v2730 = vld [vmem:[#allocation3 + $0xc9] sm:$0xff]
      %v2731 = vld [vmem:[#allocation3 + $0xd9] sm:$0xff]
      %v2732 = vld [vmem:[#allocation3 + $0xe1] sm:$0xff]
      %v2733 = vld [vmem:[#allocation3 + $0xf1] sm:$0xff]
      %v2734 = vld [vmem:[#allocation3 + $0xf9] sm:$0xff]
      %v2735 = vld [vmem:[#allocation3 + $0x109] sm:$0xff]
      %v2736 = vld [vmem:[#allocation3 + $0x111] sm:$0xff]
      %v2737 = vld [vmem:[#allocation3 + $0x121] sm:$0xff]
      %v2738 = vld [vmem:[#allocation3 + $0x129] sm:$0xff]
      %v2739 = vld [vmem:[#allocation3 + $0x139] sm:$0xff]
      %v2740 = vld [vmem:[#allocation3 + $0x141] sm:$0xff]
      %v2741 = vld [vmem:[#allocation3 + $0x151] sm:$0xff]
      %v2742 = vld [vmem:[#allocation3 + $0x159] sm:$0xff]
      %v2743 = vld [vmem:[#allocation3 + $0x169] sm:$0xff]
      %v2744 = vld [vmem:[#allocation3 + $0x171] sm:$0xff]
      %2777 = vrot.lane.b32.xlu0 %v2713, 8
      %v2778 = vpop.permute.xlu0 %2777
      %2779 = vrot.lane.b32.xlu0 %v2714, 8
      %v2780 = vpop.permute.xlu0 %2779
      %2781 = vrot.lane.b32.xlu0 %v2715, 8
      %v2782 = vpop.permute.xlu0 %2781
      %2783 = vrot.lane.b32.xlu0 %v2716, 8
      %v2784 = vpop.permute.xlu0 %2783
      %2785 = vrot.lane.b32.xlu0 %v2717, 8
      %v2786 = vpop.permute.xlu0 %2785
      %2787 = vrot.lane.b32.xlu0 %v2718, 8
      %v2788 = vpop.permute.xlu0 %2787
      %2789 = vrot.lane.b32.xlu0 %v2719, 8
      %v2790 = vpop.permute.xlu0 %2789
      %2791 = vrot.lane.b32.xlu0 %v2720, 8
      %v2792 = vpop.permute.xlu0 %2791
      %2793 = vrot.lane.b32.xlu0 %v2721, 8
      %v2794 = vpop.permute.xlu0 %2793
      %2795 = vrot.lane.b32.xlu0 %v2722, 8
      %v2796 = vpop.permute.xlu0 %2795
      %2797 = vrot.lane.b32.xlu0 %v2723, 8
      %v2798 = vpop.permute.xlu0 %2797
      %2799 = vrot.lane.b32.xlu0 %v2724, 8
      %v2800 = vpop.permute.xlu0 %2799
      %2801 = vrot.lane.b32.xlu0 %v2725, 8
      %v2802 = vpop.permute.xlu0 %2801
      %2803 = vrot.lane.b32.xlu0 %v2726, 8
      %v2804 = vpop.permute.xlu0 %2803
      %2805 = vrot.lane.b32.xlu0 %v2727, 8
      %v2806 = vpop.permute.xlu0 %2805
      %2807 = vrot.lane.b32.xlu0 %v2728, 8
      %v2808 = vpop.permute.xlu0 %2807
      %2809 = vrot.lane.b32.xlu0 %v2729, 8
      %v2810 = vpop.permute.xlu0 %2809
      %2811 = vrot.lane.b32.xlu0 %v2730, 8
      %v2812 = vpop.permute.xlu0 %2811
      %2813 = vrot.lane.b32.xlu0 %v2731, 8
      %v2814 = vpop.permute.xlu0 %2813
      %2815 = vrot.lane.b32.xlu0 %v2732, 8
      %v2816 = vpop.permute.xlu0 %2815
      %2817 = vrot.lane.b32.xlu0 %v2733, 8
      %v2818 = vpop.permute.xlu0 %2817
      %2819 = vrot.lane.b32.xlu0 %v2734, 8
      %v2820 = vpop.permute.xlu0 %2819
      %2821 = vrot.lane.b32.xlu0 %v2735, 8
      %v2822 = vpop.permute.xlu0 %2821
      %2823 = vrot.lane.b32.xlu0 %v2736, 8
      %v2824 = vpop.permute.xlu0 %2823
      %2825 = vrot.lane.b32.xlu0 %v2737, 8
      %v2826 = vpop.permute.xlu0 %2825
      %2827 = vrot.lane.b32.xlu0 %v2738, 8
      %v2828 = vpop.permute.xlu0 %2827
      %2829 = vrot.lane.b32.xlu0 %v2739, 8
      %v2830 = vpop.permute.xlu0 %2829
      %2831 = vrot.lane.b32.xlu0 %v2740, 8
      %v2832 = vpop.permute.xlu0 %2831
      %2833 = vrot.lane.b32.xlu0 %v2741, 8
      %v2834 = vpop.permute.xlu0 %2833
      %2835 = vrot.lane.b32.xlu0 %v2742, 8
      %v2836 = vpop.permute.xlu0 %2835
      %2837 = vrot.lane.b32.xlu0 %v2743, 8
      %v2838 = vpop.permute.xlu0 %2837
      %2839 = vrot.lane.b32.xlu0 %v2744, 8
      %v2840 = vpop.permute.xlu0 %2839
      %2873 = vst.msk [vmem:[#allocation4] sm:$0xff] %vm608, %v2778
      %2874 = vst.msk [vmem:[#allocation4 + $0x10] sm:$0xff] %vm608, %v2780
      %2875 = vst.msk [vmem:[#allocation4 + $0x20] sm:$0xff] %vm608, %v2782
      %2876 = vst.msk [vmem:[#allocation4 + $0x30] sm:$0xff] %vm608, %v2784
      %2877 = vst.msk [vmem:[#allocation4 + $0x40] sm:$0xff] %vm608, %v2786
      %2878 = vst.msk [vmem:[#allocation4 + $0x50] sm:$0xff] %vm608, %v2788
      %2879 = vst.msk [vmem:[#allocation4 + $0x60] sm:$0xff] %vm608, %v2790
      %2880 = vst.msk [vmem:[#allocation4 + $0x70] sm:$0xff] %vm608, %v2792
      %2881 = vst.msk [vmem:[#allocation4 + $0x80] sm:$0xff] %vm608, %v2794
      %2882 = vst.msk [vmem:[#allocation4 + $0x90] sm:$0xff] %vm608, %v2796
      %2883 = vst.msk [vmem:[#allocation4 + $0xa0] sm:$0xff] %vm608, %v2798
      %2884 = vst.msk [vmem:[#allocation4 + $0xb0] sm:$0xff] %vm608, %v2800
      %2885 = vst.msk [vmem:[#allocation4 + $0xc0] sm:$0xff] %vm608, %v2802
      %2886 = vst.msk [vmem:[#allocation4 + $0xd0] sm:$0xff] %vm608, %v2804
      %2887 = vst.msk [vmem:[#allocation4 + $0xe0] sm:$0xff] %vm608, %v2806
      %2888 = vst.msk [vmem:[#allocation4 + $0xf0] sm:$0xff] %vm608, %v2808
      %2889 = vst.msk [vmem:[#allocation4 + $0x100] sm:$0xff] %vm608, %v2810
      %2890 = vst.msk [vmem:[#allocation4 + $0x110] sm:$0xff] %vm608, %v2812
      %2891 = vst.msk [vmem:[#allocation4 + $0x120] sm:$0xff] %vm608, %v2814
      %2892 = vst.msk [vmem:[#allocation4 + $0x130] sm:$0xff] %vm608, %v2816
      %2893 = vst.msk [vmem:[#allocation4 + $0x140] sm:$0xff] %vm608, %v2818
      %2894 = vst.msk [vmem:[#allocation4 + $0x150] sm:$0xff] %vm608, %v2820
      %2895 = vst.msk [vmem:[#allocation4 + $0x160] sm:$0xff] %vm608, %v2822
      %2896 = vst.msk [vmem:[#allocation4 + $0x170] sm:$0xff] %vm608, %v2824
      %2897 = vst.msk [vmem:[#allocation4 + $0x180] sm:$0xff] %vm608, %v2826
      %2898 = vst.msk [vmem:[#allocation4 + $0x190] sm:$0xff] %vm608, %v2828
      %2899 = vst.msk [vmem:[#allocation4 + $0x1a0] sm:$0xff] %vm608, %v2830
      %2900 = vst.msk [vmem:[#allocation4 + $0x1b0] sm:$0xff] %vm608, %v2832
      %2901 = vst.msk [vmem:[#allocation4 + $0x1c0] sm:$0xff] %vm608, %v2834
      %2902 = vst.msk [vmem:[#allocation4 + $0x1d0] sm:$0xff] %vm608, %v2836
      %2903 = vst.msk [vmem:[#allocation4 + $0x1e0] sm:$0xff] %vm608, %v2838
      %2904 = vst.msk [vmem:[#allocation4 + $0x1f0] sm:$0xff] %vm608, %v2840
      %v2905 = vld [vmem:[#allocation3 + $0x2] sm:$0xff]
      %v2906 = vld [vmem:[#allocation3 + $0xa] sm:$0xff]
      %v2907 = vld [vmem:[#allocation3 + $0x1a] sm:$0xff]
      %v2908 = vld [vmem:[#allocation3 + $0x22] sm:$0xff]
      %v2909 = vld [vmem:[#allocation3 + $0x32] sm:$0xff]
      %v2910 = vld [vmem:[#allocation3 + $0x3a] sm:$0xff]
      %v2911 = vld [vmem:[#allocation3 + $0x4a] sm:$0xff]
      %v2912 = vld [vmem:[#allocation3 + $0x52] sm:$0xff]
      %v2913 = vld [vmem:[#allocation3 + $0x62] sm:$0xff]
      %v2914 = vld [vmem:[#allocation3 + $0x6a] sm:$0xff]
      %v2915 = vld [vmem:[#allocation3 + $0x7a] sm:$0xff]
      %v2916 = vld [vmem:[#allocation3 + $0x82] sm:$0xff]
      %v2917 = vld [vmem:[#allocation3 + $0x92] sm:$0xff]
      %v2918 = vld [vmem:[#allocation3 + $0x9a] sm:$0xff]
      %v2919 = vld [vmem:[#allocation3 + $0xaa] sm:$0xff]
      %v2920 = vld [vmem:[#allocation3 + $0xb2] sm:$0xff]
      %v2921 = vld [vmem:[#allocation3 + $0xc2] sm:$0xff]
      %v2922 = vld [vmem:[#allocation3 + $0xca] sm:$0xff]
      %v2923 = vld [vmem:[#allocation3 + $0xda] sm:$0xff]
      %v2924 = vld [vmem:[#allocation3 + $0xe2] sm:$0xff]
      %v2925 = vld [vmem:[#allocation3 + $0xf2] sm:$0xff]
      %v2926 = vld [vmem:[#allocation3 + $0xfa] sm:$0xff]
      %v2927 = vld [vmem:[#allocation3 + $0x10a] sm:$0xff]
      %v2928 = vld [vmem:[#allocation3 + $0x112] sm:$0xff]
      %v2929 = vld [vmem:[#allocation3 + $0x122] sm:$0xff]
      %v2930 = vld [vmem:[#allocation3 + $0x12a] sm:$0xff]
      %v2931 = vld [vmem:[#allocation3 + $0x13a] sm:$0xff]
      %v2932 = vld [vmem:[#allocation3 + $0x142] sm:$0xff]
      %v2933 = vld [vmem:[#allocation3 + $0x152] sm:$0xff]
      %v2934 = vld [vmem:[#allocation3 + $0x15a] sm:$0xff]
      %v2935 = vld [vmem:[#allocation3 + $0x16a] sm:$0xff]
      %v2936 = vld [vmem:[#allocation3 + $0x172] sm:$0xff]
      %2969 = vrot.lane.b32.xlu0 %v2905, 16
      %v2970 = vpop.permute.xlu0 %2969
      %2971 = vrot.lane.b32.xlu0 %v2906, 16
      %v2972 = vpop.permute.xlu0 %2971
      %2973 = vrot.lane.b32.xlu0 %v2907, 16
      %v2974 = vpop.permute.xlu0 %2973
      %2975 = vrot.lane.b32.xlu0 %v2908, 16
      %v2976 = vpop.permute.xlu0 %2975
      %2977 = vrot.lane.b32.xlu0 %v2909, 16
      %v2978 = vpop.permute.xlu0 %2977
      %2979 = vrot.lane.b32.xlu0 %v2910, 16
      %v2980 = vpop.permute.xlu0 %2979
      %2981 = vrot.lane.b32.xlu0 %v2911, 16
      %v2982 = vpop.permute.xlu0 %2981
      %2983 = vrot.lane.b32.xlu0 %v2912, 16
      %v2984 = vpop.permute.xlu0 %2983
      %2985 = vrot.lane.b32.xlu0 %v2913, 16
      %v2986 = vpop.permute.xlu0 %2985
      %2987 = vrot.lane.b32.xlu0 %v2914, 16
      %v2988 = vpop.permute.xlu0 %2987
      %2989 = vrot.lane.b32.xlu0 %v2915, 16
      %v2990 = vpop.permute.xlu0 %2989
      %2991 = vrot.lane.b32.xlu0 %v2916, 16
      %v2992 = vpop.permute.xlu0 %2991
      %2993 = vrot.lane.b32.xlu0 %v2917, 16
      %v2994 = vpop.permute.xlu0 %2993
      %2995 = vrot.lane.b32.xlu0 %v2918, 16
      %v2996 = vpop.permute.xlu0 %2995
      %2997 = vrot.lane.b32.xlu0 %v2919, 16
      %v2998 = vpop.permute.xlu0 %2997
      %2999 = vrot.lane.b32.xlu0 %v2920, 16
      %v3000 = vpop.permute.xlu0 %2999
      %3001 = vrot.lane.b32.xlu0 %v2921, 16
      %v3002 = vpop.permute.xlu0 %3001
      %3003 = vrot.lane.b32.xlu0 %v2922, 16
      %v3004 = vpop.permute.xlu0 %3003
      %3005 = vrot.lane.b32.xlu0 %v2923, 16
      %v3006 = vpop.permute.xlu0 %3005
      %3007 = vrot.lane.b32.xlu0 %v2924, 16
      %v3008 = vpop.permute.xlu0 %3007
      %3009 = vrot.lane.b32.xlu0 %v2925, 16
      %v3010 = vpop.permute.xlu0 %3009
      %3011 = vrot.lane.b32.xlu0 %v2926, 16
      %v3012 = vpop.permute.xlu0 %3011
      %3013 = vrot.lane.b32.xlu0 %v2927, 16
      %v3014 = vpop.permute.xlu0 %3013
      %3015 = vrot.lane.b32.xlu0 %v2928, 16
      %v3016 = vpop.permute.xlu0 %3015
      %3017 = vrot.lane.b32.xlu0 %v2929, 16
      %v3018 = vpop.permute.xlu0 %3017
      %3019 = vrot.lane.b32.xlu0 %v2930, 16
      %v3020 = vpop.permute.xlu0 %3019
      %3021 = vrot.lane.b32.xlu0 %v2931, 16
      %v3022 = vpop.permute.xlu0 %3021
      %3023 = vrot.lane.b32.xlu0 %v2932, 16
      %v3024 = vpop.permute.xlu0 %3023
      %3025 = vrot.lane.b32.xlu0 %v2933, 16
      %v3026 = vpop.permute.xlu0 %3025
      %3027 = vrot.lane.b32.xlu0 %v2934, 16
      %v3028 = vpop.permute.xlu0 %3027
      %3029 = vrot.lane.b32.xlu0 %v2935, 16
      %v3030 = vpop.permute.xlu0 %3029
      %3031 = vrot.lane.b32.xlu0 %v2936, 16
      %v3032 = vpop.permute.xlu0 %3031
      %vm3065 = vcmask 195712
      %3066 = vst.msk [vmem:[#allocation4] sm:$0xff] %vm3065, %v2970
      %3067 = vst.msk [vmem:[#allocation4 + $0x10] sm:$0xff] %vm3065, %v2972
      %3068 = vst.msk [vmem:[#allocation4 + $0x20] sm:$0xff] %vm3065, %v2974
      %3069 = vst.msk [vmem:[#allocation4 + $0x30] sm:$0xff] %vm3065, %v2976
      %3070 = vst.msk [vmem:[#allocation4 + $0x40] sm:$0xff] %vm3065, %v2978
      %3071 = vst.msk [vmem:[#allocation4 + $0x50] sm:$0xff] %vm3065, %v2980
      %3072 = vst.msk [vmem:[#allocation4 + $0x60] sm:$0xff] %vm3065, %v2982
      %3073 = vst.msk [vmem:[#allocation4 + $0x70] sm:$0xff] %vm3065, %v2984
      %3074 = vst.msk [vmem:[#allocation4 + $0x80] sm:$0xff] %vm3065, %v2986
      %3075 = vst.msk [vmem:[#allocation4 + $0x90] sm:$0xff] %vm3065, %v2988
      %3076 = vst.msk [vmem:[#allocation4 + $0xa0] sm:$0xff] %vm3065, %v2990
      %3077 = vst.msk [vmem:[#allocation4 + $0xb0] sm:$0xff] %vm3065, %v2992
      %3078 = vst.msk [vmem:[#allocation4 + $0xc0] sm:$0xff] %vm3065, %v2994
      %3079 = vst.msk [vmem:[#allocation4 + $0xd0] sm:$0xff] %vm3065, %v2996
      %3080 = vst.msk [vmem:[#allocation4 + $0xe0] sm:$0xff] %vm3065, %v2998
      %3081 = vst.msk [vmem:[#allocation4 + $0xf0] sm:$0xff] %vm3065, %v3000
      %3082 = vst.msk [vmem:[#allocation4 + $0x100] sm:$0xff] %vm3065, %v3002
      %3083 = vst.msk [vmem:[#allocation4 + $0x110] sm:$0xff] %vm3065, %v3004
      %3084 = vst.msk [vmem:[#allocation4 + $0x120] sm:$0xff] %vm3065, %v3006
      %3085 = vst.msk [vmem:[#allocation4 + $0x130] sm:$0xff] %vm3065, %v3008
      %3086 = vst.msk [vmem:[#allocation4 + $0x140] sm:$0xff] %vm3065, %v3010
      %3087 = vst.msk [vmem:[#allocation4 + $0x150] sm:$0xff] %vm3065, %v3012
      %3088 = vst.msk [vmem:[#allocation4 + $0x160] sm:$0xff] %vm3065, %v3014
      %3089 = vst.msk [vmem:[#allocation4 + $0x170] sm:$0xff] %vm3065, %v3016
      %3090 = vst.msk [vmem:[#allocation4 + $0x180] sm:$0xff] %vm3065, %v3018
      %3091 = vst.msk [vmem:[#allocation4 + $0x190] sm:$0xff] %vm3065, %v3020
      %3092 = vst.msk [vmem:[#allocation4 + $0x1a0] sm:$0xff] %vm3065, %v3022
      %3093 = vst.msk [vmem:[#allocation4 + $0x1b0] sm:$0xff] %vm3065, %v3024
      %3094 = vst.msk [vmem:[#allocation4 + $0x1c0] sm:$0xff] %vm3065, %v3026
      %3095 = vst.msk [vmem:[#allocation4 + $0x1d0] sm:$0xff] %vm3065, %v3028
      %3096 = vst.msk [vmem:[#allocation4 + $0x1e0] sm:$0xff] %vm3065, %v3030
      %3097 = vst.msk [vmem:[#allocation4 + $0x1f0] sm:$0xff] %vm3065, %v3032
      %v3098 = vld [vmem:[%s2616] sm:$0xff]
      %v3099 = vld [vmem:[%s2616 + $0x8] sm:$0xff]
      %v3100 = vld [vmem:[%s2616 + $0x18] sm:$0xff]
      %v3101 = vld [vmem:[%s2616 + $0x20] sm:$0xff]
      %v3102 = vld [vmem:[%s2616 + $0x30] sm:$0xff]
      %v3103 = vld [vmem:[%s2616 + $0x38] sm:$0xff]
      %v3104 = vld [vmem:[%s2616 + $0x48] sm:$0xff]
      %v3105 = vld [vmem:[%s2616 + $0x50] sm:$0xff]
      %v3106 = vld [vmem:[%s2616 + $0x60] sm:$0xff]
      %v3107 = vld [vmem:[%s2616 + $0x68] sm:$0xff]
      %v3108 = vld [vmem:[%s2616 + $0x78] sm:$0xff]
      %v3109 = vld [vmem:[%s2616 + $0x80] sm:$0xff]
      %v3110 = vld [vmem:[%s2616 + $0x90] sm:$0xff]
      %v3111 = vld [vmem:[%s2616 + $0x98] sm:$0xff]
      %v3112 = vld [vmem:[%s2616 + $0xa8] sm:$0xff]
      %v3113 = vld [vmem:[%s2616 + $0xb0] sm:$0xff]
      %v3114 = vld [vmem:[%s2616 + $0xc0] sm:$0xff]
      %v3115 = vld [vmem:[%s2616 + $0xc8] sm:$0xff]
      %v3116 = vld [vmem:[%s2616 + $0xd8] sm:$0xff]
      %v3117 = vld [vmem:[%s2616 + $0xe0] sm:$0xff]
      %v3118 = vld [vmem:[%s2616 + $0xf0] sm:$0xff]
      %v3119 = vld [vmem:[%s2616 + $0xf8] sm:$0xff]
      %v3120 = vld [vmem:[%s2616 + $0x108] sm:$0xff]
      %v3121 = vld [vmem:[%s2616 + $0x110] sm:$0xff]
      %v3122 = vld [vmem:[%s2616 + $0x120] sm:$0xff]
      %v3123 = vld [vmem:[%s2616 + $0x128] sm:$0xff]
      %v3124 = vld [vmem:[%s2616 + $0x138] sm:$0xff]
      %v3125 = vld [vmem:[%s2616 + $0x140] sm:$0xff]
      %v3126 = vld [vmem:[%s2616 + $0x150] sm:$0xff]
      %v3127 = vld [vmem:[%s2616 + $0x158] sm:$0xff]
      %v3128 = vld [vmem:[%s2616 + $0x168] sm:$0xff]
      %v3129 = vld [vmem:[%s2616 + $0x170] sm:$0xff]
      %3162 = vrot.lane.b32.xlu0 %v3098, 24
      %v3163 = vpop.permute.xlu0 %3162
      %3164 = vrot.lane.b32.xlu0 %v3099, 24
      %v3165 = vpop.permute.xlu0 %3164
      %3166 = vrot.lane.b32.xlu0 %v3100, 24
      %v3167 = vpop.permute.xlu0 %3166
      %3168 = vrot.lane.b32.xlu0 %v3101, 24
      %v3169 = vpop.permute.xlu0 %3168
      %3170 = vrot.lane.b32.xlu0 %v3102, 24
      %v3171 = vpop.permute.xlu0 %3170
      %3172 = vrot.lane.b32.xlu0 %v3103, 24
      %v3173 = vpop.permute.xlu0 %3172
      %3174 = vrot.lane.b32.xlu0 %v3104, 24
      %v3175 = vpop.permute.xlu0 %3174
      %3176 = vrot.lane.b32.xlu0 %v3105, 24
      %v3177 = vpop.permute.xlu0 %3176
      %3178 = vrot.lane.b32.xlu0 %v3106, 24
      %v3179 = vpop.permute.xlu0 %3178
      %3180 = vrot.lane.b32.xlu0 %v3107, 24
      %v3181 = vpop.permute.xlu0 %3180
      %3182 = vrot.lane.b32.xlu0 %v3108, 24
      %v3183 = vpop.permute.xlu0 %3182
      %3184 = vrot.lane.b32.xlu0 %v3109, 24
      %v3185 = vpop.permute.xlu0 %3184
      %3186 = vrot.lane.b32.xlu0 %v3110, 24
      %v3187 = vpop.permute.xlu0 %3186
      %3188 = vrot.lane.b32.xlu0 %v3111, 24
      %v3189 = vpop.permute.xlu0 %3188
      %3190 = vrot.lane.b32.xlu0 %v3112, 24
      %v3191 = vpop.permute.xlu0 %3190
      %3192 = vrot.lane.b32.xlu0 %v3113, 24
      %v3193 = vpop.permute.xlu0 %3192
      %3194 = vrot.lane.b32.xlu0 %v3114, 24
      %v3195 = vpop.permute.xlu0 %3194
      %3196 = vrot.lane.b32.xlu0 %v3115, 24
      %v3197 = vpop.permute.xlu0 %3196
      %3198 = vrot.lane.b32.xlu0 %v3116, 24
      %v3199 = vpop.permute.xlu0 %3198
      %3200 = vrot.lane.b32.xlu0 %v3117, 24
      %v3201 = vpop.permute.xlu0 %3200
      %3202 = vrot.lane.b32.xlu0 %v3118, 24
      %v3203 = vpop.permute.xlu0 %3202
      %3204 = vrot.lane.b32.xlu0 %v3119, 24
      %v3205 = vpop.permute.xlu0 %3204
      %3206 = vrot.lane.b32.xlu0 %v3120, 24
      %v3207 = vpop.permute.xlu0 %3206
      %3208 = vrot.lane.b32.xlu0 %v3121, 24
      %v3209 = vpop.permute.xlu0 %3208
      %3210 = vrot.lane.b32.xlu0 %v3122, 24
      %v3211 = vpop.permute.xlu0 %3210
      %3212 = vrot.lane.b32.xlu0 %v3123, 24
      %v3213 = vpop.permute.xlu0 %3212
      %3214 = vrot.lane.b32.xlu0 %v3124, 24
      %v3215 = vpop.permute.xlu0 %3214
      %3216 = vrot.lane.b32.xlu0 %v3125, 24
      %v3217 = vpop.permute.xlu0 %3216
      %3218 = vrot.lane.b32.xlu0 %v3126, 24
      %v3219 = vpop.permute.xlu0 %3218
      %3220 = vrot.lane.b32.xlu0 %v3127, 24
      %v3221 = vpop.permute.xlu0 %3220
      %3222 = vrot.lane.b32.xlu0 %v3128, 24
      %v3223 = vpop.permute.xlu0 %3222
      %3224 = vrot.lane.b32.xlu0 %v3129, 24
      %v3225 = vpop.permute.xlu0 %3224
      %vm3258 = vcmask 261312
      %3259 = vst.msk [vmem:[#allocation4] sm:$0xff] %vm3258, %v3163
      %3260 = vst.msk [vmem:[#allocation4 + $0x10] sm:$0xff] %vm3258, %v3165
      %3261 = vst.msk [vmem:[#allocation4 + $0x20] sm:$0xff] %vm3258, %v3167
      %3262 = vst.msk [vmem:[#allocation4 + $0x30] sm:$0xff] %vm3258, %v3169
      %3263 = vst.msk [vmem:[#allocation4 + $0x40] sm:$0xff] %vm3258, %v3171
      %3264 = vst.msk [vmem:[#allocation4 + $0x50] sm:$0xff] %vm3258, %v3173
      %3265 = vst.msk [vmem:[#allocation4 + $0x60] sm:$0xff] %vm3258, %v3175
      %3266 = vst.msk [vmem:[#allocation4 + $0x70] sm:$0xff] %vm3258, %v3177
      %3267 = vst.msk [vmem:[#allocation4 + $0x80] sm:$0xff] %vm3258, %v3179
      %3268 = vst.msk [vmem:[#allocation4 + $0x90] sm:$0xff] %vm3258, %v3181
      %3269 = vst.msk [vmem:[#allocation4 + $0xa0] sm:$0xff] %vm3258, %v3183
      %3270 = vst.msk [vmem:[#allocation4 + $0xb0] sm:$0xff] %vm3258, %v3185
      %3271 = vst.msk [vmem:[#allocation4 + $0xc0] sm:$0xff] %vm3258, %v3187
      %3272 = vst.msk [vmem:[#allocation4 + $0xd0] sm:$0xff] %vm3258, %v3189
      %3273 = vst.msk [vmem:[#allocation4 + $0xe0] sm:$0xff] %vm3258, %v3191
      %3274 = vst.msk [vmem:[#allocation4 + $0xf0] sm:$0xff] %vm3258, %v3193
      %3275 = vst.msk [vmem:[#allocation4 + $0x100] sm:$0xff] %vm3258, %v3195
      %3276 = vst.msk [vmem:[#allocation4 + $0x110] sm:$0xff] %vm3258, %v3197
      %3277 = vst.msk [vmem:[#allocation4 + $0x120] sm:$0xff] %vm3258, %v3199
      %3278 = vst.msk [vmem:[#allocation4 + $0x130] sm:$0xff] %vm3258, %v3201
      %3279 = vst.msk [vmem:[#allocation4 + $0x140] sm:$0xff] %vm3258, %v3203
      %3280 = vst.msk [vmem:[#allocation4 + $0x150] sm:$0xff] %vm3258, %v3205
      %3281 = vst.msk [vmem:[#allocation4 + $0x160] sm:$0xff] %vm3258, %v3207
      %3282 = vst.msk [vmem:[#allocation4 + $0x170] sm:$0xff] %vm3258, %v3209
      %3283 = vst.msk [vmem:[#allocation4 + $0x180] sm:$0xff] %vm3258, %v3211
      %3284 = vst.msk [vmem:[#allocation4 + $0x190] sm:$0xff] %vm3258, %v3213
      %3285 = vst.msk [vmem:[#allocation4 + $0x1a0] sm:$0xff] %vm3258, %v3215
      %3286 = vst.msk [vmem:[#allocation4 + $0x1b0] sm:$0xff] %vm3258, %v3217
      %3287 = vst.msk [vmem:[#allocation4 + $0x1c0] sm:$0xff] %vm3258, %v3219
      %3288 = vst.msk [vmem:[#allocation4 + $0x1d0] sm:$0xff] %vm3258, %v3221
      %3289 = vst.msk [vmem:[#allocation4 + $0x1e0] sm:$0xff] %vm3258, %v3223
      %3290 = vst.msk [vmem:[#allocation4 + $0x1f0] sm:$0xff] %vm3258, %v3225
      %v3291 = vld [vmem:[%s2616 + $0x1] sm:$0xff]
      %v3292 = vld [vmem:[%s2616 + $0x9] sm:$0xff]
      %v3293 = vld [vmem:[%s2616 + $0x19] sm:$0xff]
      %v3294 = vld [vmem:[%s2616 + $0x21] sm:$0xff]
      %v3295 = vld [vmem:[%s2616 + $0x31] sm:$0xff]
      %v3296 = vld [vmem:[%s2616 + $0x39] sm:$0xff]
      %v3297 = vld [vmem:[%s2616 + $0x49] sm:$0xff]
      %v3298 = vld [vmem:[%s2616 + $0x51] sm:$0xff]
      %v3299 = vld [vmem:[%s2616 + $0x61] sm:$0xff]
      %v3300 = vld [vmem:[%s2616 + $0x69] sm:$0xff]
      %v3301 = vld [vmem:[%s2616 + $0x79] sm:$0xff]
      %v3302 = vld [vmem:[%s2616 + $0x81] sm:$0xff]
      %v3303 = vld [vmem:[%s2616 + $0x91] sm:$0xff]
      %v3304 = vld [vmem:[%s2616 + $0x99] sm:$0xff]
      %v3305 = vld [vmem:[%s2616 + $0xa9] sm:$0xff]
      %v3306 = vld [vmem:[%s2616 + $0xb1] sm:$0xff]
      %v3307 = vld [vmem:[%s2616 + $0xc1] sm:$0xff]
      %v3308 = vld [vmem:[%s2616 + $0xc9] sm:$0xff]
      %v3309 = vld [vmem:[%s2616 + $0xd9] sm:$0xff]
      %v3310 = vld [vmem:[%s2616 + $0xe1] sm:$0xff]
      %v3311 = vld [vmem:[%s2616 + $0xf1] sm:$0xff]
      %v3312 = vld [vmem:[%s2616 + $0xf9] sm:$0xff]
      %v3313 = vld [vmem:[%s2616 + $0x109] sm:$0xff]
      %v3314 = vld [vmem:[%s2616 + $0x111] sm:$0xff]
      %v3315 = vld [vmem:[%s2616 + $0x121] sm:$0xff]
      %v3316 = vld [vmem:[%s2616 + $0x129] sm:$0xff]
      %v3317 = vld [vmem:[%s2616 + $0x139] sm:$0xff]
      %v3318 = vld [vmem:[%s2616 + $0x141] sm:$0xff]
      %v3319 = vld [vmem:[%s2616 + $0x151] sm:$0xff]
      %v3320 = vld [vmem:[%s2616 + $0x159] sm:$0xff]
      %v3321 = vld [vmem:[%s2616 + $0x169] sm:$0xff]
      %v3322 = vld [vmem:[%s2616 + $0x171] sm:$0xff]
      %3355 = vrot.lane.b32.xlu0 %v3291, 32
      %v3356 = vpop.permute.xlu0 %3355
      %3357 = vrot.lane.b32.xlu0 %v3292, 32
      %v3358 = vpop.permute.xlu0 %3357
      %3359 = vrot.lane.b32.xlu0 %v3293, 32
      %v3360 = vpop.permute.xlu0 %3359
      %3361 = vrot.lane.b32.xlu0 %v3294, 32
      %v3362 = vpop.permute.xlu0 %3361
      %3363 = vrot.lane.b32.xlu0 %v3295, 32
      %v3364 = vpop.permute.xlu0 %3363
      %3365 = vrot.lane.b32.xlu0 %v3296, 32
      %v3366 = vpop.permute.xlu0 %3365
      %3367 = vrot.lane.b32.xlu0 %v3297, 32
      %v3368 = vpop.permute.xlu0 %3367
      %3369 = vrot.lane.b32.xlu0 %v3298, 32
      %v3370 = vpop.permute.xlu0 %3369
      %3371 = vrot.lane.b32.xlu0 %v3299, 32
      %v3372 = vpop.permute.xlu0 %3371
      %3373 = vrot.lane.b32.xlu0 %v3300, 32
      %v3374 = vpop.permute.xlu0 %3373
      %3375 = vrot.lane.b32.xlu0 %v3301, 32
      %v3376 = vpop.permute.xlu0 %3375
      %3377 = vrot.lane.b32.xlu0 %v3302, 32
      %v3378 = vpop.permute.xlu0 %3377
      %3379 = vrot.lane.b32.xlu0 %v3303, 32
      %v3380 = vpop.permute.xlu0 %3379
      %3381 = vrot.lane.b32.xlu0 %v3304, 32
      %v3382 = vpop.permute.xlu0 %3381
      %3383 = vrot.lane.b32.xlu0 %v3305, 32
      %v3384 = vpop.permute.xlu0 %3383
      %3385 = vrot.lane.b32.xlu0 %v3306, 32
      %v3386 = vpop.permute.xlu0 %3385
      %3387 = vrot.lane.b32.xlu0 %v3307, 32
      %v3388 = vpop.permute.xlu0 %3387
      %3389 = vrot.lane.b32.xlu0 %v3308, 32
      %v3390 = vpop.permute.xlu0 %3389
      %3391 = vrot.lane.b32.xlu0 %v3309, 32
      %v3392 = vpop.permute.xlu0 %3391
      %3393 = vrot.lane.b32.xlu0 %v3310, 32
      %v3394 = vpop.permute.xlu0 %3393
      %3395 = vrot.lane.b32.xlu0 %v3311, 32
      %v3396 = vpop.permute.xlu0 %3395
      %3397 = vrot.lane.b32.xlu0 %v3312, 32
      %v3398 = vpop.permute.xlu0 %3397
      %3399 = vrot.lane.b32.xlu0 %v3313, 32
      %v3400 = vpop.permute.xlu0 %3399
      %3401 = vrot.lane.b32.xlu0 %v3314, 32
      %v3402 = vpop.permute.xlu0 %3401
      %3403 = vrot.lane.b32.xlu0 %v3315, 32
      %v3404 = vpop.permute.xlu0 %3403
      %3405 = vrot.lane.b32.xlu0 %v3316, 32
      %v3406 = vpop.permute.xlu0 %3405
      %3407 = vrot.lane.b32.xlu0 %v3317, 32
      %v3408 = vpop.permute.xlu0 %3407
      %3409 = vrot.lane.b32.xlu0 %v3318, 32
      %v3410 = vpop.permute.xlu0 %3409
      %3411 = vrot.lane.b32.xlu0 %v3319, 32
      %v3412 = vpop.permute.xlu0 %3411
      %3413 = vrot.lane.b32.xlu0 %v3320, 32
      %v3414 = vpop.permute.xlu0 %3413
      %3415 = vrot.lane.b32.xlu0 %v3321, 32
      %v3416 = vpop.permute.xlu0 %3415
      %3417 = vrot.lane.b32.xlu0 %v3322, 32
      %v3418 = vpop.permute.xlu0 %3417
      %vm3451 = vcmask 326912
      %3452 = vst.msk [vmem:[#allocation4] sm:$0xff] %vm3451, %v3356
      %3453 = vst.msk [vmem:[#allocation4 + $0x10] sm:$0xff] %vm3451, %v3358
      %3454 = vst.msk [vmem:[#allocation4 + $0x20] sm:$0xff] %vm3451, %v3360
      %3455 = vst.msk [vmem:[#allocation4 + $0x30] sm:$0xff] %vm3451, %v3362
      %3456 = vst.msk [vmem:[#allocation4 + $0x40] sm:$0xff] %vm3451, %v3364
      %3457 = vst.msk [vmem:[#allocation4 + $0x50] sm:$0xff] %vm3451, %v3366
      %3458 = vst.msk [vmem:[#allocation4 + $0x60] sm:$0xff] %vm3451, %v3368
      %3459 = vst.msk [vmem:[#allocation4 + $0x70] sm:$0xff] %vm3451, %v3370
      %3460 = vst.msk [vmem:[#allocation4 + $0x80] sm:$0xff] %vm3451, %v3372
      %3461 = vst.msk [vmem:[#allocation4 + $0x90] sm:$0xff] %vm3451, %v3374
      %3462 = vst.msk [vmem:[#allocation4 + $0xa0] sm:$0xff] %vm3451, %v3376
      %3463 = vst.msk [vmem:[#allocation4 + $0xb0] sm:$0xff] %vm3451, %v3378
      %3464 = vst.msk [vmem:[#allocation4 + $0xc0] sm:$0xff] %vm3451, %v3380
      %3465 = vst.msk [vmem:[#allocation4 + $0xd0] sm:$0xff] %vm3451, %v3382
      %3466 = vst.msk [vmem:[#allocation4 + $0xe0] sm:$0xff] %vm3451, %v3384
      %3467 = vst.msk [vmem:[#allocation4 + $0xf0] sm:$0xff] %vm3451, %v3386
      %3468 = vst.msk [vmem:[#allocation4 + $0x100] sm:$0xff] %vm3451, %v3388
      %3469 = vst.msk [vmem:[#allocation4 + $0x110] sm:$0xff] %vm3451, %v3390
      %3470 = vst.msk [vmem:[#allocation4 + $0x120] sm:$0xff] %vm3451, %v3392
      %3471 = vst.msk [vmem:[#allocation4 + $0x130] sm:$0xff] %vm3451, %v3394
      %3472 = vst.msk [vmem:[#allocation4 + $0x140] sm:$0xff] %vm3451, %v3396
      %3473 = vst.msk [vmem:[#allocation4 + $0x150] sm:$0xff] %vm3451, %v3398
      %3474 = vst.msk [vmem:[#allocation4 + $0x160] sm:$0xff] %vm3451, %v3400
      %3475 = vst.msk [vmem:[#allocation4 + $0x170] sm:$0xff] %vm3451, %v3402
      %3476 = vst.msk [vmem:[#allocation4 + $0x180] sm:$0xff] %vm3451, %v3404
      %3477 = vst.msk [vmem:[#allocation4 + $0x190] sm:$0xff] %vm3451, %v3406
      %3478 = vst.msk [vmem:[#allocation4 + $0x1a0] sm:$0xff] %vm3451, %v3408
      %3479 = vst.msk [vmem:[#allocation4 + $0x1b0] sm:$0xff] %vm3451, %v3410
      %3480 = vst.msk [vmem:[#allocation4 + $0x1c0] sm:$0xff] %vm3451, %v3412
      %3481 = vst.msk [vmem:[#allocation4 + $0x1d0] sm:$0xff] %vm3451, %v3414
      %3482 = vst.msk [vmem:[#allocation4 + $0x1e0] sm:$0xff] %vm3451, %v3416
      %3483 = vst.msk [vmem:[#allocation4 + $0x1f0] sm:$0xff] %vm3451, %v3418
      %v3484 = vld [vmem:[%s2616 + $0x2] sm:$0xff]
      %v3485 = vld [vmem:[%s2616 + $0xa] sm:$0xff]
      %v3486 = vld [vmem:[%s2616 + $0x1a] sm:$0xff]
      %v3487 = vld [vmem:[%s2616 + $0x22] sm:$0xff]
      %v3488 = vld [vmem:[%s2616 + $0x32] sm:$0xff]
      %v3489 = vld [vmem:[%s2616 + $0x3a] sm:$0xff]
      %v3490 = vld [vmem:[%s2616 + $0x4a] sm:$0xff]
      %v3491 = vld [vmem:[%s2616 + $0x52] sm:$0xff]
      %v3492 = vld [vmem:[%s2616 + $0x62] sm:$0xff]
      %v3493 = vld [vmem:[%s2616 + $0x6a] sm:$0xff]
      %v3494 = vld [vmem:[%s2616 + $0x7a] sm:$0xff]
      %v3495 = vld [vmem:[%s2616 + $0x82] sm:$0xff]
      %v3496 = vld [vmem:[%s2616 + $0x92] sm:$0xff]
      %v3497 = vld [vmem:[%s2616 + $0x9a] sm:$0xff]
      %v3498 = vld [vmem:[%s2616 + $0xaa] sm:$0xff]
      %v3499 = vld [vmem:[%s2616 + $0xb2] sm:$0xff]
      %v3500 = vld [vmem:[%s2616 + $0xc2] sm:$0xff]
      %v3501 = vld [vmem:[%s2616 + $0xca] sm:$0xff]
      %v3502 = vld [vmem:[%s2616 + $0xda] sm:$0xff]
      %v3503 = vld [vmem:[%s2616 + $0xe2] sm:$0xff]
      %v3504 = vld [vmem:[%s2616 + $0xf2] sm:$0xff]
      %v3505 = vld [vmem:[%s2616 + $0xfa] sm:$0xff]
      %v3506 = vld [vmem:[%s2616 + $0x10a] sm:$0xff]
      %v3507 = vld [vmem:[%s2616 + $0x112] sm:$0xff]
      %v3508 = vld [vmem:[%s2616 + $0x122] sm:$0xff]
      %v3509 = vld [vmem:[%s2616 + $0x12a] sm:$0xff]
      %v3510 = vld [vmem:[%s2616 + $0x13a] sm:$0xff]
      %v3511 = vld [vmem:[%s2616 + $0x142] sm:$0xff]
      %v3512 = vld [vmem:[%s2616 + $0x152] sm:$0xff]
      %v3513 = vld [vmem:[%s2616 + $0x15a] sm:$0xff]
      %v3514 = vld [vmem:[%s2616 + $0x16a] sm:$0xff]
      %v3515 = vld [vmem:[%s2616 + $0x172] sm:$0xff]
      %3548 = vrot.lane.b32.xlu0 %v3484, 40
      %v3549 = vpop.permute.xlu0 %3548
      %3550 = vrot.lane.b32.xlu0 %v3485, 40
      %v3551 = vpop.permute.xlu0 %3550
      %3552 = vrot.lane.b32.xlu0 %v3486, 40
      %v3553 = vpop.permute.xlu0 %3552
      %3554 = vrot.lane.b32.xlu0 %v3487, 40
      %v3555 = vpop.permute.xlu0 %3554
      %3556 = vrot.lane.b32.xlu0 %v3488, 40
      %v3557 = vpop.permute.xlu0 %3556
      %3558 = vrot.lane.b32.xlu0 %v3489, 40
      %v3559 = vpop.permute.xlu0 %3558
      %3560 = vrot.lane.b32.xlu0 %v3490, 40
      %v3561 = vpop.permute.xlu0 %3560
      %3562 = vrot.lane.b32.xlu0 %v3491, 40
      %v3563 = vpop.permute.xlu0 %3562
      %3564 = vrot.lane.b32.xlu0 %v3492, 40
      %v3565 = vpop.permute.xlu0 %3564
      %3566 = vrot.lane.b32.xlu0 %v3493, 40
      %v3567 = vpop.permute.xlu0 %3566
      %3568 = vrot.lane.b32.xlu0 %v3494, 40
      %v3569 = vpop.permute.xlu0 %3568
      %3570 = vrot.lane.b32.xlu0 %v3495, 40
      %v3571 = vpop.permute.xlu0 %3570
      %3572 = vrot.lane.b32.xlu0 %v3496, 40
      %v3573 = vpop.permute.xlu0 %3572
      %3574 = vrot.lane.b32.xlu0 %v3497, 40
      %v3575 = vpop.permute.xlu0 %3574
      %3576 = vrot.lane.b32.xlu0 %v3498, 40
      %v3577 = vpop.permute.xlu0 %3576
      %3578 = vrot.lane.b32.xlu0 %v3499, 40
      %v3579 = vpop.permute.xlu0 %3578
      %3580 = vrot.lane.b32.xlu0 %v3500, 40
      %v3581 = vpop.permute.xlu0 %3580
      %3582 = vrot.lane.b32.xlu0 %v3501, 40
      %v3583 = vpop.permute.xlu0 %3582
      %3584 = vrot.lane.b32.xlu0 %v3502, 40
      %v3585 = vpop.permute.xlu0 %3584
      %3586 = vrot.lane.b32.xlu0 %v3503, 40
      %v3587 = vpop.permute.xlu0 %3586
      %3588 = vrot.lane.b32.xlu0 %v3504, 40
      %v3589 = vpop.permute.xlu0 %3588
      %3590 = vrot.lane.b32.xlu0 %v3505, 40
      %v3591 = vpop.permute.xlu0 %3590
      %3592 = vrot.lane.b32.xlu0 %v3506, 40
      %v3593 = vpop.permute.xlu0 %3592
      %3594 = vrot.lane.b32.xlu0 %v3507, 40
      %v3595 = vpop.permute.xlu0 %3594
      %3596 = vrot.lane.b32.xlu0 %v3508, 40
      %v3597 = vpop.permute.xlu0 %3596
      %3598 = vrot.lane.b32.xlu0 %v3509, 40
      %v3599 = vpop.permute.xlu0 %3598
      %3600 = vrot.lane.b32.xlu0 %v3510, 40
      %v3601 = vpop.permute.xlu0 %3600
      %3602 = vrot.lane.b32.xlu0 %v3511, 40
      %v3603 = vpop.permute.xlu0 %3602
      %3604 = vrot.lane.b32.xlu0 %v3512, 40
      %v3605 = vpop.permute.xlu0 %3604
      %3606 = vrot.lane.b32.xlu0 %v3513, 40
      %v3607 = vpop.permute.xlu0 %3606
      %3608 = vrot.lane.b32.xlu0 %v3514, 40
      %v3609 = vpop.permute.xlu0 %3608
      %3610 = vrot.lane.b32.xlu0 %v3515, 40
      %v3611 = vpop.permute.xlu0 %3610
      %vm3644 = vcmask 392512
      %3645 = vst.msk [vmem:[#allocation4] sm:$0xff] %vm3644, %v3549
      %3646 = vst.msk [vmem:[#allocation4 + $0x10] sm:$0xff] %vm3644, %v3551
      %3647 = vst.msk [vmem:[#allocation4 + $0x20] sm:$0xff] %vm3644, %v3553
      %3648 = vst.msk [vmem:[#allocation4 + $0x30] sm:$0xff] %vm3644, %v3555
      %3649 = vst.msk [vmem:[#allocation4 + $0x40] sm:$0xff] %vm3644, %v3557
      %3650 = vst.msk [vmem:[#allocation4 + $0x50] sm:$0xff] %vm3644, %v3559
      %3651 = vst.msk [vmem:[#allocation4 + $0x60] sm:$0xff] %vm3644, %v3561
      %3652 = vst.msk [vmem:[#allocation4 + $0x70] sm:$0xff] %vm3644, %v3563
      %3653 = vst.msk [vmem:[#allocation4 + $0x80] sm:$0xff] %vm3644, %v3565
      %3654 = vst.msk [vmem:[#allocation4 + $0x90] sm:$0xff] %vm3644, %v3567
      %3655 = vst.msk [vmem:[#allocation4 + $0xa0] sm:$0xff] %vm3644, %v3569
      %3656 = vst.msk [vmem:[#allocation4 + $0xb0] sm:$0xff] %vm3644, %v3571
      %3657 = vst.msk [vmem:[#allocation4 + $0xc0] sm:$0xff] %vm3644, %v3573
      %3658 = vst.msk [vmem:[#allocation4 + $0xd0] sm:$0xff] %vm3644, %v3575
      %3659 = vst.msk [vmem:[#allocation4 + $0xe0] sm:$0xff] %vm3644, %v3577
      %3660 = vst.msk [vmem:[#allocation4 + $0xf0] sm:$0xff] %vm3644, %v3579
      %3661 = vst.msk [vmem:[#allocation4 + $0x100] sm:$0xff] %vm3644, %v3581
      %3662 = vst.msk [vmem:[#allocation4 + $0x110] sm:$0xff] %vm3644, %v3583
      %3663 = vst.msk [vmem:[#allocation4 + $0x120] sm:$0xff] %vm3644, %v3585
      %3664 = vst.msk [vmem:[#allocation4 + $0x130] sm:$0xff] %vm3644, %v3587
      %3665 = vst.msk [vmem:[#allocation4 + $0x140] sm:$0xff] %vm3644, %v3589
      %3666 = vst.msk [vmem:[#allocation4 + $0x150] sm:$0xff] %vm3644, %v3591
      %3667 = vst.msk [vmem:[#allocation4 + $0x160] sm:$0xff] %vm3644, %v3593
      %3668 = vst.msk [vmem:[#allocation4 + $0x170] sm:$0xff] %vm3644, %v3595
      %3669 = vst.msk [vmem:[#allocation4 + $0x180] sm:$0xff] %vm3644, %v3597
      %3670 = vst.msk [vmem:[#allocation4 + $0x190] sm:$0xff] %vm3644, %v3599
      %3671 = vst.msk [vmem:[#allocation4 + $0x1a0] sm:$0xff] %vm3644, %v3601
      %3672 = vst.msk [vmem:[#allocation4 + $0x1b0] sm:$0xff] %vm3644, %v3603
      %3673 = vst.msk [vmem:[#allocation4 + $0x1c0] sm:$0xff] %vm3644, %v3605
      %3674 = vst.msk [vmem:[#allocation4 + $0x1d0] sm:$0xff] %vm3644, %v3607
      %3675 = vst.msk [vmem:[#allocation4 + $0x1e0] sm:$0xff] %vm3644, %v3609
      %3676 = vst.msk [vmem:[#allocation4 + $0x1f0] sm:$0xff] %vm3644, %v3611
      %s3677 = scalar_lea.vmem [#allocation3], 48
      %v3678 = vld [vmem:[%s3677] sm:$0xff]
      %v3679 = vld [vmem:[%s3677 + $0x8] sm:$0xff]
      %v3680 = vld [vmem:[%s3677 + $0x18] sm:$0xff]
      %v3681 = vld [vmem:[%s3677 + $0x20] sm:$0xff]
      %v3682 = vld [vmem:[%s3677 + $0x30] sm:$0xff]
      %v3683 = vld [vmem:[%s3677 + $0x38] sm:$0xff]
      %v3684 = vld [vmem:[%s3677 + $0x48] sm:$0xff]
      %v3685 = vld [vmem:[%s3677 + $0x50] sm:$0xff]
      %v3686 = vld [vmem:[%s3677 + $0x60] sm:$0xff]
      %v3687 = vld [vmem:[%s3677 + $0x68] sm:$0xff]
      %v3688 = vld [vmem:[%s3677 + $0x78] sm:$0xff]
      %v3689 = vld [vmem:[%s3677 + $0x80] sm:$0xff]
      %v3690 = vld [vmem:[%s3677 + $0x90] sm:$0xff]
      %v3691 = vld [vmem:[%s3677 + $0x98] sm:$0xff]
      %v3692 = vld [vmem:[%s3677 + $0xa8] sm:$0xff]
      %v3693 = vld [vmem:[%s3677 + $0xb0] sm:$0xff]
      %v3694 = vld [vmem:[%s3677 + $0xc0] sm:$0xff]
      %v3695 = vld [vmem:[%s3677 + $0xc8] sm:$0xff]
      %v3696 = vld [vmem:[%s3677 + $0xd8] sm:$0xff]
      %v3697 = vld [vmem:[%s3677 + $0xe0] sm:$0xff]
      %v3698 = vld [vmem:[%s3677 + $0xf0] sm:$0xff]
      %v3699 = vld [vmem:[%s3677 + $0xf8] sm:$0xff]
      %v3700 = vld [vmem:[%s3677 + $0x108] sm:$0xff]
      %v3701 = vld [vmem:[%s3677 + $0x110] sm:$0xff]
      %v3702 = vld [vmem:[%s3677 + $0x120] sm:$0xff]
      %v3703 = vld [vmem:[%s3677 + $0x128] sm:$0xff]
      %v3704 = vld [vmem:[%s3677 + $0x138] sm:$0xff]
      %v3705 = vld [vmem:[%s3677 + $0x140] sm:$0xff]
      %v3706 = vld [vmem:[%s3677 + $0x150] sm:$0xff]
      %v3707 = vld [vmem:[%s3677 + $0x158] sm:$0xff]
      %v3708 = vld [vmem:[%s3677 + $0x168] sm:$0xff]
      %v3709 = vld [vmem:[%s3677 + $0x170] sm:$0xff]
      %3742 = vrot.lane.b32.xlu0 %v3678, 48
      %v3743 = vpop.permute.xlu0 %3742
      %3744 = vrot.lane.b32.xlu0 %v3679, 48
      %v3745 = vpop.permute.xlu0 %3744
      %3746 = vrot.lane.b32.xlu0 %v3680, 48
      %v3747 = vpop.permute.xlu0 %3746
      %3748 = vrot.lane.b32.xlu0 %v3681, 48
      %v3749 = vpop.permute.xlu0 %3748
      %3750 = vrot.lane.b32.xlu0 %v3682, 48
      %v3751 = vpop.permute.xlu0 %3750
      %3752 = vrot.lane.b32.xlu0 %v3683, 48
      %v3753 = vpop.permute.xlu0 %3752
      %3754 = vrot.lane.b32.xlu0 %v3684, 48
      %v3755 = vpop.permute.xlu0 %3754
      %3756 = vrot.lane.b32.xlu0 %v3685, 48
      %v3757 = vpop.permute.xlu0 %3756
      %3758 = vrot.lane.b32.xlu0 %v3686, 48
      %v3759 = vpop.permute.xlu0 %3758
      %3760 = vrot.lane.b32.xlu0 %v3687, 48
      %v3761 = vpop.permute.xlu0 %3760
      %3762 = vrot.lane.b32.xlu0 %v3688, 48
      %v3763 = vpop.permute.xlu0 %3762
      %3764 = vrot.lane.b32.xlu0 %v3689, 48
      %v3765 = vpop.permute.xlu0 %3764
      %3766 = vrot.lane.b32.xlu0 %v3690, 48
      %v3767 = vpop.permute.xlu0 %3766
      %3768 = vrot.lane.b32.xlu0 %v3691, 48
      %v3769 = vpop.permute.xlu0 %3768
      %3770 = vrot.lane.b32.xlu0 %v3692, 48
      %v3771 = vpop.permute.xlu0 %3770
      %3772 = vrot.lane.b32.xlu0 %v3693, 48
      %v3773 = vpop.permute.xlu0 %3772
      %3774 = vrot.lane.b32.xlu0 %v3694, 48
      %v3775 = vpop.permute.xlu0 %3774
      %3776 = vrot.lane.b32.xlu0 %v3695, 48
      %v3777 = vpop.permute.xlu0 %3776
      %3778 = vrot.lane.b32.xlu0 %v3696, 48
      %v3779 = vpop.permute.xlu0 %3778
      %3780 = vrot.lane.b32.xlu0 %v3697, 48
      %v3781 = vpop.permute.xlu0 %3780
      %3782 = vrot.lane.b32.xlu0 %v3698, 48
      %v3783 = vpop.permute.xlu0 %3782
      %3784 = vrot.lane.b32.xlu0 %v3699, 48
      %v3785 = vpop.permute.xlu0 %3784
      %3786 = vrot.lane.b32.xlu0 %v3700, 48
      %v3787 = vpop.permute.xlu0 %3786
      %3788 = vrot.lane.b32.xlu0 %v3701, 48
      %v3789 = vpop.permute.xlu0 %3788
      %3790 = vrot.lane.b32.xlu0 %v3702, 48
      %v3791 = vpop.permute.xlu0 %3790
      %3792 = vrot.lane.b32.xlu0 %v3703, 48
      %v3793 = vpop.permute.xlu0 %3792
      %3794 = vrot.lane.b32.xlu0 %v3704, 48
      %v3795 = vpop.permute.xlu0 %3794
      %3796 = vrot.lane.b32.xlu0 %v3705, 48
      %v3797 = vpop.permute.xlu0 %3796
      %3798 = vrot.lane.b32.xlu0 %v3706, 48
      %v3799 = vpop.permute.xlu0 %3798
      %3800 = vrot.lane.b32.xlu0 %v3707, 48
      %v3801 = vpop.permute.xlu0 %3800
      %3802 = vrot.lane.b32.xlu0 %v3708, 48
      %v3803 = vpop.permute.xlu0 %3802
      %3804 = vrot.lane.b32.xlu0 %v3709, 48
      %v3805 = vpop.permute.xlu0 %3804
      %vm3838 = vcmask 458112
      %3839 = vst.msk [vmem:[#allocation4] sm:$0xff] %vm3838, %v3743
      %3840 = vst.msk [vmem:[#allocation4 + $0x10] sm:$0xff] %vm3838, %v3745
      %3841 = vst.msk [vmem:[#allocation4 + $0x20] sm:$0xff] %vm3838, %v3747
      %3842 = vst.msk [vmem:[#allocation4 + $0x30] sm:$0xff] %vm3838, %v3749
      %3843 = vst.msk [vmem:[#allocation4 + $0x40] sm:$0xff] %vm3838, %v3751
      %3844 = vst.msk [vmem:[#allocation4 + $0x50] sm:$0xff] %vm3838, %v3753
      %3845 = vst.msk [vmem:[#allocation4 + $0x60] sm:$0xff] %vm3838, %v3755
      %3846 = vst.msk [vmem:[#allocation4 + $0x70] sm:$0xff] %vm3838, %v3757
      %3847 = vst.msk [vmem:[#allocation4 + $0x80] sm:$0xff] %vm3838, %v3759
      %3848 = vst.msk [vmem:[#allocation4 + $0x90] sm:$0xff] %vm3838, %v3761
      %3849 = vst.msk [vmem:[#allocation4 + $0xa0] sm:$0xff] %vm3838, %v3763
      %3850 = vst.msk [vmem:[#allocation4 + $0xb0] sm:$0xff] %vm3838, %v3765
      %3851 = vst.msk [vmem:[#allocation4 + $0xc0] sm:$0xff] %vm3838, %v3767
      %3852 = vst.msk [vmem:[#allocation4 + $0xd0] sm:$0xff] %vm3838, %v3769
      %3853 = vst.msk [vmem:[#allocation4 + $0xe0] sm:$0xff] %vm3838, %v3771
      %3854 = vst.msk [vmem:[#allocation4 + $0xf0] sm:$0xff] %vm3838, %v3773
      %3855 = vst.msk [vmem:[#allocation4 + $0x100] sm:$0xff] %vm3838, %v3775
      %3856 = vst.msk [vmem:[#allocation4 + $0x110] sm:$0xff] %vm3838, %v3777
      %3857 = vst.msk [vmem:[#allocation4 + $0x120] sm:$0xff] %vm3838, %v3779
      %3858 = vst.msk [vmem:[#allocation4 + $0x130] sm:$0xff] %vm3838, %v3781
      %3859 = vst.msk [vmem:[#allocation4 + $0x140] sm:$0xff] %vm3838, %v3783
      %3860 = vst.msk [vmem:[#allocation4 + $0x150] sm:$0xff] %vm3838, %v3785
      %3861 = vst.msk [vmem:[#allocation4 + $0x160] sm:$0xff] %vm3838, %v3787
      %3862 = vst.msk [vmem:[#allocation4 + $0x170] sm:$0xff] %vm3838, %v3789
      %3863 = vst.msk [vmem:[#allocation4 + $0x180] sm:$0xff] %vm3838, %v3791
      %3864 = vst.msk [vmem:[#allocation4 + $0x190] sm:$0xff] %vm3838, %v3793
      %3865 = vst.msk [vmem:[#allocation4 + $0x1a0] sm:$0xff] %vm3838, %v3795
      %3866 = vst.msk [vmem:[#allocation4 + $0x1b0] sm:$0xff] %vm3838, %v3797
      %3867 = vst.msk [vmem:[#allocation4 + $0x1c0] sm:$0xff] %vm3838, %v3799
      %3868 = vst.msk [vmem:[#allocation4 + $0x1d0] sm:$0xff] %vm3838, %v3801
      %3869 = vst.msk [vmem:[#allocation4 + $0x1e0] sm:$0xff] %vm3838, %v3803
      %3870 = vst.msk [vmem:[#allocation4 + $0x1f0] sm:$0xff] %vm3838, %v3805
      %v3871 = vld [vmem:[%s3677 + $0x1] sm:$0xff]
      %v3872 = vld [vmem:[%s3677 + $0x9] sm:$0xff]
      %v3873 = vld [vmem:[%s3677 + $0x19] sm:$0xff]
      %v3874 = vld [vmem:[%s3677 + $0x21] sm:$0xff]
      %v3875 = vld [vmem:[%s3677 + $0x31] sm:$0xff]
      %v3876 = vld [vmem:[%s3677 + $0x39] sm:$0xff]
      %v3877 = vld [vmem:[%s3677 + $0x49] sm:$0xff]
      %v3878 = vld [vmem:[%s3677 + $0x51] sm:$0xff]
      %v3879 = vld [vmem:[%s3677 + $0x61] sm:$0xff]
      %v3880 = vld [vmem:[%s3677 + $0x69] sm:$0xff]
      %v3881 = vld [vmem:[%s3677 + $0x79] sm:$0xff]
      %v3882 = vld [vmem:[%s3677 + $0x81] sm:$0xff]
      %v3883 = vld [vmem:[%s3677 + $0x91] sm:$0xff]
      %v3884 = vld [vmem:[%s3677 + $0x99] sm:$0xff]
      %v3885 = vld [vmem:[%s3677 + $0xa9] sm:$0xff]
      %v3886 = vld [vmem:[%s3677 + $0xb1] sm:$0xff]
      %v3887 = vld [vmem:[%s3677 + $0xc1] sm:$0xff]
      %v3888 = vld [vmem:[%s3677 + $0xc9] sm:$0xff]
      %v3889 = vld [vmem:[%s3677 + $0xd9] sm:$0xff]
      %v3890 = vld [vmem:[%s3677 + $0xe1] sm:$0xff]
      %v3891 = vld [vmem:[%s3677 + $0xf1] sm:$0xff]
      %v3892 = vld [vmem:[%s3677 + $0xf9] sm:$0xff]
      %v3893 = vld [vmem:[%s3677 + $0x109] sm:$0xff]
      %v3894 = vld [vmem:[%s3677 + $0x111] sm:$0xff]
      %v3895 = vld [vmem:[%s3677 + $0x121] sm:$0xff]
      %v3896 = vld [vmem:[%s3677 + $0x129] sm:$0xff]
      %v3897 = vld [vmem:[%s3677 + $0x139] sm:$0xff]
      %v3898 = vld [vmem:[%s3677 + $0x141] sm:$0xff]
      %v3899 = vld [vmem:[%s3677 + $0x151] sm:$0xff]
      %v3900 = vld [vmem:[%s3677 + $0x159] sm:$0xff]
      %v3901 = vld [vmem:[%s3677 + $0x169] sm:$0xff]
      %v3902 = vld [vmem:[%s3677 + $0x171] sm:$0xff]
      %3935 = vrot.lane.b32.xlu0 %v3871, 56
      %v3936 = vpop.permute.xlu0 %3935
      %3937 = vrot.lane.b32.xlu0 %v3872, 56
      %v3938 = vpop.permute.xlu0 %3937
      %3939 = vrot.lane.b32.xlu0 %v3873, 56
      %v3940 = vpop.permute.xlu0 %3939
      %3941 = vrot.lane.b32.xlu0 %v3874, 56
      %v3942 = vpop.permute.xlu0 %3941
      %3943 = vrot.lane.b32.xlu0 %v3875, 56
      %v3944 = vpop.permute.xlu0 %3943
      %3945 = vrot.lane.b32.xlu0 %v3876, 56
      %v3946 = vpop.permute.xlu0 %3945
      %3947 = vrot.lane.b32.xlu0 %v3877, 56
      %v3948 = vpop.permute.xlu0 %3947
      %3949 = vrot.lane.b32.xlu0 %v3878, 56
      %v3950 = vpop.permute.xlu0 %3949
      %3951 = vrot.lane.b32.xlu0 %v3879, 56
      %v3952 = vpop.permute.xlu0 %3951
      %3953 = vrot.lane.b32.xlu0 %v3880, 56
      %v3954 = vpop.permute.xlu0 %3953
      %3955 = vrot.lane.b32.xlu0 %v3881, 56
      %v3956 = vpop.permute.xlu0 %3955
      %3957 = vrot.lane.b32.xlu0 %v3882, 56
      %v3958 = vpop.permute.xlu0 %3957
      %3959 = vrot.lane.b32.xlu0 %v3883, 56
      %v3960 = vpop.permute.xlu0 %3959
      %3961 = vrot.lane.b32.xlu0 %v3884, 56
      %v3962 = vpop.permute.xlu0 %3961
      %3963 = vrot.lane.b32.xlu0 %v3885, 56
      %v3964 = vpop.permute.xlu0 %3963
      %3965 = vrot.lane.b32.xlu0 %v3886, 56
      %v3966 = vpop.permute.xlu0 %3965
      %3967 = vrot.lane.b32.xlu0 %v3887, 56
      %v3968 = vpop.permute.xlu0 %3967
      %3969 = vrot.lane.b32.xlu0 %v3888, 56
      %v3970 = vpop.permute.xlu0 %3969
      %3971 = vrot.lane.b32.xlu0 %v3889, 56
      %v3972 = vpop.permute.xlu0 %3971
      %3973 = vrot.lane.b32.xlu0 %v3890, 56
      %v3974 = vpop.permute.xlu0 %3973
      %3975 = vrot.lane.b32.xlu0 %v3891, 56
      %v3976 = vpop.permute.xlu0 %3975
      %3977 = vrot.lane.b32.xlu0 %v3892, 56
      %v3978 = vpop.permute.xlu0 %3977
      %3979 = vrot.lane.b32.xlu0 %v3893, 56
      %v3980 = vpop.permute.xlu0 %3979
      %3981 = vrot.lane.b32.xlu0 %v3894, 56
      %v3982 = vpop.permute.xlu0 %3981
      %3983 = vrot.lane.b32.xlu0 %v3895, 56
      %v3984 = vpop.permute.xlu0 %3983
      %3985 = vrot.lane.b32.xlu0 %v3896, 56
      %v3986 = vpop.permute.xlu0 %3985
      %3987 = vrot.lane.b32.xlu0 %v3897, 56
      %v3988 = vpop.permute.xlu0 %3987
      %3989 = vrot.lane.b32.xlu0 %v3898, 56
      %v3990 = vpop.permute.xlu0 %3989
      %3991 = vrot.lane.b32.xlu0 %v3899, 56
      %v3992 = vpop.permute.xlu0 %3991
      %3993 = vrot.lane.b32.xlu0 %v3900, 56
      %v3994 = vpop.permute.xlu0 %3993
      %3995 = vrot.lane.b32.xlu0 %v3901, 56
      %v3996 = vpop.permute.xlu0 %3995
      %3997 = vrot.lane.b32.xlu0 %v3902, 56
      %v3998 = vpop.permute.xlu0 %3997
      %vm4031 = vcmask 523712
      %4032 = vst.msk [vmem:[#allocation4] sm:$0xff] %vm4031, %v3936
      %4033 = vst.msk [vmem:[#allocation4 + $0x10] sm:$0xff] %vm4031, %v3938
      %4034 = vst.msk [vmem:[#allocation4 + $0x20] sm:$0xff] %vm4031, %v3940
      %4035 = vst.msk [vmem:[#allocation4 + $0x30] sm:$0xff] %vm4031, %v3942
      %4036 = vst.msk [vmem:[#allocation4 + $0x40] sm:$0xff] %vm4031, %v3944
      %4037 = vst.msk [vmem:[#allocation4 + $0x50] sm:$0xff] %vm4031, %v3946
      %4038 = vst.msk [vmem:[#allocation4 + $0x60] sm:$0xff] %vm4031, %v3948
      %4039 = vst.msk [vmem:[#allocation4 + $0x70] sm:$0xff] %vm4031, %v3950
      %4040 = vst.msk [vmem:[#allocation4 + $0x80] sm:$0xff] %vm4031, %v3952
      %4041 = vst.msk [vmem:[#allocation4 + $0x90] sm:$0xff] %vm4031, %v3954
      %4042 = vst.msk [vmem:[#allocation4 + $0xa0] sm:$0xff] %vm4031, %v3956
      %4043 = vst.msk [vmem:[#allocation4 + $0xb0] sm:$0xff] %vm4031, %v3958
      %4044 = vst.msk [vmem:[#allocation4 + $0xc0] sm:$0xff] %vm4031, %v3960
      %4045 = vst.msk [vmem:[#allocation4 + $0xd0] sm:$0xff] %vm4031, %v3962
      %4046 = vst.msk [vmem:[#allocation4 + $0xe0] sm:$0xff] %vm4031, %v3964
      %4047 = vst.msk [vmem:[#allocation4 + $0xf0] sm:$0xff] %vm4031, %v3966
      %4048 = vst.msk [vmem:[#allocation4 + $0x100] sm:$0xff] %vm4031, %v3968
      %4049 = vst.msk [vmem:[#allocation4 + $0x110] sm:$0xff] %vm4031, %v3970
      %4050 = vst.msk [vmem:[#allocation4 + $0x120] sm:$0xff] %vm4031, %v3972
      %4051 = vst.msk [vmem:[#allocation4 + $0x130] sm:$0xff] %vm4031, %v3974
      %4052 = vst.msk [vmem:[#allocation4 + $0x140] sm:$0xff] %vm4031, %v3976
      %4053 = vst.msk [vmem:[#allocation4 + $0x150] sm:$0xff] %vm4031, %v3978
      %4054 = vst.msk [vmem:[#allocation4 + $0x160] sm:$0xff] %vm4031, %v3980
      %4055 = vst.msk [vmem:[#allocation4 + $0x170] sm:$0xff] %vm4031, %v3982
      %4056 = vst.msk [vmem:[#allocation4 + $0x180] sm:$0xff] %vm4031, %v3984
      %4057 = vst.msk [vmem:[#allocation4 + $0x190] sm:$0xff] %vm4031, %v3986
      %4058 = vst.msk [vmem:[#allocation4 + $0x1a0] sm:$0xff] %vm4031, %v3988
      %4059 = vst.msk [vmem:[#allocation4 + $0x1b0] sm:$0xff] %vm4031, %v3990
      %4060 = vst.msk [vmem:[#allocation4 + $0x1c0] sm:$0xff] %vm4031, %v3992
      %4061 = vst.msk [vmem:[#allocation4 + $0x1d0] sm:$0xff] %vm4031, %v3994
      %4062 = vst.msk [vmem:[#allocation4 + $0x1e0] sm:$0xff] %vm4031, %v3996
      %4063 = vst.msk [vmem:[#allocation4 + $0x1f0] sm:$0xff] %vm4031, %v3998
      %v4064 = vld [vmem:[%s3677 + $0x2] sm:$0xff]
      %v4065 = vld [vmem:[%s3677 + $0xa] sm:$0xff]
      %v4066 = vld [vmem:[%s3677 + $0x1a] sm:$0xff]
      %v4067 = vld [vmem:[%s3677 + $0x22] sm:$0xff]
      %v4068 = vld [vmem:[%s3677 + $0x32] sm:$0xff]
      %v4069 = vld [vmem:[%s3677 + $0x3a] sm:$0xff]
      %v4070 = vld [vmem:[%s3677 + $0x4a] sm:$0xff]
      %v4071 = vld [vmem:[%s3677 + $0x52] sm:$0xff]
      %v4072 = vld [vmem:[%s3677 + $0x62] sm:$0xff]
      %v4073 = vld [vmem:[%s3677 + $0x6a] sm:$0xff]
      %v4074 = vld [vmem:[%s3677 + $0x7a] sm:$0xff]
      %v4075 = vld [vmem:[%s3677 + $0x82] sm:$0xff]
      %v4076 = vld [vmem:[%s3677 + $0x92] sm:$0xff]
      %v4077 = vld [vmem:[%s3677 + $0x9a] sm:$0xff]
      %v4078 = vld [vmem:[%s3677 + $0xaa] sm:$0xff]
      %v4079 = vld [vmem:[%s3677 + $0xb2] sm:$0xff]
      %v4080 = vld [vmem:[%s3677 + $0xc2] sm:$0xff]
      %v4081 = vld [vmem:[%s3677 + $0xca] sm:$0xff]
      %v4082 = vld [vmem:[%s3677 + $0xda] sm:$0xff]
      %v4083 = vld [vmem:[%s3677 + $0xe2] sm:$0xff]
      %v4084 = vld [vmem:[%s3677 + $0xf2] sm:$0xff]
      %v4085 = vld [vmem:[%s3677 + $0xfa] sm:$0xff]
      %v4086 = vld [vmem:[%s3677 + $0x10a] sm:$0xff]
      %v4087 = vld [vmem:[%s3677 + $0x112] sm:$0xff]
      %v4088 = vld [vmem:[%s3677 + $0x122] sm:$0xff]
      %v4089 = vld [vmem:[%s3677 + $0x12a] sm:$0xff]
      %v4090 = vld [vmem:[%s3677 + $0x13a] sm:$0xff]
      %v4091 = vld [vmem:[%s3677 + $0x142] sm:$0xff]
      %v4092 = vld [vmem:[%s3677 + $0x152] sm:$0xff]
      %v4093 = vld [vmem:[%s3677 + $0x15a] sm:$0xff]
      %v4094 = vld [vmem:[%s3677 + $0x16a] sm:$0xff]
      %v4095 = vld [vmem:[%s3677 + $0x172] sm:$0xff]
      %4128 = vrot.lane.b32.xlu0 %v4064, 64
      %v4129 = vpop.permute.xlu0 %4128
      %4130 = vrot.lane.b32.xlu0 %v4065, 64
      %v4131 = vpop.permute.xlu0 %4130
      %4132 = vrot.lane.b32.xlu0 %v4066, 64
      %v4133 = vpop.permute.xlu0 %4132
      %4134 = vrot.lane.b32.xlu0 %v4067, 64
      %v4135 = vpop.permute.xlu0 %4134
      %4136 = vrot.lane.b32.xlu0 %v4068, 64
      %v4137 = vpop.permute.xlu0 %4136
      %4138 = vrot.lane.b32.xlu0 %v4069, 64
      %v4139 = vpop.permute.xlu0 %4138
      %4140 = vrot.lane.b32.xlu0 %v4070, 64
      %v4141 = vpop.permute.xlu0 %4140
      %4142 = vrot.lane.b32.xlu0 %v4071, 64
      %v4143 = vpop.permute.xlu0 %4142
      %4144 = vrot.lane.b32.xlu0 %v4072, 64
      %v4145 = vpop.permute.xlu0 %4144
      %4146 = vrot.lane.b32.xlu0 %v4073, 64
      %v4147 = vpop.permute.xlu0 %4146
      %4148 = vrot.lane.b32.xlu0 %v4074, 64
      %v4149 = vpop.permute.xlu0 %4148
      %4150 = vrot.lane.b32.xlu0 %v4075, 64
      %v4151 = vpop.permute.xlu0 %4150
      %4152 = vrot.lane.b32.xlu0 %v4076, 64
      %v4153 = vpop.permute.xlu0 %4152
      %4154 = vrot.lane.b32.xlu0 %v4077, 64
      %v4155 = vpop.permute.xlu0 %4154
      %4156 = vrot.lane.b32.xlu0 %v4078, 64
      %v4157 = vpop.permute.xlu0 %4156
      %4158 = vrot.lane.b32.xlu0 %v4079, 64
      %v4159 = vpop.permute.xlu0 %4158
      %4160 = vrot.lane.b32.xlu0 %v4080, 64
      %v4161 = vpop.permute.xlu0 %4160
      %4162 = vrot.lane.b32.xlu0 %v4081, 64
      %v4163 = vpop.permute.xlu0 %4162
      %4164 = vrot.lane.b32.xlu0 %v4082, 64
      %v4165 = vpop.permute.xlu0 %4164
      %4166 = vrot.lane.b32.xlu0 %v4083, 64
      %v4167 = vpop.permute.xlu0 %4166
      %4168 = vrot.lane.b32.xlu0 %v4084, 64
      %v4169 = vpop.permute.xlu0 %4168
      %4170 = vrot.lane.b32.xlu0 %v4085, 64
      %v4171 = vpop.permute.xlu0 %4170
      %4172 = vrot.lane.b32.xlu0 %v4086, 64
      %v4173 = vpop.permute.xlu0 %4172
      %4174 = vrot.lane.b32.xlu0 %v4087, 64
      %v4175 = vpop.permute.xlu0 %4174
      %4176 = vrot.lane.b32.xlu0 %v4088, 64
      %v4177 = vpop.permute.xlu0 %4176
      %4178 = vrot.lane.b32.xlu0 %v4089, 64
      %v4179 = vpop.permute.xlu0 %4178
      %4180 = vrot.lane.b32.xlu0 %v4090, 64
      %v4181 = vpop.permute.xlu0 %4180
      %4182 = vrot.lane.b32.xlu0 %v4091, 64
      %v4183 = vpop.permute.xlu0 %4182
      %4184 = vrot.lane.b32.xlu0 %v4092, 64
      %v4185 = vpop.permute.xlu0 %4184
      %4186 = vrot.lane.b32.xlu0 %v4093, 64
      %v4187 = vpop.permute.xlu0 %4186
      %4188 = vrot.lane.b32.xlu0 %v4094, 64
      %v4189 = vpop.permute.xlu0 %4188
      %4190 = vrot.lane.b32.xlu0 %v4095, 64
      %v4191 = vpop.permute.xlu0 %4190
      %vm4224 = vcmask 589312
      %4225 = vst.msk [vmem:[#allocation4] sm:$0xff] %vm4224, %v4129
      %4226 = vst.msk [vmem:[#allocation4 + $0x10] sm:$0xff] %vm4224, %v4131
      %4227 = vst.msk [vmem:[#allocation4 + $0x20] sm:$0xff] %vm4224, %v4133
      %4228 = vst.msk [vmem:[#allocation4 + $0x30] sm:$0xff] %vm4224, %v4135
      %4229 = vst.msk [vmem:[#allocation4 + $0x40] sm:$0xff] %vm4224, %v4137
      %4230 = vst.msk [vmem:[#allocation4 + $0x50] sm:$0xff] %vm4224, %v4139
      %4231 = vst.msk [vmem:[#allocation4 + $0x60] sm:$0xff] %vm4224, %v4141
      %4232 = vst.msk [vmem:[#allocation4 + $0x70] sm:$0xff] %vm4224, %v4143
      %4233 = vst.msk [vmem:[#allocation4 + $0x80] sm:$0xff] %vm4224, %v4145
      %4234 = vst.msk [vmem:[#allocation4 + $0x90] sm:$0xff] %vm4224, %v4147
      %4235 = vst.msk [vmem:[#allocation4 + $0xa0] sm:$0xff] %vm4224, %v4149
      %4236 = vst.msk [vmem:[#allocation4 + $0xb0] sm:$0xff] %vm4224, %v4151
      %4237 = vst.msk [vmem:[#allocation4 + $0xc0] sm:$0xff] %vm4224, %v4153
      %4238 = vst.msk [vmem:[#allocation4 + $0xd0] sm:$0xff] %vm4224, %v4155
      %4239 = vst.msk [vmem:[#allocation4 + $0xe0] sm:$0xff] %vm4224, %v4157
      %4240 = vst.msk [vmem:[#allocation4 + $0xf0] sm:$0xff] %vm4224, %v4159
      %4241 = vst.msk [vmem:[#allocation4 + $0x100] sm:$0xff] %vm4224, %v4161
      %4242 = vst.msk [vmem:[#allocation4 + $0x110] sm:$0xff] %vm4224, %v4163
      %4243 = vst.msk [vmem:[#allocation4 + $0x120] sm:$0xff] %vm4224, %v4165
      %4244 = vst.msk [vmem:[#allocation4 + $0x130] sm:$0xff] %vm4224, %v4167
      %4245 = vst.msk [vmem:[#allocation4 + $0x140] sm:$0xff] %vm4224, %v4169
      %4246 = vst.msk [vmem:[#allocation4 + $0x150] sm:$0xff] %vm4224, %v4171
      %4247 = vst.msk [vmem:[#allocation4 + $0x160] sm:$0xff] %vm4224, %v4173
      %4248 = vst.msk [vmem:[#allocation4 + $0x170] sm:$0xff] %vm4224, %v4175
      %4249 = vst.msk [vmem:[#allocation4 + $0x180] sm:$0xff] %vm4224, %v4177
      %4250 = vst.msk [vmem:[#allocation4 + $0x190] sm:$0xff] %vm4224, %v4179
      %4251 = vst.msk [vmem:[#allocation4 + $0x1a0] sm:$0xff] %vm4224, %v4181
      %4252 = vst.msk [vmem:[#allocation4 + $0x1b0] sm:$0xff] %vm4224, %v4183
      %4253 = vst.msk [vmem:[#allocation4 + $0x1c0] sm:$0xff] %vm4224, %v4185
      %4254 = vst.msk [vmem:[#allocation4 + $0x1d0] sm:$0xff] %vm4224, %v4187
      %4255 = vst.msk [vmem:[#allocation4 + $0x1e0] sm:$0xff] %vm4224, %v4189
      %4256 = vst.msk [vmem:[#allocation4 + $0x1f0] sm:$0xff] %vm4224, %v4191
      %v4257 = vld [vmem:[#allocation4] sm:$0xff]
      %v4258 = vld [vmem:[#allocation4 + $0x10] sm:$0xff]
      %v4259 = vld [vmem:[#allocation4 + $0x20] sm:$0xff]
      %v4260 = vld [vmem:[#allocation4 + $0x30] sm:$0xff]
      %v4261 = vld [vmem:[#allocation4 + $0x40] sm:$0xff]
      %v4262 = vld [vmem:[#allocation4 + $0x50] sm:$0xff]
      %v4263 = vld [vmem:[#allocation4 + $0x60] sm:$0xff]
      %v4264 = vld [vmem:[#allocation4 + $0x70] sm:$0xff]
      %v4265 = vld [vmem:[#allocation4 + $0x80] sm:$0xff]
      %v4266 = vld [vmem:[#allocation4 + $0x90] sm:$0xff]
      %v4267 = vld [vmem:[#allocation4 + $0xa0] sm:$0xff]
      %v4268 = vld [vmem:[#allocation4 + $0xb0] sm:$0xff]
      %v4269 = vld [vmem:[#allocation4 + $0xc0] sm:$0xff]
      %v4270 = vld [vmem:[#allocation4 + $0xd0] sm:$0xff]
      %v4271 = vld [vmem:[#allocation4 + $0xe0] sm:$0xff]
      %v4272 = vld [vmem:[#allocation4 + $0xf0] sm:$0xff]
      %v4273 = vld [vmem:[#allocation4 + $0x100] sm:$0xff]
      %v4274 = vld [vmem:[#allocation4 + $0x110] sm:$0xff]
      %v4275 = vld [vmem:[#allocation4 + $0x120] sm:$0xff]
      %v4276 = vld [vmem:[#allocation4 + $0x130] sm:$0xff]
      %v4277 = vld [vmem:[#allocation4 + $0x140] sm:$0xff]
      %v4278 = vld [vmem:[#allocation4 + $0x150] sm:$0xff]
      %v4279 = vld [vmem:[#allocation4 + $0x160] sm:$0xff]
      %v4280 = vld [vmem:[#allocation4 + $0x170] sm:$0xff]
      %v4281 = vld [vmem:[#allocation4 + $0x180] sm:$0xff]
      %v4282 = vld [vmem:[#allocation4 + $0x190] sm:$0xff]
      %v4283 = vld [vmem:[#allocation4 + $0x1a0] sm:$0xff]
      %v4284 = vld [vmem:[#allocation4 + $0x1b0] sm:$0xff]
      %v4285 = vld [vmem:[#allocation4 + $0x1c0] sm:$0xff]
      %v4286 = vld [vmem:[#allocation4 + $0x1d0] sm:$0xff]
      %v4287 = vld [vmem:[#allocation4 + $0x1e0] sm:$0xff]
      %v4288 = vld [vmem:[#allocation4 + $0x1f0] sm:$0xff]
      %v4289 = vld [vmem:[%s4] sm:$0xff]
      %v4290 = vld [vmem:[%s4 + $0x8] sm:$0xff]
      %v4291 = vld [vmem:[%s4 + $0x10] sm:$0xff]
      %v4292 = vld [vmem:[%s4 + $0x18] sm:$0xff]
      %v4293 = vld [vmem:[%s4 + $0x20] sm:$0xff]
      %v4294 = vld [vmem:[%s4 + $0x28] sm:$0xff]
      %v4295 = vld [vmem:[%s4 + $0x30] sm:$0xff]
      %v4296 = vld [vmem:[%s4 + $0x38] sm:$0xff]
      %v4297 = vld [vmem:[%s4 + $0x40] sm:$0xff]
      %v4298 = vld [vmem:[%s5] sm:$0x1]
      %v4300 = vperm.slane %v4298, 0
      %vm4302 = vcmask 588800
      %v4304 = vsel %vm4302, %v4257, 0
      %v4307 = vsel %vm4302, %v4258, 0
      %v4310 = vsel %vm4302, %v4259, 0
      %v4313 = vsel %vm4302, %v4260, 0
      %v4316 = vsel %vm4302, %v4261, 0
      %v4319 = vsel %vm4302, %v4262, 0
      %v4322 = vsel %vm4302, %v4263, 0
      %v4325 = vsel %vm4302, %v4264, 0
      %v4328 = vsel %vm4302, %v4265, 0
      %v4331 = vsel %vm4302, %v4266, 0
      %v4334 = vsel %vm4302, %v4267, 0
      %v4337 = vsel %vm4302, %v4268, 0
      %v4340 = vsel %vm4302, %v4269, 0
      %v4343 = vsel %vm4302, %v4270, 0
      %v4346 = vsel %vm4302, %v4271, 0
      %v4349 = vsel %vm4302, %v4272, 0
      %v4352 = vsel %vm4302, %v4273, 0
      %v4355 = vsel %vm4302, %v4274, 0
      %v4358 = vsel %vm4302, %v4275, 0
      %v4361 = vsel %vm4302, %v4276, 0
      %v4364 = vsel %vm4302, %v4277, 0
      %v4367 = vsel %vm4302, %v4278, 0
      %v4370 = vsel %vm4302, %v4279, 0
      %v4373 = vsel %vm4302, %v4280, 0
      %v4376 = vsel %vm4302, %v4281, 0
      %v4379 = vsel %vm4302, %v4282, 0
      %v4382 = vsel %vm4302, %v4283, 0
      %v4385 = vsel %vm4302, %v4284, 0
      %v4388 = vsel %vm4302, %v4285, 0
      %v4391 = vsel %vm4302, %v4286, 0
      %v4394 = vsel %vm4302, %v4287, 0
      %v4397 = vsel %vm4302, %v4288, 0
      %4399 = vmatpush.msra.mxu0 0.0
      %4400 = vmatpush.msra.mxu0 0.0
      %4401 = vmatpush.msra.mxu0 0.0
      %4402 = vmatpush.msra.mxu0 0.0
      %4403 = vmatpush.msra.mxu0 0.0
      %4404 = vmatpush.msra.mxu0 0.0
      %4405 = vmatpush.msra.mxu0 0.0
      %4406 = vmatpush.msra.mxu0 %v4297
      %4407 = vmatpush.msra.mxu0 %v4296
      %4408 = vmatpush.msra.mxu0 %v4295
      %4409 = vmatpush.msra.mxu0 %v4294
      %4410 = vmatpush.msra.mxu0 %v4293
      %4411 = vmatpush.msra.mxu0 %v4292
      %4412 = vmatpush.msra.mxu0 %v4291
      %4413 = vmatpush.msra.mxu0 %v4290
      %4414 = vmatpush.msra.mxu0 %v4289
      %4415 = vmatmul.f32.gmra.mxu0 %v4304
      %v4416 = vpop.f32.mrf.mxu0
      %v4417 = vadd.f32 %v4300, %v4416
      %4418 = vmatmul.f32.gmra.mxu0 %v4307
      %v4419 = vpop.f32.mrf.mxu0
      %v4420 = vadd.f32 %v4300, %v4419
      %4421 = vmatmul.f32.gmra.mxu0 %v4310
      %v4422 = vpop.f32.mrf.mxu0
      %v4423 = vadd.f32 %v4300, %v4422
      %4424 = vmatmul.f32.gmra.mxu0 %v4313
      %v4425 = vpop.f32.mrf.mxu0
      %v4426 = vadd.f32 %v4300, %v4425
      %4427 = vmatmul.f32.gmra.mxu0 %v4316
      %v4428 = vpop.f32.mrf.mxu0
      %v4429 = vadd.f32 %v4300, %v4428
      %4430 = vmatmul.f32.gmra.mxu0 %v4319
      %v4431 = vpop.f32.mrf.mxu0
      %v4432 = vadd.f32 %v4300, %v4431
      %4433 = vmatmul.f32.gmra.mxu0 %v4322
      %v4434 = vpop.f32.mrf.mxu0
      %v4435 = vadd.f32 %v4300, %v4434
      %4436 = vmatmul.f32.gmra.mxu0 %v4325
      %v4437 = vpop.f32.mrf.mxu0
      %v4438 = vadd.f32 %v4300, %v4437
      %4439 = vmatmul.f32.gmra.mxu0 %v4328
      %v4440 = vpop.f32.mrf.mxu0
      %v4441 = vadd.f32 %v4300, %v4440
      %4442 = vmatmul.f32.gmra.mxu0 %v4331
      %v4443 = vpop.f32.mrf.mxu0
      %v4444 = vadd.f32 %v4300, %v4443
      %4445 = vmatmul.f32.gmra.mxu0 %v4334
      %v4446 = vpop.f32.mrf.mxu0
      %v4447 = vadd.f32 %v4300, %v4446
      %4448 = vmatmul.f32.gmra.mxu0 %v4337
      %v4449 = vpop.f32.mrf.mxu0
      %v4450 = vadd.f32 %v4300, %v4449
      %4451 = vmatmul.f32.gmra.mxu0 %v4340
      %v4452 = vpop.f32.mrf.mxu0
      %v4453 = vadd.f32 %v4300, %v4452
      %4454 = vmatmul.f32.gmra.mxu0 %v4343
      %v4455 = vpop.f32.mrf.mxu0
      %v4456 = vadd.f32 %v4300, %v4455
      %4457 = vmatmul.f32.gmra.mxu0 %v4346
      %v4458 = vpop.f32.mrf.mxu0
      %v4459 = vadd.f32 %v4300, %v4458
      %4460 = vmatmul.f32.gmra.mxu0 %v4349
      %v4461 = vpop.f32.mrf.mxu0
      %v4462 = vadd.f32 %v4300, %v4461
      %4463 = vmatmul.f32.gmra.mxu0 %v4352
      %v4464 = vpop.f32.mrf.mxu0
      %v4465 = vadd.f32 %v4300, %v4464
      %4466 = vmatmul.f32.gmra.mxu0 %v4355
      %v4467 = vpop.f32.mrf.mxu0
      %v4468 = vadd.f32 %v4300, %v4467
      %4469 = vmatmul.f32.gmra.mxu0 %v4358
      %v4470 = vpop.f32.mrf.mxu0
      %v4471 = vadd.f32 %v4300, %v4470
      %4472 = vmatmul.f32.gmra.mxu0 %v4361
      %v4473 = vpop.f32.mrf.mxu0
      %v4474 = vadd.f32 %v4300, %v4473
      %4475 = vmatmul.f32.gmra.mxu0 %v4364
      %v4476 = vpop.f32.mrf.mxu0
      %v4477 = vadd.f32 %v4300, %v4476
      %4478 = vmatmul.f32.gmra.mxu0 %v4367
      %v4479 = vpop.f32.mrf.mxu0
      %v4480 = vadd.f32 %v4300, %v4479
      %4481 = vmatmul.f32.gmra.mxu0 %v4370
      %v4482 = vpop.f32.mrf.mxu0
      %v4483 = vadd.f32 %v4300, %v4482
      %4484 = vmatmul.f32.gmra.mxu0 %v4373
      %v4485 = vpop.f32.mrf.mxu0
      %v4486 = vadd.f32 %v4300, %v4485
      %4487 = vmatmul.f32.gmra.mxu0 %v4376
      %v4488 = vpop.f32.mrf.mxu0
      %v4489 = vadd.f32 %v4300, %v4488
      %4490 = vmatmul.f32.gmra.mxu0 %v4379
      %v4491 = vpop.f32.mrf.mxu0
      %v4492 = vadd.f32 %v4300, %v4491
      %4493 = vmatmul.f32.gmra.mxu0 %v4382
      %v4494 = vpop.f32.mrf.mxu0
      %v4495 = vadd.f32 %v4300, %v4494
      %4496 = vmatmul.f32.gmra.mxu0 %v4385
      %v4497 = vpop.f32.mrf.mxu0
      %v4498 = vadd.f32 %v4300, %v4497
      %4499 = vmatmul.f32.gmra.mxu0 %v4388
      %v4500 = vpop.f32.mrf.mxu0
      %v4501 = vadd.f32 %v4300, %v4500
      %4502 = vmatmul.f32.gmra.mxu0 %v4391
      %v4503 = vpop.f32.mrf.mxu0
      %v4504 = vadd.f32 %v4300, %v4503
      %4505 = vmatmul.f32.gmra.mxu0 %v4394
      %v4506 = vpop.f32.mrf.mxu0
      %v4507 = vadd.f32 %v4300, %v4506
      %4508 = vmatmul.f32.gmra.mxu0 %v4397
      %v4509 = vpop.f32.mrf.mxu0
      %v4510 = vadd.f32 %v4300, %v4509
      %4511 = vdwg.mxu0
      %v4512 = vmax.f32 %v4417, 0.0
      %v4513 = vmax.f32 %v4420, 0.0
      %v4514 = vmax.f32 %v4423, 0.0
      %v4515 = vmax.f32 %v4426, 0.0
      %v4516 = vmax.f32 %v4429, 0.0
      %v4517 = vmax.f32 %v4432, 0.0
      %v4518 = vmax.f32 %v4435, 0.0
      %v4519 = vmax.f32 %v4438, 0.0
      %v4520 = vmax.f32 %v4441, 0.0
      %v4521 = vmax.f32 %v4444, 0.0
      %v4522 = vmax.f32 %v4447, 0.0
      %v4523 = vmax.f32 %v4450, 0.0
      %v4524 = vmax.f32 %v4453, 0.0
      %v4525 = vmax.f32 %v4456, 0.0
      %v4526 = vmax.f32 %v4459, 0.0
      %v4527 = vmax.f32 %v4462, 0.0
      %v4528 = vmax.f32 %v4465, 0.0
      %v4529 = vmax.f32 %v4468, 0.0
      %v4530 = vmax.f32 %v4471, 0.0
      %v4531 = vmax.f32 %v4474, 0.0
      %v4532 = vmax.f32 %v4477, 0.0
      %v4533 = vmax.f32 %v4480, 0.0
      %v4534 = vmax.f32 %v4483, 0.0
      %v4535 = vmax.f32 %v4486, 0.0
      %v4536 = vmax.f32 %v4489, 0.0
      %v4537 = vmax.f32 %v4492, 0.0
      %v4538 = vmax.f32 %v4495, 0.0
      %v4539 = vmax.f32 %v4498, 0.0
      %v4540 = vmax.f32 %v4501, 0.0
      %v4541 = vmax.f32 %v4504, 0.0
      %v4542 = vmax.f32 %v4507, 0.0
      %v4543 = vmax.f32 %v4510, 0.0
      %v4544 = vld [vmem:[%s6] sm:$0xff]
      %v4545 = vld [vmem:[%s7] sm:$0x1]
      %v4547 = vperm.slane %v4545, 0
      %v4550 = vsel %vm415, %v4512, 0
      %v4553 = vsel %vm415, %v4513, 0
      %v4556 = vsel %vm415, %v4514, 0
      %v4559 = vsel %vm415, %v4515, 0
      %v4562 = vsel %vm415, %v4516, 0
      %v4565 = vsel %vm415, %v4517, 0
      %v4568 = vsel %vm415, %v4518, 0
      %v4571 = vsel %vm415, %v4519, 0
      %v4574 = vsel %vm415, %v4520, 0
      %v4577 = vsel %vm415, %v4521, 0
      %v4580 = vsel %vm415, %v4522, 0
      %v4583 = vsel %vm415, %v4523, 0
      %v4586 = vsel %vm415, %v4524, 0
      %v4589 = vsel %vm415, %v4525, 0
      %v4592 = vsel %vm415, %v4526, 0
      %v4595 = vsel %vm415, %v4527, 0
      %v4598 = vsel %vm415, %v4528, 0
      %v4601 = vsel %vm415, %v4529, 0
      %v4604 = vsel %vm415, %v4530, 0
      %v4607 = vsel %vm415, %v4531, 0
      %v4610 = vsel %vm415, %v4532, 0
      %v4613 = vsel %vm415, %v4533, 0
      %v4616 = vsel %vm415, %v4534, 0
      %v4619 = vsel %vm415, %v4535, 0
      %v4622 = vsel %vm415, %v4536, 0
      %v4625 = vsel %vm415, %v4537, 0
      %v4628 = vsel %vm415, %v4538, 0
      %v4631 = vsel %vm415, %v4539, 0
      %v4634 = vsel %vm415, %v4540, 0
      %v4637 = vsel %vm415, %v4541, 0
      %v4640 = vsel %vm415, %v4542, 0
      %v4643 = vsel %vm415, %v4543, 0
      %4645 = vmatpush.msra.mxu0 0.0
      %4646 = vmatpush.msra.mxu0 0.0
      %4647 = vmatpush.msra.mxu0 0.0
      %4648 = vmatpush.msra.mxu0 0.0
      %4649 = vmatpush.msra.mxu0 0.0
      %4650 = vmatpush.msra.mxu0 0.0
      %4651 = vmatpush.msra.mxu0 0.0
      %4652 = vmatpush.msra.mxu0 0.0
      %4653 = vmatpush.msra.mxu0 0.0
      %4654 = vmatpush.msra.mxu0 0.0
      %4655 = vmatpush.msra.mxu0 0.0
      %4656 = vmatpush.msra.mxu0 0.0
      %4657 = vmatpush.msra.mxu0 0.0
      %4658 = vmatpush.msra.mxu0 0.0
      %4659 = vmatpush.msra.mxu0 0.0
      %4660 = vmatpush.msra.mxu0 %v4544
      %4661 = vmatmul.f32.gmra.mxu0 %v4550
      %v4662 = vpop.f32.mrf.mxu0
      %v4663 = vadd.f32 %v4547, %v4662
      %4664 = vmatmul.f32.gmra.mxu0 %v4553
      %v4665 = vpop.f32.mrf.mxu0
      %v4666 = vadd.f32 %v4547, %v4665
      %4667 = vmatmul.f32.gmra.mxu0 %v4556
      %v4668 = vpop.f32.mrf.mxu0
      %v4669 = vadd.f32 %v4547, %v4668
      %4670 = vmatmul.f32.gmra.mxu0 %v4559
      %v4671 = vpop.f32.mrf.mxu0
      %v4672 = vadd.f32 %v4547, %v4671
      %4673 = vmatmul.f32.gmra.mxu0 %v4562
      %v4674 = vpop.f32.mrf.mxu0
      %v4675 = vadd.f32 %v4547, %v4674
      %4676 = vmatmul.f32.gmra.mxu0 %v4565
      %v4677 = vpop.f32.mrf.mxu0
      %v4678 = vadd.f32 %v4547, %v4677
      %4679 = vmatmul.f32.gmra.mxu0 %v4568
      %v4680 = vpop.f32.mrf.mxu0
      %v4681 = vadd.f32 %v4547, %v4680
      %4682 = vmatmul.f32.gmra.mxu0 %v4571
      %v4683 = vpop.f32.mrf.mxu0
      %v4684 = vadd.f32 %v4547, %v4683
      %4685 = vmatmul.f32.gmra.mxu0 %v4574
      %v4686 = vpop.f32.mrf.mxu0
      %v4687 = vadd.f32 %v4547, %v4686
      %4688 = vmatmul.f32.gmra.mxu0 %v4577
      %v4689 = vpop.f32.mrf.mxu0
      %v4690 = vadd.f32 %v4547, %v4689
      %4691 = vmatmul.f32.gmra.mxu0 %v4580
      %v4692 = vpop.f32.mrf.mxu0
      %v4693 = vadd.f32 %v4547, %v4692
      %4694 = vmatmul.f32.gmra.mxu0 %v4583
      %v4695 = vpop.f32.mrf.mxu0
      %v4696 = vadd.f32 %v4547, %v4695
      %4697 = vmatmul.f32.gmra.mxu0 %v4586
      %v4698 = vpop.f32.mrf.mxu0
      %v4699 = vadd.f32 %v4547, %v4698
      %4700 = vmatmul.f32.gmra.mxu0 %v4589
      %v4701 = vpop.f32.mrf.mxu0
      %v4702 = vadd.f32 %v4547, %v4701
      %4703 = vmatmul.f32.gmra.mxu0 %v4592
      %v4704 = vpop.f32.mrf.mxu0
      %v4705 = vadd.f32 %v4547, %v4704
      %4706 = vmatmul.f32.gmra.mxu0 %v4595
      %v4707 = vpop.f32.mrf.mxu0
      %v4708 = vadd.f32 %v4547, %v4707
      %4709 = vmatmul.f32.gmra.mxu0 %v4598
      %v4710 = vpop.f32.mrf.mxu0
      %v4711 = vadd.f32 %v4547, %v4710
      %4712 = vmatmul.f32.gmra.mxu0 %v4601
      %v4713 = vpop.f32.mrf.mxu0
      %v4714 = vadd.f32 %v4547, %v4713
      %4715 = vmatmul.f32.gmra.mxu0 %v4604
      %v4716 = vpop.f32.mrf.mxu0
      %v4717 = vadd.f32 %v4547, %v4716
      %4718 = vmatmul.f32.gmra.mxu0 %v4607
      %v4719 = vpop.f32.mrf.mxu0
      %v4720 = vadd.f32 %v4547, %v4719
      %4721 = vmatmul.f32.gmra.mxu0 %v4610
      %v4722 = vpop.f32.mrf.mxu0
      %v4723 = vadd.f32 %v4547, %v4722
      %4724 = vmatmul.f32.gmra.mxu0 %v4613
      %v4725 = vpop.f32.mrf.mxu0
      %v4726 = vadd.f32 %v4547, %v4725
      %4727 = vmatmul.f32.gmra.mxu0 %v4616
      %v4728 = vpop.f32.mrf.mxu0
      %v4729 = vadd.f32 %v4547, %v4728
      %4730 = vmatmul.f32.gmra.mxu0 %v4619
      %v4731 = vpop.f32.mrf.mxu0
      %v4732 = vadd.f32 %v4547, %v4731
      %4733 = vmatmul.f32.gmra.mxu0 %v4622
      %v4734 = vpop.f32.mrf.mxu0
      %v4735 = vadd.f32 %v4547, %v4734
      %4736 = vmatmul.f32.gmra.mxu0 %v4625
      %v4737 = vpop.f32.mrf.mxu0
      %v4738 = vadd.f32 %v4547, %v4737
      %4739 = vmatmul.f32.gmra.mxu0 %v4628
      %v4740 = vpop.f32.mrf.mxu0
      %v4741 = vadd.f32 %v4547, %v4740
      %4742 = vmatmul.f32.gmra.mxu0 %v4631
      %v4743 = vpop.f32.mrf.mxu0
      %v4744 = vadd.f32 %v4547, %v4743
      %4745 = vmatmul.f32.gmra.mxu0 %v4634
      %v4746 = vpop.f32.mrf.mxu0
      %v4747 = vadd.f32 %v4547, %v4746
      %4748 = vmatmul.f32.gmra.mxu0 %v4637
      %v4749 = vpop.f32.mrf.mxu0
      %v4750 = vadd.f32 %v4547, %v4749
      %4751 = vmatmul.f32.gmra.mxu0 %v4640
      %v4752 = vpop.f32.mrf.mxu0
      %v4753 = vadd.f32 %v4547, %v4752
      %4754 = vmatmul.f32.gmra.mxu0 %v4643
      %v4755 = vpop.f32.mrf.mxu0
      %v4756 = vadd.f32 %v4547, %v4755
      %4757 = vdwg.mxu0
      %4758 = vst.msk [vmem:[%s325] sm:$0xff] %vm326, %v4663
      %4759 = vst.msk [vmem:[%s325 + $0x8] sm:$0xff] %vm326, %v4666
      %4760 = vst.msk [vmem:[%s325 + $0x10] sm:$0xff] %vm326, %v4669
      %4761 = vst.msk [vmem:[%s325 + $0x18] sm:$0xff] %vm326, %v4672
      %4762 = vst.msk [vmem:[%s325 + $0x20] sm:$0xff] %vm326, %v4675
      %4763 = vst.msk [vmem:[%s325 + $0x28] sm:$0xff] %vm326, %v4678
      %4764 = vst.msk [vmem:[%s325 + $0x30] sm:$0xff] %vm326, %v4681
      %4765 = vst.msk [vmem:[%s325 + $0x38] sm:$0xff] %vm326, %v4684
      %4766 = vst.msk [vmem:[%s325 + $0x40] sm:$0xff] %vm326, %v4687
      %4767 = vst.msk [vmem:[%s325 + $0x48] sm:$0xff] %vm326, %v4690
      %4768 = vst.msk [vmem:[%s325 + $0x50] sm:$0xff] %vm326, %v4693
      %4769 = vst.msk [vmem:[%s325 + $0x58] sm:$0xff] %vm326, %v4696
      %4770 = vst.msk [vmem:[%s325 + $0x60] sm:$0xff] %vm326, %v4699
      %4771 = vst.msk [vmem:[%s325 + $0x68] sm:$0xff] %vm326, %v4702
      %4772 = vst.msk [vmem:[%s325 + $0x70] sm:$0xff] %vm326, %v4705
      %4773 = vst.msk [vmem:[%s325 + $0x78] sm:$0xff] %vm326, %v4708
      %4774 = vst.msk [vmem:[%s325 + $0x80] sm:$0xff] %vm326, %v4711
      %4775 = vst.msk [vmem:[%s325 + $0x88] sm:$0xff] %vm326, %v4714
      %4776 = vst.msk [vmem:[%s325 + $0x90] sm:$0xff] %vm326, %v4717
      %4777 = vst.msk [vmem:[%s325 + $0x98] sm:$0xff] %vm326, %v4720
      %4778 = vst.msk [vmem:[%s325 + $0xa0] sm:$0xff] %vm326, %v4723
      %4779 = vst.msk [vmem:[%s325 + $0xa8] sm:$0xff] %vm326, %v4726
      %4780 = vst.msk [vmem:[%s325 + $0xb0] sm:$0xff] %vm326, %v4729
      %4781 = vst.msk [vmem:[%s325 + $0xb8] sm:$0xff] %vm326, %v4732
      %4782 = vst.msk [vmem:[%s325 + $0xc0] sm:$0xff] %vm326, %v4735
      %4783 = vst.msk [vmem:[%s325 + $0xc8] sm:$0xff] %vm326, %v4738
      %4784 = vst.msk [vmem:[%s325 + $0xd0] sm:$0xff] %vm326, %v4741
      %4785 = vst.msk [vmem:[%s325 + $0xd8] sm:$0xff] %vm326, %v4744
      %4786 = vst.msk [vmem:[%s325 + $0xe0] sm:$0xff] %vm326, %v4747
      %4787 = vst.msk [vmem:[%s325 + $0xe8] sm:$0xff] %vm326, %v4750
      %4788 = vst.msk [vmem:[%s325 + $0xf0] sm:$0xff] %vm326, %v4753
      %4789 = vst.msk [vmem:[%s325 + $0xf8] sm:$0xff] %vm326, %v4756
      %p4790 = scmp.lt.s32.totalorder %s19, 1
      %s4791 = scalar_select %p4790, %s19, 1
      %s4792 = smul.addr %s4791, 32
      %s4793 = smul.addr %s4792, 8
      %s4794 = scalar_lea.vmem %s8, %s4793
      // Predicated region
      $region53: #{tpu_custom_call.1} parent=51 // pred_check
        %p4795 = pneg %p215
      $region54: #{tpu_custom_call.1} parent=51 // pred_check_branch
        %4797 = sbr.rel (%p4795) target = $region56
      $region55: #{tpu_custom_call.1} parent=51 // pred_region
        _
      $region56: #{tpu_custom_call.1} parent=51 // pred_fallthru
        _
    $region52: #{tpu_custom_call.1} parent=5 // pred_fallthru
      _
    %p4798 = scmp.le.s32.totalorder 2, %s14
    // Predicated region
    $region57: #{tpu_custom_call.1} parent=5 // pred_check
      %p4799 = pneg %p4798
    $region58: #{tpu_custom_call.1} parent=5 // pred_check_branch
      %4801 = sbr.rel (%p4799) target = $region60
    $region59: #{tpu_custom_call.1} parent=5 // pred_region
      %s4802 = ssub.s32 %s14, 2
      // Predicated region
      $region61: #{tpu_custom_call.1} parent=59 // pred_check
        %p4803 = pneg %p221
      $region62: #{tpu_custom_call.1} parent=59 // pred_check_branch
        %4805 = sbr.rel (%p4803) target = $region64
      $region63: #{tpu_custom_call.1} parent=59 // pred_region
        %p4806 = scmp.lt.s32.totalorder %s20, 1
        %s4807 = scalar_select %p4806, %s20, 1
        %s4808 = smul.addr %s4807, 32
        %s4809 = smul.addr %s4808, 8
        %s4810 = scalar_lea.vmem %s8, %s4809
      $region64: #{tpu_custom_call.1} parent=59 // pred_fallthru
        _
    $region60: #{tpu_custom_call.1} parent=5 // pred_fallthru
      _
  $region6: #{tpu_custom_call.1} parent=0 // loop_footer
    %s18 = sadd.s32 1, %s14
  $region7: #{tpu_custom_call.1} parent=0 // loop_footer_branch
    %13 = sbr.rel target = $region3
  $region8: #{tpu_custom_call.1} parent=0 // loop_exit
    _

</llo_original>
